<compile_context>
chip_gen: v6e
topology: v6e:2x2x1
jax: 0.10.0
libtpu: 0.0.40
codegen_flags: <defaults>
</compile_context>

<pallas_src>
import functools

import jax
import jax.numpy as jnp
from jax.experimental import pallas as pl
from jax.experimental.pallas import tpu as pltpu

EPS = 1e-5
LANE = 128


def _round_up(x, m):
    return ((x + m - 1) // m) * m


@functools.lru_cache(maxsize=1)
def _vmem_limit_bytes():
    """Generation-aware scoped-VMEM request: ~75% of physical per-core VMEM
    (v5e/v6e: 128 MiB -> 96 MiB, v7x: 64 MiB -> 48 MiB).  Fallback: 48 MiB."""
    try:
        cap = int(pltpu.get_tpu_info().vmem_capacity_bytes)
        return (cap * 3) // 4
    except Exception:
        return 48 * 1024 * 1024


def _mosaic_params(*semantics):
    return pltpu.CompilerParams(
        dimension_semantics=semantics,
        vmem_limit_bytes=_vmem_limit_bytes(),
    )


# ---------------------------------------------------------------------------
# Pallas kernels
# ---------------------------------------------------------------------------
def _conv3x3_stats_kernel(*refs, stride, ho, wo, fuse_in_bn):
    """3x3 conv (padding=1, given stride) for ONE image + fused BN statistics.

    Non-fused refs : x, w, y, sum, ssq
    Fused refs     : x, w, in_scale, in_shift, pad_mask, y, sum, ssq
        (stride must be 1; relu(x*scale+shift)*mask is applied to the plane as it is
         loaded -- this is conv2 with bn1+ReLU folded into its operand path.)

    x : (stride*stride, Hq, Wq, Cin) bf16  -- parity-decomposed, zero-padded image
    w : (9, Cin, Cpo) bf16                 -- tap-major (kh*3+kw) weight matrices
    y : (Ho*Wo, Cpo) bf16                  -- conv output rows for this image
    sum / ssq : (8, Cpo) f32               -- per-channel sum / sum-of-squares (f32 acc)
    """
    if fuse_in_bn:
        x_ref, w_ref, a_ref, b_ref, mask_ref, y_ref, sum_ref, ssq_ref = refs
    else:
        x_ref, w_ref, y_ref, sum_ref, ssq_ref = refs
    s = stride
    cpo = y_ref.shape[-1]
    planes = []
    for p in range(s * s):
        plane = x_ref[p].astype(jnp.float32)                       # (Hq, Wq, Cin)
        if fuse_in_bn:
            # bn1 + ReLU of the previous conv, applied as the operand is loaded;
            # mask zeroes the conv-padding border afterwards (pad must stay exactly 0).
            plane = jnp.maximum(plane * a_ref[...] + b_ref[...], 0.0) * mask_ref[...]
        planes.append(plane)
    acc = jnp.zeros((ho * wo, cpo), jnp.float32)
    for kh in range(3):
        pr, qh = kh % s, kh // s
        for kw in range(3):
            pc, qw = kw % s, kw // s
            slab = planes[pr * s + pc][qh:qh + ho, qw:qw + wo, :]  # (Ho, Wo, Cin)
            patches = slab.reshape(ho * wo, slab.shape[-1]).astype(jnp.bfloat16)
            acc = acc + jnp.dot(patches, w_ref[kh * 3 + kw],
                                preferred_element_type=jnp.float32)
    y_ref[...] = acc.astype(y_ref.dtype)                           # bf16 store
    sum_ref[...] = jnp.broadcast_to(jnp.sum(acc, axis=0, keepdims=True), (8, cpo))
    ssq_ref[...] = jnp.broadcast_to(jnp.sum(acc * acc, axis=0, keepdims=True), (8, cpo))


def _matmul_stats_kernel(x_ref, w_ref, y_ref, sum_ref, ssq_ref, *, m_total):
    """(tm, K) @ (K, Cpo) tile (1x1 shortcut conv) + fused, ragged-M-masked BN stats."""
    i = pl.program_id(0)
    y = jnp.dot(x_ref[...], w_ref[...], preferred_element_type=jnp.float32)
    y_ref[...] = y.astype(y_ref.dtype)
    tm, cpo = y.shape
    rows = jax.lax.broadcasted_iota(jnp.int32, (tm, 1), 0) + i * tm
    yv = jnp.where(rows < m_total, y, 0.0)     # padded tail rows must not pollute stats
    sum_ref[...] = jnp.broadcast_to(jnp.sum(yv, axis=0, keepdims=True), (8, cpo))
    ssq_ref[...] = jnp.broadcast_to(jnp.sum(yv * yv, axis=0, keepdims=True), (8, cpo))


def _bn_add_bn_act_kernel(y_ref, a_ref, b_ref, r_ref, ra_ref, rb_ref, o_ref, *, relu):
    """out = relu?(bn2(y) + bn_s(r)) -- projection-shortcut finalize (y/r read as bf16)."""
    out = y_ref[...].astype(jnp.float32) * a_ref[...] + b_ref[...]
    out = out + r_ref[...].astype(jnp.float32) * ra_ref[...] + rb_ref[...]
    if relu:
        out = jnp.maximum(out, 0.0)
    o_ref[...] = out.astype(o_ref.dtype)


def _bn_add_id_act_kernel(y_ref, a_ref, b_ref, r_ref, eye_ref, o_ref, *, relu):
    """out = relu?(bn2(y) + widen(r)) -- identity-shortcut finalize.

    r is the raw (tm, Cin) bf16 input rows; the tiny (Cin, Cpo) eye-matmul widens it to
    the lane-padded channel count without any channel-padded HBM copy of x."""
    out = y_ref[...].astype(jnp.float32) * a_ref[...] + b_ref[...]
    out = out + jnp.dot(r_ref[...], eye_ref[...], preferred_element_type=jnp.float32)
    if relu:
        out = jnp.maximum(out, 0.0)
    o_ref[...] = out.astype(o_ref.dtype)


# ---------------------------------------------------------------------------
# Pallas wrappers
# ---------------------------------------------------------------------------
def _conv3x3_stats(x_nhwc, w_oihw, stride, cpo, in_scale=None, in_shift=None):
    """3x3 conv, padding=1, given stride.  Returns (y:(M,cpo) bf16, sum, ssq f32)."""
    n, h, w, c = x_nhwc.shape
    s = stride
    fuse = in_scale is not None
    assert not (fuse and s != 1), "input-BN fusion is only used on the stride-1 conv2"
    ho = (h + 2 - 3) // s + 1
    wo = (w + 2 - 3) // s + 1
    hp, wp = h + 2, w + 2
    hq, wq = -(-hp // s), -(-wp // s)
    xp = jnp.pad(x_nhwc, ((0, 0), (1, 1 + s * hq - hp), (1, 1 + s * wq - wp), (0, 0)))
    # stride-parity decomposition:
    #   xq[(img*s + pr)*s + pc, qr, qc, ch] = xp[img, s*qr + pr, s*qc + pc, ch]
    xq = (xp.reshape(n, hq, s, wq, s, c)
            .transpose(0, 2, 4, 1, 3, 5)
            .reshape(n * s * s, hq, wq, c)
            .astype(jnp.bfloat16))
    cout, cin = w_oihw.shape[0], w_oihw.shape[1]
    wm = jnp.transpose(w_oihw, (2, 3, 1, 0)).reshape(9, cin, cout)
    wm = jnp.pad(wm, ((0, 0), (0, c - cin), (0, cpo - cout))).astype(jnp.bfloat16)

    in_specs = [
        pl.BlockSpec((s * s, hq, wq, c), lambda i: (i, 0, 0, 0)),
        pl.BlockSpec((9, c, cpo), lambda i: (0, 0, 0)),
    ]
    args = [xq, wm]
    if fuse:
        # mask keeps the conv-padding border at exactly 0 after the in-kernel bn+relu
        row = jnp.arange(hq).reshape(hq, 1, 1)
        col = jnp.arange(wq).reshape(1, wq, 1)
        mask = ((row >= 1) & (row <= h) & (col >= 1) & (col <= w)).astype(jnp.float32)
        in_specs += [
            pl.BlockSpec((1, 1, c), lambda i: (0, 0, 0)),
            pl.BlockSpec((1, 1, c), lambda i: (0, 0, 0)),
            pl.BlockSpec((hq, wq, 1), lambda i: (0, 0, 0)),
        ]
        args += [in_scale.reshape(1, 1, c).astype(jnp.float32),
                 in_shift.reshape(1, 1, c).astype(jnp.float32),
                 mask]

    kernel = functools.partial(_conv3x3_stats_kernel, stride=s, ho=ho, wo=wo,
                               fuse_in_bn=fuse)
    y, ssum, sssq = pl.pallas_call(
        kernel,
        out_shape=(
            jax.ShapeDtypeStruct((n * ho * wo, cpo), jnp.bfloat16),
            jax.ShapeDtypeStruct((n * 8, cpo), jnp.float32),
            jax.ShapeDtypeStruct((n * 8, cpo), jnp.float32),
        ),
        grid=(n,),
        in_specs=in_specs,
        out_specs=(
            pl.BlockSpec((ho * wo, cpo), lambda i: (i, 0)),
            pl.BlockSpec((8, cpo), lambda i: (i, 0)),
            pl.BlockSpec((8, cpo), lambda i: (i, 0)),
        ),
        compiler_params=_mosaic_params("parallel"),
    )(*args)
    return y, ssum, sssq


def _matmul_stats(x, wmat, tm=1024):
    """Tiled (M, K) @ (K, Cpo) with fused per-tile BN statistics (1x1 shortcut conv)."""
    m, k = x.shape
    cpo = wmat.shape[1]
    tm = min(tm, _round_up(m, 8))
    nt = pl.cdiv(m, tm)
    kernel = functools.partial(_matmul_stats_kernel, m_total=m)
    y, ssum, sssq = pl.pallas_call(
        kernel,
        out_shape=(
            jax.ShapeDtypeStruct((m, cpo), jnp.bfloat16),
            jax.ShapeDtypeStruct((nt * 8, cpo), jnp.float32),
            jax.ShapeDtypeStruct((nt * 8, cpo), jnp.float32),
        ),
        grid=(nt,),
        in_specs=[
            pl.BlockSpec((tm, k), lambda i: (i, 0)),
            pl.BlockSpec((k, cpo), lambda i: (0, 0)),
        ],
        out_specs=(
            pl.BlockSpec((tm, cpo), lambda i: (i, 0)),
            pl.BlockSpec((8, cpo), lambda i: (i, 0)),
            pl.BlockSpec((8, cpo), lambda i: (i, 0)),
        ),
        compiler_params=_mosaic_params("parallel"),
    )(x, wmat)
    return y, ssum, sssq


def _bn_coeffs(ssum, ssq, m, gamma, beta, cpo):
    """Fold train-mode BN (biased variance, eps=1e-5) into per-channel scale/shift (f32)."""
    cs = ssum.reshape(-1, 8, cpo)[:, 0, :].sum(axis=0)
    cq = ssq.reshape(-1, 8, cpo)[:, 0, :].sum(axis=0)
    mean = cs / m
    var = jnp.maximum(cq / m - mean * mean, 0.0)
    g = jnp.pad(gamma.astype(jnp.float32), (0, cpo - gamma.shape[0]))
    b = jnp.pad(beta.astype(jnp.float32), (0, cpo - beta.shape[0]))
    scale = g * jax.lax.rsqrt(var + EPS)
    shift = b - mean * scale
    return scale.reshape(1, cpo), shift.reshape(1, cpo)


def _finalize(y, scale, shift, res, *, res_scale=None, res_shift=None, eye=None,
              relu=True, out_dtype=jnp.float32, tm=1024):
    """Tiled bn2(y) + shortcut (+ReLU) over M rows.

    Projection shortcut: res is the (M, Cpo) bf16 1x1-conv output, normalized with
    res_scale/res_shift.  Identity shortcut: res is the raw (M, Cin) bf16 input rows,
    widened in-kernel by `eye` (Cin, Cpo); no ra/rb FMA on that branch."""
    m, cpo = y.shape
    tm = min(tm, _round_up(m, 8))
    nt = pl.cdiv(m, tm)
    vec = pl.BlockSpec((1, cpo), lambda i: (0, 0))
    mat = pl.BlockSpec((tm, cpo), lambda i: (i, 0))
    rmat = pl.BlockSpec((tm, res.shape[1]), lambda i: (i, 0))
    if eye is None:
        kernel = functools.partial(_bn_add_bn_act_kernel, relu=relu)
        in_specs = [mat, vec, vec, rmat, vec, vec]
        args = (y, scale, shift, res, res_scale, res_shift)
    else:
        kernel = functools.partial(_bn_add_id_act_kernel, relu=relu)
        in_specs = [mat, vec, vec, rmat, pl.BlockSpec(eye.shape, lambda i: (0, 0))]
        args = (y, scale, shift, res, eye)
    return pl.pallas_call(
        kernel,
        out_shape=jax.ShapeDtypeStruct((m, cpo), out_dtype),
        grid=(nt,),
        in_specs=in_specs,
        out_specs=pl.BlockSpec((tm, cpo), lambda i: (i, 0)),
        compiler_params=_mosaic_params("parallel"),
    )(*args)


# ---------------------------------------------------------------------------
# Full ResidualBlock forward (NCHW in, NCHW out)
# ---------------------------------------------------------------------------
@functools.partial(jax.jit, static_argnames=("stride",))
def residual_block_forward(x_nchw, params, *, stride):
    x = jnp.transpose(x_nchw, (0, 2, 3, 1)).astype(jnp.bfloat16)      # NHWC, bf16 once
    n, h, w, cin = x.shape
    cout = params["w1"].shape[0]
    cpo = _round_up(cout, LANE)                                       # lane-dense channels
    ho = (h + 2 - 3) // stride + 1
    wo = (w + 2 - 3) // stride + 1
    m = n * ho * wo

    # conv1 (+ fused BN stats).  bn1+ReLU itself is folded into conv2's operand path.
    y1, s1, q1 = _conv3x3_stats(x, params["w1"], stride, cpo)         # (M, cpo) bf16
    a1, b1 = _bn_coeffs(s1, q1, m, params["g1"], params["b1"], cpo)

    # conv2 (stride 1) with relu(bn1(.)) applied in-kernel to its input planes.
    y2, s2, q2 = _conv3x3_stats(y1.reshape(n, ho, wo, cpo), params["w2"], 1, cpo,
                                in_scale=a1, in_shift=b1)
    a2, b2 = _bn_coeffs(s2, q2, m, params["g2"], params["b2"], cpo)

    if stride != 1 or cin != cout:
        # projection shortcut: 1x1 strided conv + BN, folded into the finalize pass
        xs = x[:, ::stride, ::stride, :].reshape(m, cin)              # bf16 rows
        wsm = jnp.pad(params["ws"].reshape(cout, cin).T,
                      ((0, 0), (0, cpo - cout))).astype(jnp.bfloat16)
        ys, ss_, qs_ = _matmul_stats(xs, wsm)                         # (M, cpo) bf16
        ra, rb = _bn_coeffs(ss_, qs_, m, params["gs"], params["bs"], cpo)
        out = _finalize(y2, a2, b2, ys, res_scale=ra, res_shift=rb, relu=True)
    else:
        # identity shortcut: raw bf16 x rows, widened in-kernel (no padded HBM copy)
        eye = jnp.pad(jnp.eye(cin, dtype=jnp.float32),
                      ((0, 0), (0, cpo - cin))).astype(jnp.bfloat16)
        out = _finalize(y2, a2, b2, x.reshape(m, cin), eye=eye, relu=True)

    out = out.reshape(n, ho, wo, cpo)[..., :cout]
    return jnp.transpose(out, (0, 3, 1, 2))                           # back to NCHW (f32)


# ---------------------------------------------------------------------------
# Pure-JAX reference (correctness check only)
# ---------------------------------------------------------------------------
def reference_forward(x_nchw, params, stride, conv_dtype=jnp.float32):
    """XLA reference. conv_dtype=bfloat16 mirrors the kernel's bf16 MXU operands."""
    x = jnp.transpose(x_nchw, (0, 2, 3, 1)).astype(jnp.float32)

    def conv(inp, wgt, s, pad):
        return jax.lax.conv_general_dilated(
            inp.astype(conv_dtype),
            jnp.transpose(wgt, (2, 3, 1, 0)).astype(conv_dtype),
            (s, s), pad, dimension_numbers=("NHWC", "HWIO", "NHWC"),
            preferred_element_type=jnp.float32)

    def bn(y, g, b):
        mu = jnp.mean(y, axis=(0, 1, 2), keepdims=True)
        var = jnp.mean((y - mu) ** 2, axis=(0, 1, 2), keepdims=True)
        return (y - mu) * jax.lax.rsqrt(var + EPS) * g.reshape(1, 1, 1, -1) + b.reshape(1, 1, 1, -1)

    hh = jax.nn.relu(bn(conv(x, params["w1"], stride, ((1, 1), (1, 1))),
                        params["g1"], params["b1"]))
    y2 = bn(conv(hh, params["w2"], 1, ((1, 1), (1, 1))), params["g2"], params["b2"])
    if "ws" in params:
        sc = bn(conv(x, params["ws"], stride, "VALID"), params["gs"], params["bs"])
    else:
        sc = x
    out = jax.nn.relu(y2 + sc)
    return jnp.transpose(out, (0, 3, 1, 2))


# ---------------------------------------------------------------------------
# Deterministic parameter init
# ---------------------------------------------------------------------------
def make_params(key, in_dim, out_dim, stride):
    keys = jax.random.split(key, 9)
    params = {
        "w1": 0.1 * jax.random.normal(keys[0], (out_dim, in_dim, 3, 3), jnp.float32),
        "g1": 1.0 + 0.1 * jax.random.normal(keys[1], (out_dim,), jnp.float32),
        "b1": 0.1 * jax.random.normal(keys[2], (out_dim,), jnp.float32),
        "w2": 0.1 * jax.random.normal(keys[3], (out_dim, out_dim, 3, 3), jnp.float32),
        "g2": 1.0 + 0.1 * jax.random.normal(keys[4], (out_dim,), jnp.float32),
        "b2": 0.1 * jax.random.normal(keys[5], (out_dim,), jnp.float32),
    }
    if stride != 1 or in_dim != out_dim:
        params["ws"] = 0.1 * jax.random.normal(keys[6], (out_dim, in_dim, 1, 1), jnp.float32)
        params["gs"] = 1.0 + 0.1 * jax.random.normal(keys[7], (out_dim,), jnp.float32)
        params["bs"] = 0.1 * jax.random.normal(keys[8], (out_dim,), jnp.float32)
    return params


if __name__ == "__main__":
    key = jax.random.PRNGKey(0)
    kx, kp1, kp2 = jax.random.split(key, 3)
    x = jax.random.normal(kx, (2, 4, 16, 16), jnp.float32)            # NCHW

    # Case 1: projection shortcut (stride=2, in_dim != out_dim)
    params_a = make_params(kp1, in_dim=4, out_dim=8, stride=2)
    out_a = jax.block_until_ready(residual_block_forward(x, params_a, stride=2))
    assert out_a.shape == (2, 8, 8, 8)
    ref_a_bf = reference_forward(x, params_a, 2, conv_dtype=jnp.bfloat16)
    ref_a_f32 = reference_forward(x, params_a, 2)
    # tolerance sized for bf16 operands + bf16 intermediate activations
    assert jnp.allclose(out_a, ref_a_bf, rtol=3e-2, atol=3e-2), "mismatch vs bf16 reference (projection)"
    assert jnp.allclose(out_a, ref_a_f32, rtol=1e-1, atol=1e-1), "mismatch vs f32 reference (projection)"

    # Case 2: identity shortcut (stride=1, in_dim == out_dim)
    params_b = make_params(kp2, in_dim=4, out_dim=4, stride=1)
    out_b = jax.block_until_ready(residual_block_forward(x, params_b, stride=1))
    assert out_b.shape == (2, 4, 16, 16)
    ref_b_bf = reference_forward(x, params_b, 1, conv_dtype=jnp.bfloat16)
    ref_b_f32 = reference_forward(x, params_b, 1)
    assert jnp.allclose(out_b, ref_b_bf, rtol=3e-2, atol=3e-2), "mismatch vs bf16 reference (identity)"
    assert jnp.allclose(out_b, ref_b_f32, rtol=1e-1, atol=1e-1), "mismatch vs f32 reference (identity)"

    print("KERNEL_OK")
</pallas_src>

<mosaic_0001>
module attributes {stable_mosaic.version = 11 : i64} {
  func.func @_conv3x3_stats_kernel(%arg0: i32, %arg1: memref<4x9x9x4xbf16, #tpu.memory_space<vmem>>, %arg2: memref<9x4x128xbf16, #tpu.memory_space<vmem>>, %arg3: memref<64x128xbf16, #tpu.memory_space<vmem>>, %arg4: memref<8x128xf32, #tpu.memory_space<vmem>>, %arg5: memref<8x128xf32, #tpu.memory_space<vmem>>) attributes {dimension_semantics = [#tpu.dimension_semantics<parallel>], iteration_bounds = array<i64: 2>, scalar_prefetch = 0 : i64, scratch_operands = 0 : i64, tpu.core_type = #tpu.core_type<tc>, window_params = [{transform_indices = @transform_0, window_bounds = array<i64: 4, 9, 9, 4>}, {pipeline_mode = #tpu.pipeline_mode<synchronous>, transform_indices = @transform_1, window_bounds = array<i64: 9, 4, 128>}, {transform_indices = @transform_2, window_bounds = array<i64: 64, 128>}, {transform_indices = @transform_3, window_bounds = array<i64: 8, 128>}, {transform_indices = @transform_4, window_bounds = array<i64: 8, 128>}]} {
    %c0 = arith.constant 0 : index
    %c0_0 = arith.constant 0 : index
    %c0_1 = arith.constant 0 : index
    %c0_2 = arith.constant 0 : index
    %0 = vector.load %arg1[%c0, %c0_0, %c0_1, %c0_2] : memref<4x9x9x4xbf16, #tpu.memory_space<vmem>>, vector<1x9x9x4xbf16>
    %1 = vector.shape_cast %0 : vector<1x9x9x4xbf16> to vector<9x9x4xbf16>
    %2 = arith.extf %1 : vector<9x9x4xbf16> to vector<9x9x4xf32>
    %c1 = arith.constant 1 : index
    %c0_3 = arith.constant 0 : index
    %c0_4 = arith.constant 0 : index
    %c0_5 = arith.constant 0 : index
    %3 = vector.load %arg1[%c1, %c0_3, %c0_4, %c0_5] : memref<4x9x9x4xbf16, #tpu.memory_space<vmem>>, vector<1x9x9x4xbf16>
    %4 = vector.shape_cast %3 : vector<1x9x9x4xbf16> to vector<9x9x4xbf16>
    %5 = arith.extf %4 : vector<9x9x4xbf16> to vector<9x9x4xf32>
    %c2 = arith.constant 2 : index
    %c0_6 = arith.constant 0 : index
    %c0_7 = arith.constant 0 : index
    %c0_8 = arith.constant 0 : index
    %6 = vector.load %arg1[%c2, %c0_6, %c0_7, %c0_8] : memref<4x9x9x4xbf16, #tpu.memory_space<vmem>>, vector<1x9x9x4xbf16>
    %7 = vector.shape_cast %6 : vector<1x9x9x4xbf16> to vector<9x9x4xbf16>
    %8 = arith.extf %7 : vector<9x9x4xbf16> to vector<9x9x4xf32>
    %c3 = arith.constant 3 : index
    %c0_9 = arith.constant 0 : index
    %c0_10 = arith.constant 0 : index
    %c0_11 = arith.constant 0 : index
    %9 = vector.load %arg1[%c3, %c0_9, %c0_10, %c0_11] : memref<4x9x9x4xbf16, #tpu.memory_space<vmem>>, vector<1x9x9x4xbf16>
    %10 = vector.shape_cast %9 : vector<1x9x9x4xbf16> to vector<9x9x4xbf16>
    %11 = arith.extf %10 : vector<9x9x4xbf16> to vector<9x9x4xf32>
    %cst = arith.constant 0.000000e+00 : f32
    %12 = vector.broadcast %cst : f32 to vector<64x128xf32>
    %13 = vector.extract_strided_slice %2 {offsets = [0, 0, 0], sizes = [8, 8, 4], strides = [1, 1, 1]} : vector<9x9x4xf32> to vector<8x8x4xf32>
    %14 = vector.shape_cast %13 : vector<8x8x4xf32> to vector<64x4xf32>
    %15 = arith.truncf %14 : vector<64x4xf32> to vector<64x4xbf16>
    %c0_12 = arith.constant 0 : index
    %c0_13 = arith.constant 0 : index
    %c0_14 = arith.constant 0 : index
    %16 = vector.load %arg2[%c0_12, %c0_13, %c0_14] : memref<9x4x128xbf16, #tpu.memory_space<vmem>>, vector<1x4x128xbf16>
    %17 = vector.shape_cast %16 : vector<1x4x128xbf16> to vector<4x128xbf16>
    %cst_15 = arith.constant dense<0.000000e+00> : vector<64x128xf32>
    %18 = tpu.matmul %15, %17, %cst_15 {dimension_numbers = #tpu.dot_dimension_numbers<[1], [0], [0], [1], [0, 0, 1, 1], [], []>} : vector<64x4xbf16>, vector<4x128xbf16>, vector<64x128xf32> -> vector<64x128xf32>
    %19 = arith.addf %12, %18 : vector<64x128xf32>
    %20 = vector.extract_strided_slice %5 {offsets = [0, 0, 0], sizes = [8, 8, 4], strides = [1, 1, 1]} : vector<9x9x4xf32> to vector<8x8x4xf32>
    %21 = vector.shape_cast %20 : vector<8x8x4xf32> to vector<64x4xf32>
    %22 = arith.truncf %21 : vector<64x4xf32> to vector<64x4xbf16>
    %c1_16 = arith.constant 1 : index
    %c0_17 = arith.constant 0 : index
    %c0_18 = arith.constant 0 : index
    %23 = vector.load %arg2[%c1_16, %c0_17, %c0_18] : memref<9x4x128xbf16, #tpu.memory_space<vmem>>, vector<1x4x128xbf16>
    %24 = vector.shape_cast %23 : vector<1x4x128xbf16> to vector<4x128xbf16>
    %cst_19 = arith.constant dense<0.000000e+00> : vector<64x128xf32>
    %25 = tpu.matmul %22, %24, %cst_19 {dimension_numbers = #tpu.dot_dimension_numbers<[1], [0], [0], [1], [0, 0, 1, 1], [], []>} : vector<64x4xbf16>, vector<4x128xbf16>, vector<64x128xf32> -> vector<64x128xf32>
    %26 = arith.addf %19, %25 : vector<64x128xf32>
    %27 = vector.extract_strided_slice %2 {offsets = [0, 1, 0], sizes = [8, 8, 4], strides = [1, 1, 1]} : vector<9x9x4xf32> to vector<8x8x4xf32>
    %28 = vector.shape_cast %27 : vector<8x8x4xf32> to vector<64x4xf32>
    %29 = arith.truncf %28 : vector<64x4xf32> to vector<64x4xbf16>
    %c2_20 = arith.constant 2 : index
    %c0_21 = arith.constant 0 : index
    %c0_22 = arith.constant 0 : index
    %30 = vector.load %arg2[%c2_20, %c0_21, %c0_22] : memref<9x4x128xbf16, #tpu.memory_space<vmem>>, vector<1x4x128xbf16>
    %31 = vector.shape_cast %30 : vector<1x4x128xbf16> to vector<4x128xbf16>
    %cst_23 = arith.constant dense<0.000000e+00> : vector<64x128xf32>
    %32 = tpu.matmul %29, %31, %cst_23 {dimension_numbers = #tpu.dot_dimension_numbers<[1], [0], [0], [1], [0, 0, 1, 1], [], []>} : vector<64x4xbf16>, vector<4x128xbf16>, vector<64x128xf32> -> vector<64x128xf32>
    %33 = arith.addf %26, %32 : vector<64x128xf32>
    %34 = vector.extract_strided_slice %8 {offsets = [0, 0, 0], sizes = [8, 8, 4], strides = [1, 1, 1]} : vector<9x9x4xf32> to vector<8x8x4xf32>
    %35 = vector.shape_cast %34 : vector<8x8x4xf32> to vector<64x4xf32>
    %36 = arith.truncf %35 : vector<64x4xf32> to vector<64x4xbf16>
    %c3_24 = arith.constant 3 : index
    %c0_25 = arith.constant 0 : index
    %c0_26 = arith.constant 0 : index
    %37 = vector.load %arg2[%c3_24, %c0_25, %c0_26] : memref<9x4x128xbf16, #tpu.memory_space<vmem>>, vector<1x4x128xbf16>
    %38 = vector.shape_cast %37 : vector<1x4x128xbf16> to vector<4x128xbf16>
    %cst_27 = arith.constant dense<0.000000e+00> : vector<64x128xf32>
    %39 = tpu.matmul %36, %38, %cst_27 {dimension_numbers = #tpu.dot_dimension_numbers<[1], [0], [0], [1], [0, 0, 1, 1], [], []>} : vector<64x4xbf16>, vector<4x128xbf16>, vector<64x128xf32> -> vector<64x128xf32>
    %40 = arith.addf %33, %39 : vector<64x128xf32>
    %41 = vector.extract_strided_slice %11 {offsets = [0, 0, 0], sizes = [8, 8, 4], strides = [1, 1, 1]} : vector<9x9x4xf32> to vector<8x8x4xf32>
    %42 = vector.shape_cast %41 : vector<8x8x4xf32> to vector<64x4xf32>
    %43 = arith.truncf %42 : vector<64x4xf32> to vector<64x4xbf16>
    %c4 = arith.constant 4 : index
    %c0_28 = arith.constant 0 : index
    %c0_29 = arith.constant 0 : index
    %44 = vector.load %arg2[%c4, %c0_28, %c0_29] : memref<9x4x128xbf16, #tpu.memory_space<vmem>>, vector<1x4x128xbf16>
    %45 = vector.shape_cast %44 : vector<1x4x128xbf16> to vector<4x128xbf16>
    %cst_30 = arith.constant dense<0.000000e+00> : vector<64x128xf32>
    %46 = tpu.matmul %43, %45, %cst_30 {dimension_numbers = #tpu.dot_dimension_numbers<[1], [0], [0], [1], [0, 0, 1, 1], [], []>} : vector<64x4xbf16>, vector<4x128xbf16>, vector<64x128xf32> -> vector<64x128xf32>
    %47 = arith.addf %40, %46 : vector<64x128xf32>
    %48 = vector.extract_strided_slice %8 {offsets = [0, 1, 0], sizes = [8, 8, 4], strides = [1, 1, 1]} : vector<9x9x4xf32> to vector<8x8x4xf32>
    %49 = vector.shape_cast %48 : vector<8x8x4xf32> to vector<64x4xf32>
    %50 = arith.truncf %49 : vector<64x4xf32> to vector<64x4xbf16>
    %c5 = arith.constant 5 : index
    %c0_31 = arith.constant 0 : index
    %c0_32 = arith.constant 0 : index
    %51 = vector.load %arg2[%c5, %c0_31, %c0_32] : memref<9x4x128xbf16, #tpu.memory_space<vmem>>, vector<1x4x128xbf16>
    %52 = vector.shape_cast %51 : vector<1x4x128xbf16> to vector<4x128xbf16>
    %cst_33 = arith.constant dense<0.000000e+00> : vector<64x128xf32>
    %53 = tpu.matmul %50, %52, %cst_33 {dimension_numbers = #tpu.dot_dimension_numbers<[1], [0], [0], [1], [0, 0, 1, 1], [], []>} : vector<64x4xbf16>, vector<4x128xbf16>, vector<64x128xf32> -> vector<64x128xf32>
    %54 = arith.addf %47, %53 : vector<64x128xf32>
    %55 = vector.extract_strided_slice %2 {offsets = [1, 0, 0], sizes = [8, 8, 4], strides = [1, 1, 1]} : vector<9x9x4xf32> to vector<8x8x4xf32>
    %56 = vector.shape_cast %55 : vector<8x8x4xf32> to vector<64x4xf32>
    %57 = arith.truncf %56 : vector<64x4xf32> to vector<64x4xbf16>
    %c6 = arith.constant 6 : index
    %c0_34 = arith.constant 0 : index
    %c0_35 = arith.constant 0 : index
    %58 = vector.load %arg2[%c6, %c0_34, %c0_35] : memref<9x4x128xbf16, #tpu.memory_space<vmem>>, vector<1x4x128xbf16>
    %59 = vector.shape_cast %58 : vector<1x4x128xbf16> to vector<4x128xbf16>
    %cst_36 = arith.constant dense<0.000000e+00> : vector<64x128xf32>
    %60 = tpu.matmul %57, %59, %cst_36 {dimension_numbers = #tpu.dot_dimension_numbers<[1], [0], [0], [1], [0, 0, 1, 1], [], []>} : vector<64x4xbf16>, vector<4x128xbf16>, vector<64x128xf32> -> vector<64x128xf32>
    %61 = arith.addf %54, %60 : vector<64x128xf32>
    %62 = vector.extract_strided_slice %5 {offsets = [1, 0, 0], sizes = [8, 8, 4], strides = [1, 1, 1]} : vector<9x9x4xf32> to vector<8x8x4xf32>
    %63 = vector.shape_cast %62 : vector<8x8x4xf32> to vector<64x4xf32>
    %64 = arith.truncf %63 : vector<64x4xf32> to vector<64x4xbf16>
    %c7 = arith.constant 7 : index
    %c0_37 = arith.constant 0 : index
    %c0_38 = arith.constant 0 : index
    %65 = vector.load %arg2[%c7, %c0_37, %c0_38] : memref<9x4x128xbf16, #tpu.memory_space<vmem>>, vector<1x4x128xbf16>
    %66 = vector.shape_cast %65 : vector<1x4x128xbf16> to vector<4x128xbf16>
    %cst_39 = arith.constant dense<0.000000e+00> : vector<64x128xf32>
    %67 = tpu.matmul %64, %66, %cst_39 {dimension_numbers = #tpu.dot_dimension_numbers<[1], [0], [0], [1], [0, 0, 1, 1], [], []>} : vector<64x4xbf16>, vector<4x128xbf16>, vector<64x128xf32> -> vector<64x128xf32>
    %68 = arith.addf %61, %67 : vector<64x128xf32>
    %69 = vector.extract_strided_slice %2 {offsets = [1, 1, 0], sizes = [8, 8, 4], strides = [1, 1, 1]} : vector<9x9x4xf32> to vector<8x8x4xf32>
    %70 = vector.shape_cast %69 : vector<8x8x4xf32> to vector<64x4xf32>
    %71 = arith.truncf %70 : vector<64x4xf32> to vector<64x4xbf16>
    %c8 = arith.constant 8 : index
    %c0_40 = arith.constant 0 : index
    %c0_41 = arith.constant 0 : index
    %72 = vector.load %arg2[%c8, %c0_40, %c0_41] : memref<9x4x128xbf16, #tpu.memory_space<vmem>>, vector<1x4x128xbf16>
    %73 = vector.shape_cast %72 : vector<1x4x128xbf16> to vector<4x128xbf16>
    %cst_42 = arith.constant dense<0.000000e+00> : vector<64x128xf32>
    %74 = tpu.matmul %71, %73, %cst_42 {dimension_numbers = #tpu.dot_dimension_numbers<[1], [0], [0], [1], [0, 0, 1, 1], [], []>} : vector<64x4xbf16>, vector<4x128xbf16>, vector<64x128xf32> -> vector<64x128xf32>
    %75 = arith.addf %68, %74 : vector<64x128xf32>
    %76 = arith.truncf %75 : vector<64x128xf32> to vector<64x128xbf16>
    %c0_43 = arith.constant 0 : index
    %c0_44 = arith.constant 0 : index
    %77 = vector.load %arg3[%c0_43, %c0_44] : memref<64x128xbf16, #tpu.memory_space<vmem>>, vector<64x128xbf16>
    tpu.vector_store %arg3[%c0_43, %c0_44], %76 {strides = array<i32>} : memref<64x128xbf16, #tpu.memory_space<vmem>>, vector<64x128xbf16>,
    %cst_45 = arith.constant dense<0.000000e+00> : vector<128xf32>
    %78 = vector.multi_reduction <add>, %75, %cst_45 [0] : vector<64x128xf32> to vector<128xf32>
    %79 = vector.shape_cast %78 : vector<128xf32> to vector<1x128xf32>
    %80 = vector.shape_cast %79 : vector<1x128xf32> to vector<1x128xf32>
    %81 = vector.broadcast %80 : vector<1x128xf32> to vector<8x128xf32>
    %c0_46 = arith.constant 0 : index
    %c0_47 = arith.constant 0 : index
    %82 = vector.load %arg4[%c0_46, %c0_47] : memref<8x128xf32, #tpu.memory_space<vmem>>, vector<8x128xf32>
    tpu.vector_store %arg4[%c0_46, %c0_47], %81 {strides = array<i32>} : memref<8x128xf32, #tpu.memory_space<vmem>>, vector<8x128xf32>,
    %83 = arith.mulf %75, %75 : vector<64x128xf32>
    %cst_48 = arith.constant dense<0.000000e+00> : vector<128xf32>
    %84 = vector.multi_reduction <add>, %83, %cst_48 [0] : vector<64x128xf32> to vector<128xf32>
    %85 = vector.shape_cast %84 : vector<128xf32> to vector<1x128xf32>
    %86 = vector.shape_cast %85 : vector<1x128xf32> to vector<1x128xf32>
    %87 = vector.broadcast %86 : vector<1x128xf32> to vector<8x128xf32>
    %c0_49 = arith.constant 0 : index
    %c0_50 = arith.constant 0 : index
    %88 = vector.load %arg5[%c0_49, %c0_50] : memref<8x128xf32, #tpu.memory_space<vmem>>, vector<8x128xf32>
    tpu.vector_store %arg5[%c0_49, %c0_50], %87 {strides = array<i32>} : memref<8x128xf32, #tpu.memory_space<vmem>>, vector<8x128xf32>,
    return
  }
  func.func @transform_0(%arg0: i32) -> (i32, i32, i32, i32) {
    %c0_i32 = arith.constant 0 : i32
    %c0_i32_0 = arith.constant 0 : i32
    %c0_i32_1 = arith.constant 0 : i32
    %c0_i32_2 = arith.constant 0 : i32
    return %arg0, %c0_i32, %c0_i32_0, %c0_i32_1 : i32, i32, i32, i32
  }
  func.func @transform_1(%arg0: i32) -> (i32, i32, i32) {
    %c0_i32 = arith.constant 0 : i32
    %c0_i32_0 = arith.constant 0 : i32
    %c0_i32_1 = arith.constant 0 : i32
    %c0_i32_2 = arith.constant 0 : i32
    return %c0_i32, %c0_i32_0, %c0_i32_1 : i32, i32, i32
  }
  func.func @transform_2(%arg0: i32) -> (i32, i32) {
    %c0_i32 = arith.constant 0 : i32
    %c0_i32_0 = arith.constant 0 : i32
    return %arg0, %c0_i32 : i32, i32
  }
  func.func @transform_3(%arg0: i32) -> (i32, i32) {
    %c0_i32 = arith.constant 0 : i32
    %c0_i32_0 = arith.constant 0 : i32
    return %arg0, %c0_i32 : i32, i32
  }
  func.func @transform_4(%arg0: i32) -> (i32, i32) {
    %c0_i32 = arith.constant 0 : i32
    %c0_i32_0 = arith.constant 0 : i32
    return %arg0, %c0_i32 : i32, i32
  }
}

module attributes {stable_mosaic.version = 11 : i64} {
  func.func @_conv3x3_stats_kernel(%arg0: i32, %arg1: memref<1x10x10x128xbf16, #tpu.memory_space<vmem>>, %arg2: memref<9x128x128xbf16, #tpu.memory_space<vmem>>, %arg3: memref<1x1x128xf32, #tpu.memory_space<vmem>>, %arg4: memref<1x1x128xf32, #tpu.memory_space<vmem>>, %arg5: memref<10x10x1xf32, #tpu.memory_space<vmem>>, %arg6: memref<64x128xbf16, #tpu.memory_space<vmem>>, %arg7: memref<8x128xf32, #tpu.memory_space<vmem>>, %arg8: memref<8x128xf32, #tpu.memory_space<vmem>>) attributes {dimension_semantics = [#tpu.dimension_semantics<parallel>], iteration_bounds = array<i64: 2>, scalar_prefetch = 0 : i64, scratch_operands = 0 : i64, tpu.core_type = #tpu.core_type<tc>, window_params = [{transform_indices = @transform_0, window_bounds = array<i64: 1, 10, 10, 128>}, {pipeline_mode = #tpu.pipeline_mode<synchronous>, transform_indices = @transform_1, window_bounds = array<i64: 9, 128, 128>}, {pipeline_mode = #tpu.pipeline_mode<synchronous>, transform_indices = @transform_2, window_bounds = array<i64: 1, 1, 128>}, {pipeline_mode = #tpu.pipeline_mode<synchronous>, transform_indices = @transform_3, window_bounds = array<i64: 1, 1, 128>}, {pipeline_mode = #tpu.pipeline_mode<synchronous>, transform_indices = @transform_4, window_bounds = array<i64: 10, 10, 1>}, {transform_indices = @transform_5, window_bounds = array<i64: 64, 128>}, {transform_indices = @transform_6, window_bounds = array<i64: 8, 128>}, {transform_indices = @transform_7, window_bounds = array<i64: 8, 128>}]} {
    %c0 = arith.constant 0 : index
    %c0_0 = arith.constant 0 : index
    %c0_1 = arith.constant 0 : index
    %c0_2 = arith.constant 0 : index
    %0 = vector.load %arg1[%c0, %c0_0, %c0_1, %c0_2] : memref<1x10x10x128xbf16, #tpu.memory_space<vmem>>, vector<1x10x10x128xbf16>
    %1 = vector.shape_cast %0 : vector<1x10x10x128xbf16> to vector<10x10x128xbf16>
    %2 = arith.extf %1 : vector<10x10x128xbf16> to vector<10x10x128xf32>
    %c0_3 = arith.constant 0 : index
    %c0_4 = arith.constant 0 : index
    %c0_5 = arith.constant 0 : index
    %3 = vector.load %arg3[%c0_3, %c0_4, %c0_5] : memref<1x1x128xf32, #tpu.memory_space<vmem>>, vector<1x1x128xf32>
    %4 = vector.broadcast %3 : vector<1x1x128xf32> to vector<10x10x128xf32>
    %5 = arith.mulf %2, %4 : vector<10x10x128xf32>
    %c0_6 = arith.constant 0 : index
    %c0_7 = arith.constant 0 : index
    %c0_8 = arith.constant 0 : index
    %6 = vector.load %arg4[%c0_6, %c0_7, %c0_8] : memref<1x1x128xf32, #tpu.memory_space<vmem>>, vector<1x1x128xf32>
    %7 = vector.broadcast %6 : vector<1x1x128xf32> to vector<10x10x128xf32>
    %8 = arith.addf %5, %7 : vector<10x10x128xf32>
    %cst = arith.constant 0.000000e+00 : f32
    %9 = vector.broadcast %cst : f32 to vector<10x10x128xf32>
    %10 = arith.maximumf %8, %9 : vector<10x10x128xf32>
    %c0_9 = arith.constant 0 : index
    %c0_10 = arith.constant 0 : index
    %c0_11 = arith.constant 0 : index
    %11 = vector.load %arg5[%c0_9, %c0_10, %c0_11] : memref<10x10x1xf32, #tpu.memory_space<vmem>>, vector<10x10x1xf32>
    %12 = vector.broadcast %11 : vector<10x10x1xf32> to vector<10x10x128xf32>
    %13 = arith.mulf %10, %12 : vector<10x10x128xf32>
    %cst_12 = arith.constant 0.000000e+00 : f32
    %14 = vector.broadcast %cst_12 : f32 to vector<64x128xf32>
    %15 = vector.extract_strided_slice %13 {offsets = [0, 0, 0], sizes = [8, 8, 128], strides = [1, 1, 1]} : vector<10x10x128xf32> to vector<8x8x128xf32>
    %16 = vector.shape_cast %15 : vector<8x8x128xf32> to vector<64x128xf32>
    %17 = arith.truncf %16 : vector<64x128xf32> to vector<64x128xbf16>
    %c0_13 = arith.constant 0 : index
    %c0_14 = arith.constant 0 : index
    %c0_15 = arith.constant 0 : index
    %18 = vector.load %arg2[%c0_13, %c0_14, %c0_15] : memref<9x128x128xbf16, #tpu.memory_space<vmem>>, vector<1x128x128xbf16>
    %19 = vector.shape_cast %18 : vector<1x128x128xbf16> to vector<128x128xbf16>
    %cst_16 = arith.constant dense<0.000000e+00> : vector<64x128xf32>
    %20 = tpu.matmul %17, %19, %cst_16 {dimension_numbers = #tpu.dot_dimension_numbers<[1], [0], [0], [1], [0, 0, 1, 1], [], []>} : vector<64x128xbf16>, vector<128x128xbf16>, vector<64x128xf32> -> vector<64x128xf32>
    %21 = arith.addf %14, %20 : vector<64x128xf32>
    %22 = vector.extract_strided_slice %13 {offsets = [0, 1, 0], sizes = [8, 8, 128], strides = [1, 1, 1]} : vector<10x10x128xf32> to vector<8x8x128xf32>
    %23 = vector.shape_cast %22 : vector<8x8x128xf32> to vector<64x128xf32>
    %24 = arith.truncf %23 : vector<64x128xf32> to vector<64x128xbf16>
    %c1 = arith.constant 1 : index
    %c0_17 = arith.constant 0 : index
    %c0_18 = arith.constant 0 : index
    %25 = vector.load %arg2[%c1, %c0_17, %c0_18] : memref<9x128x128xbf16, #tpu.memory_space<vmem>>, vector<1x128x128xbf16>
    %26 = vector.shape_cast %25 : vector<1x128x128xbf16> to vector<128x128xbf16>
    %cst_19 = arith.constant dense<0.000000e+00> : vector<64x128xf32>
    %27 = tpu.matmul %24, %26, %cst_19 {dimension_numbers = #tpu.dot_dimension_numbers<[1], [0], [0], [1], [0, 0, 1, 1], [], []>} : vector<64x128xbf16>, vector<128x128xbf16>, vector<64x128xf32> -> vector<64x128xf32>
    %28 = arith.addf %21, %27 : vector<64x128xf32>
    %29 = vector.extract_strided_slice %13 {offsets = [0, 2, 0], sizes = [8, 8, 128], strides = [1, 1, 1]} : vector<10x10x128xf32> to vector<8x8x128xf32>
    %30 = vector.shape_cast %29 : vector<8x8x128xf32> to vector<64x128xf32>
    %31 = arith.truncf %30 : vector<64x128xf32> to vector<64x128xbf16>
    %c2 = arith.constant 2 : index
    %c0_20 = arith.constant 0 : index
    %c0_21 = arith.constant 0 : index
    %32 = vector.load %arg2[%c2, %c0_20, %c0_21] : memref<9x128x128xbf16, #tpu.memory_space<vmem>>, vector<1x128x128xbf16>
    %33 = vector.shape_cast %32 : vector<1x128x128xbf16> to vector<128x128xbf16>
    %cst_22 = arith.constant dense<0.000000e+00> : vector<64x128xf32>
    %34 = tpu.matmul %31, %33, %cst_22 {dimension_numbers = #tpu.dot_dimension_numbers<[1], [0], [0], [1], [0, 0, 1, 1], [], []>} : vector<64x128xbf16>, vector<128x128xbf16>, vector<64x128xf32> -> vector<64x128xf32>
    %35 = arith.addf %28, %34 : vector<64x128xf32>
    %36 = vector.extract_strided_slice %13 {offsets = [1, 0, 0], sizes = [8, 8, 128], strides = [1, 1, 1]} : vector<10x10x128xf32> to vector<8x8x128xf32>
    %37 = vector.shape_cast %36 : vector<8x8x128xf32> to vector<64x128xf32>
    %38 = arith.truncf %37 : vector<64x128xf32> to vector<64x128xbf16>
    %c3 = arith.constant 3 : index
    %c0_23 = arith.constant 0 : index
    %c0_24 = arith.constant 0 : index
    %39 = vector.load %arg2[%c3, %c0_23, %c0_24] : memref<9x128x128xbf16, #tpu.memory_space<vmem>>, vector<1x128x128xbf16>
    %40 = vector.shape_cast %39 : vector<1x128x128xbf16> to vector<128x128xbf16>
    %cst_25 = arith.constant dense<0.000000e+00> : vector<64x128xf32>
    %41 = tpu.matmul %38, %40, %cst_25 {dimension_numbers = #tpu.dot_dimension_numbers<[1], [0], [0], [1], [0, 0, 1, 1], [], []>} : vector<64x128xbf16>, vector<128x128xbf16>, vector<64x128xf32> -> vector<64x128xf32>
    %42 = arith.addf %35, %41 : vector<64x128xf32>
    %43 = vector.extract_strided_slice %13 {offsets = [1, 1, 0], sizes = [8, 8, 128], strides = [1, 1, 1]} : vector<10x10x128xf32> to vector<8x8x128xf32>
    %44 = vector.shape_cast %43 : vector<8x8x128xf32> to vector<64x128xf32>
    %45 = arith.truncf %44 : vector<64x128xf32> to vector<64x128xbf16>
    %c4 = arith.constant 4 : index
    %c0_26 = arith.constant 0 : index
    %c0_27 = arith.constant 0 : index
    %46 = vector.load %arg2[%c4, %c0_26, %c0_27] : memref<9x128x128xbf16, #tpu.memory_space<vmem>>, vector<1x128x128xbf16>
    %47 = vector.shape_cast %46 : vector<1x128x128xbf16> to vector<128x128xbf16>
    %cst_28 = arith.constant dense<0.000000e+00> : vector<64x128xf32>
    %48 = tpu.matmul %45, %47, %cst_28 {dimension_numbers = #tpu.dot_dimension_numbers<[1], [0], [0], [1], [0, 0, 1, 1], [], []>} : vector<64x128xbf16>, vector<128x128xbf16>, vector<64x128xf32> -> vector<64x128xf32>
    %49 = arith.addf %42, %48 : vector<64x128xf32>
    %50 = vector.extract_strided_slice %13 {offsets = [1, 2, 0], sizes = [8, 8, 128], strides = [1, 1, 1]} : vector<10x10x128xf32> to vector<8x8x128xf32>
    %51 = vector.shape_cast %50 : vector<8x8x128xf32> to vector<64x128xf32>
    %52 = arith.truncf %51 : vector<64x128xf32> to vector<64x128xbf16>
    %c5 = arith.constant 5 : index
    %c0_29 = arith.constant 0 : index
    %c0_30 = arith.constant 0 : index
    %53 = vector.load %arg2[%c5, %c0_29, %c0_30] : memref<9x128x128xbf16, #tpu.memory_space<vmem>>, vector<1x128x128xbf16>
    %54 = vector.shape_cast %53 : vector<1x128x128xbf16> to vector<128x128xbf16>
    %cst_31 = arith.constant dense<0.000000e+00> : vector<64x128xf32>
    %55 = tpu.matmul %52, %54, %cst_31 {dimension_numbers = #tpu.dot_dimension_numbers<[1], [0], [0], [1], [0, 0, 1, 1], [], []>} : vector<64x128xbf16>, vector<128x128xbf16>, vector<64x128xf32> -> vector<64x128xf32>
    %56 = arith.addf %49, %55 : vector<64x128xf32>
    %57 = vector.extract_strided_slice %13 {offsets = [2, 0, 0], sizes = [8, 8, 128], strides = [1, 1, 1]} : vector<10x10x128xf32> to vector<8x8x128xf32>
    %58 = vector.shape_cast %57 : vector<8x8x128xf32> to vector<64x128xf32>
    %59 = arith.truncf %58 : vector<64x128xf32> to vector<64x128xbf16>
    %c6 = arith.constant 6 : index
    %c0_32 = arith.constant 0 : index
    %c0_33 = arith.constant 0 : index
    %60 = vector.load %arg2[%c6, %c0_32, %c0_33] : memref<9x128x128xbf16, #tpu.memory_space<vmem>>, vector<1x128x128xbf16>
    %61 = vector.shape_cast %60 : vector<1x128x128xbf16> to vector<128x128xbf16>
    %cst_34 = arith.constant dense<0.000000e+00> : vector<64x128xf32>
    %62 = tpu.matmul %59, %61, %cst_34 {dimension_numbers = #tpu.dot_dimension_numbers<[1], [0], [0], [1], [0, 0, 1, 1], [], []>} : vector<64x128xbf16>, vector<128x128xbf16>, vector<64x128xf32> -> vector<64x128xf32>
    %63 = arith.addf %56, %62 : vector<64x128xf32>
    %64 = vector.extract_strided_slice %13 {offsets = [2, 1, 0], sizes = [8, 8, 128], strides = [1, 1, 1]} : vector<10x10x128xf32> to vector<8x8x128xf32>
    %65 = vector.shape_cast %64 : vector<8x8x128xf32> to vector<64x128xf32>
    %66 = arith.truncf %65 : vector<64x128xf32> to vector<64x128xbf16>
    %c7 = arith.constant 7 : index
    %c0_35 = arith.constant 0 : index
    %c0_36 = arith.constant 0 : index
    %67 = vector.load %arg2[%c7, %c0_35, %c0_36] : memref<9x128x128xbf16, #tpu.memory_space<vmem>>, vector<1x128x128xbf16>
    %68 = vector.shape_cast %67 : vector<1x128x128xbf16> to vector<128x128xbf16>
    %cst_37 = arith.constant dense<0.000000e+00> : vector<64x128xf32>
    %69 = tpu.matmul %66, %68, %cst_37 {dimension_numbers = #tpu.dot_dimension_numbers<[1], [0], [0], [1], [0, 0, 1, 1], [], []>} : vector<64x128xbf16>, vector<128x128xbf16>, vector<64x128xf32> -> vector<64x128xf32>
    %70 = arith.addf %63, %69 : vector<64x128xf32>
    %71 = vector.extract_strided_slice %13 {offsets = [2, 2, 0], sizes = [8, 8, 128], strides = [1, 1, 1]} : vector<10x10x128xf32> to vector<8x8x128xf32>
    %72 = vector.shape_cast %71 : vector<8x8x128xf32> to vector<64x128xf32>
    %73 = arith.truncf %72 : vector<64x128xf32> to vector<64x128xbf16>
    %c8 = arith.constant 8 : index
    %c0_38 = arith.constant 0 : index
    %c0_39 = arith.constant 0 : index
    %74 = vector.load %arg2[%c8, %c0_38, %c0_39] : memref<9x128x128xbf16, #tpu.memory_space<vmem>>, vector<1x128x128xbf16>
    %75 = vector.shape_cast %74 : vector<1x128x128xbf16> to vector<128x128xbf16>
    %cst_40 = arith.constant dense<0.000000e+00> : vector<64x128xf32>
    %76 = tpu.matmul %73, %75, %cst_40 {dimension_numbers = #tpu.dot_dimension_numbers<[1], [0], [0], [1], [0, 0, 1, 1], [], []>} : vector<64x128xbf16>, vector<128x128xbf16>, vector<64x128xf32> -> vector<64x128xf32>
    %77 = arith.addf %70, %76 : vector<64x128xf32>
    %78 = arith.truncf %77 : vector<64x128xf32> to vector<64x128xbf16>
    %c0_41 = arith.constant 0 : index
    %c0_42 = arith.constant 0 : index
    %79 = vector.load %arg6[%c0_41, %c0_42] : memref<64x128xbf16, #tpu.memory_space<vmem>>, vector<64x128xbf16>
    tpu.vector_store %arg6[%c0_41, %c0_42], %78 {strides = array<i32>} : memref<64x128xbf16, #tpu.memory_space<vmem>>, vector<64x128xbf16>,
    %cst_43 = arith.constant dense<0.000000e+00> : vector<128xf32>
    %80 = vector.multi_reduction <add>, %77, %cst_43 [0] : vector<64x128xf32> to vector<128xf32>
    %81 = vector.shape_cast %80 : vector<128xf32> to vector<1x128xf32>
    %82 = vector.shape_cast %81 : vector<1x128xf32> to vector<1x128xf32>
    %83 = vector.broadcast %82 : vector<1x128xf32> to vector<8x128xf32>
    %c0_44 = arith.constant 0 : index
    %c0_45 = arith.constant 0 : index
    %84 = vector.load %arg7[%c0_44, %c0_45] : memref<8x128xf32, #tpu.memory_space<vmem>>, vector<8x128xf32>
    tpu.vector_store %arg7[%c0_44, %c0_45], %83 {strides = array<i32>} : memref<8x128xf32, #tpu.memory_space<vmem>>, vector<8x128xf32>,
    %85 = arith.mulf %77, %77 : vector<64x128xf32>
    %cst_46 = arith.constant dense<0.000000e+00> : vector<128xf32>
    %86 = vector.multi_reduction <add>, %85, %cst_46 [0] : vector<64x128xf32> to vector<128xf32>
    %87 = vector.shape_cast %86 : vector<128xf32> to vector<1x128xf32>
    %88 = vector.shape_cast %87 : vector<1x128xf32> to vector<1x128xf32>
    %89 = vector.broadcast %88 : vector<1x128xf32> to vector<8x128xf32>
    %c0_47 = arith.constant 0 : index
    %c0_48 = arith.constant 0 : index
    %90 = vector.load %arg8[%c0_47, %c0_48] : memref<8x128xf32, #tpu.memory_space<vmem>>, vector<8x128xf32>
    tpu.vector_store %arg8[%c0_47, %c0_48], %89 {strides = array<i32>} : memref<8x128xf32, #tpu.memory_space<vmem>>, vector<8x128xf32>,
    return
  }
  func.func @transform_0(%arg0: i32) -> (i32, i32, i32, i32) {
    %c0_i32 = arith.constant 0 : i32
    %c0_i32_0 = arith.constant 0 : i32
    %c0_i32_1 = arith.constant 0 : i32
    %c0_i32_2 = arith.constant 0 : i32
    return %arg0, %c0_i32, %c0_i32_0, %c0_i32_1 : i32, i32, i32, i32
  }
  func.func @transform_1(%arg0: i32) -> (i32, i32, i32) {
    %c0_i32 = arith.constant 0 : i32
    %c0_i32_0 = arith.constant 0 : i32
    %c0_i32_1 = arith.constant 0 : i32
    %c0_i32_2 = arith.constant 0 : i32
    return %c0_i32, %c0_i32_0, %c0_i32_1 : i32, i32, i32
  }
  func.func @transform_2(%arg0: i32) -> (i32, i32, i32) {
    %c0_i32 = arith.constant 0 : i32
    %c0_i32_0 = arith.constant 0 : i32
    %c0_i32_1 = arith.constant 0 : i32
    %c0_i32_2 = arith.constant 0 : i32
    return %c0_i32, %c0_i32_0, %c0_i32_1 : i32, i32, i32
  }
  func.func @transform_3(%arg0: i32) -> (i32, i32, i32) {
    %c0_i32 = arith.constant 0 : i32
    %c0_i32_0 = arith.constant 0 : i32
    %c0_i32_1 = arith.constant 0 : i32
    %c0_i32_2 = arith.constant 0 : i32
    return %c0_i32, %c0_i32_0, %c0_i32_1 : i32, i32, i32
  }
  func.func @transform_4(%arg0: i32) -> (i32, i32, i32) {
    %c0_i32 = arith.constant 0 : i32
    %c0_i32_0 = arith.constant 0 : i32
    %c0_i32_1 = arith.constant 0 : i32
    %c0_i32_2 = arith.constant 0 : i32
    return %c0_i32, %c0_i32_0, %c0_i32_1 : i32, i32, i32
  }
  func.func @transform_5(%arg0: i32) -> (i32, i32) {
    %c0_i32 = arith.constant 0 : i32
    %c0_i32_0 = arith.constant 0 : i32
    return %arg0, %c0_i32 : i32, i32
  }
  func.func @transform_6(%arg0: i32) -> (i32, i32) {
    %c0_i32 = arith.constant 0 : i32
    %c0_i32_0 = arith.constant 0 : i32
    return %arg0, %c0_i32 : i32, i32
  }
  func.func @transform_7(%arg0: i32) -> (i32, i32) {
    %c0_i32 = arith.constant 0 : i32
    %c0_i32_0 = arith.constant 0 : i32
    return %arg0, %c0_i32 : i32, i32
  }
}

module attributes {stable_mosaic.version = 11 : i64} {
  func.func @_matmul_stats_kernel(%arg0: i32, %arg1: memref<128x4xbf16, #tpu.memory_space<vmem>>, %arg2: memref<4x128xbf16, #tpu.memory_space<vmem>>, %arg3: memref<128x128xbf16, #tpu.memory_space<vmem>>, %arg4: memref<8x128xf32, #tpu.memory_space<vmem>>, %arg5: memref<8x128xf32, #tpu.memory_space<vmem>>) attributes {dimension_semantics = [#tpu.dimension_semantics<parallel>], iteration_bounds = array<i64: 1>, scalar_prefetch = 0 : i64, scratch_operands = 0 : i64, tpu.core_type = #tpu.core_type<tc>, window_params = [{transform_indices = @transform_0, window_bounds = array<i64: 128, 4>}, {pipeline_mode = #tpu.pipeline_mode<synchronous>, transform_indices = @transform_1, window_bounds = array<i64: 4, 128>}, {transform_indices = @transform_2, window_bounds = array<i64: 128, 128>}, {transform_indices = @transform_3, window_bounds = array<i64: 8, 128>}, {transform_indices = @transform_4, window_bounds = array<i64: 8, 128>}]} {
    %c0 = arith.constant 0 : index
    %c0_0 = arith.constant 0 : index
    %0 = vector.load %arg1[%c0, %c0_0] : memref<128x4xbf16, #tpu.memory_space<vmem>>, vector<128x4xbf16>
    %c0_1 = arith.constant 0 : index
    %c0_2 = arith.constant 0 : index
    %1 = vector.load %arg2[%c0_1, %c0_2] : memref<4x128xbf16, #tpu.memory_space<vmem>>, vector<4x128xbf16>
    %cst = arith.constant dense<0.000000e+00> : vector<128x128xf32>
    %2 = tpu.matmul %0, %1, %cst {dimension_numbers = #tpu.dot_dimension_numbers<[1], [0], [0], [1], [0, 0, 1, 1], [], []>} : vector<128x4xbf16>, vector<4x128xbf16>, vector<128x128xf32> -> vector<128x128xf32>
    %3 = arith.truncf %2 : vector<128x128xf32> to vector<128x128xbf16>
    %c0_3 = arith.constant 0 : index
    %c0_4 = arith.constant 0 : index
    %4 = vector.load %arg3[%c0_3, %c0_4] : memref<128x128xbf16, #tpu.memory_space<vmem>>, vector<128x128xbf16>
    tpu.vector_store %arg3[%c0_3, %c0_4], %3 {strides = array<i32>} : memref<128x128xbf16, #tpu.memory_space<vmem>>, vector<128x128xbf16>,
    %5 = tpu.iota {dimensions = array<i32: 0>} : vector<128x1xi32>
    %c128_i32 = arith.constant 128 : i32
    %6 = arith.muli %arg0, %c128_i32 : i32
    %7 = vector.broadcast %6 : i32 to vector<128x1xi32>
    %8 = arith.addi %5, %7 : vector<128x1xi32>
    %c128_i32_5 = arith.constant 128 : i32
    %9 = vector.broadcast %c128_i32_5 : i32 to vector<128x1xi32>
    %10 = arith.cmpi slt, %8, %9 : vector<128x1xi32>
    %cst_6 = arith.constant 0.000000e+00 : f32
    %11 = vector.shape_cast %10 : vector<128x1xi1> to vector<128x1xi1>
    %12 = vector.broadcast %11 : vector<128x1xi1> to vector<128x128xi1>
    %13 = vector.broadcast %cst_6 : f32 to vector<128x128xf32>
    %14 = arith.select %12, %2, %13 : vector<128x128xi1>, vector<128x128xf32>
    %cst_7 = arith.constant dense<0.000000e+00> : vector<128xf32>
    %15 = vector.multi_reduction <add>, %14, %cst_7 [0] : vector<128x128xf32> to vector<128xf32>
    %16 = vector.shape_cast %15 : vector<128xf32> to vector<1x128xf32>
    %17 = vector.shape_cast %16 : vector<1x128xf32> to vector<1x128xf32>
    %18 = vector.broadcast %17 : vector<1x128xf32> to vector<8x128xf32>
    %c0_8 = arith.constant 0 : index
    %c0_9 = arith.constant 0 : index
    %19 = vector.load %arg4[%c0_8, %c0_9] : memref<8x128xf32, #tpu.memory_space<vmem>>, vector<8x128xf32>
    tpu.vector_store %arg4[%c0_8, %c0_9], %18 {strides = array<i32>} : memref<8x128xf32, #tpu.memory_space<vmem>>, vector<8x128xf32>,
    %20 = arith.mulf %14, %14 : vector<128x128xf32>
    %cst_10 = arith.constant dense<0.000000e+00> : vector<128xf32>
    %21 = vector.multi_reduction <add>, %20, %cst_10 [0] : vector<128x128xf32> to vector<128xf32>
    %22 = vector.shape_cast %21 : vector<128xf32> to vector<1x128xf32>
    %23 = vector.shape_cast %22 : vector<1x128xf32> to vector<1x128xf32>
    %24 = vector.broadcast %23 : vector<1x128xf32> to vector<8x128xf32>
    %c0_11 = arith.constant 0 : index
    %c0_12 = arith.constant 0 : index
    %25 = vector.load %arg5[%c0_11, %c0_12] : memref<8x128xf32, #tpu.memory_space<vmem>>, vector<8x128xf32>
    tpu.vector_store %arg5[%c0_11, %c0_12], %24 {strides = array<i32>} : memref<8x128xf32, #tpu.memory_space<vmem>>, vector<8x128xf32>,
    return
  }
  func.func @transform_0(%arg0: i32) -> (i32, i32) {
    %c0_i32 = arith.constant 0 : i32
    %c0_i32_0 = arith.constant 0 : i32
    return %arg0, %c0_i32 : i32, i32
  }
  func.func @transform_1(%arg0: i32) -> (i32, i32) {
    %c0_i32 = arith.constant 0 : i32
    %c0_i32_0 = arith.constant 0 : i32
    %c0_i32_1 = arith.constant 0 : i32
    return %c0_i32, %c0_i32_0 : i32, i32
  }
  func.func @transform_2(%arg0: i32) -> (i32, i32) {
    %c0_i32 = arith.constant 0 : i32
    %c0_i32_0 = arith.constant 0 : i32
    return %arg0, %c0_i32 : i32, i32
  }
  func.func @transform_3(%arg0: i32) -> (i32, i32) {
    %c0_i32 = arith.constant 0 : i32
    %c0_i32_0 = arith.constant 0 : i32
    return %arg0, %c0_i32 : i32, i32
  }
  func.func @transform_4(%arg0: i32) -> (i32, i32) {
    %c0_i32 = arith.constant 0 : i32
    %c0_i32_0 = arith.constant 0 : i32
    return %arg0, %c0_i32 : i32, i32
  }
}

module attributes {stable_mosaic.version = 11 : i64} {
  func.func @_bn_add_bn_act_kernel(%arg0: i32, %arg1: memref<128x128xbf16, #tpu.memory_space<vmem>>, %arg2: memref<1x128xf32, #tpu.memory_space<vmem>>, %arg3: memref<1x128xf32, #tpu.memory_space<vmem>>, %arg4: memref<128x128xbf16, #tpu.memory_space<vmem>>, %arg5: memref<1x128xf32, #tpu.memory_space<vmem>>, %arg6: memref<1x128xf32, #tpu.memory_space<vmem>>, %arg7: memref<128x128xf32, #tpu.memory_space<vmem>>) attributes {dimension_semantics = [#tpu.dimension_semantics<parallel>], iteration_bounds = array<i64: 1>, scalar_prefetch = 0 : i64, scratch_operands = 0 : i64, tpu.core_type = #tpu.core_type<tc>, window_params = [{transform_indices = @transform_0, window_bounds = array<i64: 128, 128>}, {pipeline_mode = #tpu.pipeline_mode<synchronous>, transform_indices = @transform_1, window_bounds = array<i64: 1, 128>}, {pipeline_mode = #tpu.pipeline_mode<synchronous>, transform_indices = @transform_2, window_bounds = array<i64: 1, 128>}, {transform_indices = @transform_3, window_bounds = array<i64: 128, 128>}, {pipeline_mode = #tpu.pipeline_mode<synchronous>, transform_indices = @transform_4, window_bounds = array<i64: 1, 128>}, {pipeline_mode = #tpu.pipeline_mode<synchronous>, transform_indices = @transform_5, window_bounds = array<i64: 1, 128>}, {transform_indices = @transform_6, window_bounds = array<i64: 128, 128>}]} {
    %c0 = arith.constant 0 : index
    %c0_0 = arith.constant 0 : index
    %0 = vector.load %arg1[%c0, %c0_0] : memref<128x128xbf16, #tpu.memory_space<vmem>>, vector<128x128xbf16>
    %1 = arith.extf %0 : vector<128x128xbf16> to vector<128x128xf32>
    %c0_1 = arith.constant 0 : index
    %c0_2 = arith.constant 0 : index
    %2 = vector.load %arg2[%c0_1, %c0_2] : memref<1x128xf32, #tpu.memory_space<vmem>>, vector<1x128xf32>
    %3 = vector.broadcast %2 : vector<1x128xf32> to vector<128x128xf32>
    %4 = arith.mulf %1, %3 : vector<128x128xf32>
    %c0_3 = arith.constant 0 : index
    %c0_4 = arith.constant 0 : index
    %5 = vector.load %arg3[%c0_3, %c0_4] : memref<1x128xf32, #tpu.memory_space<vmem>>, vector<1x128xf32>
    %6 = vector.broadcast %5 : vector<1x128xf32> to vector<128x128xf32>
    %7 = arith.addf %4, %6 : vector<128x128xf32>
    %c0_5 = arith.constant 0 : index
    %c0_6 = arith.constant 0 : index
    %8 = vector.load %arg4[%c0_5, %c0_6] : memref<128x128xbf16, #tpu.memory_space<vmem>>, vector<128x128xbf16>
    %9 = arith.extf %8 : vector<128x128xbf16> to vector<128x128xf32>
    %c0_7 = arith.constant 0 : index
    %c0_8 = arith.constant 0 : index
    %10 = vector.load %arg5[%c0_7, %c0_8] : memref<1x128xf32, #tpu.memory_space<vmem>>, vector<1x128xf32>
    %11 = vector.broadcast %10 : vector<1x128xf32> to vector<128x128xf32>
    %12 = arith.mulf %9, %11 : vector<128x128xf32>
    %13 = arith.addf %7, %12 : vector<128x128xf32>
    %c0_9 = arith.constant 0 : index
    %c0_10 = arith.constant 0 : index
    %14 = vector.load %arg6[%c0_9, %c0_10] : memref<1x128xf32, #tpu.memory_space<vmem>>, vector<1x128xf32>
    %15 = vector.broadcast %14 : vector<1x128xf32> to vector<128x128xf32>
    %16 = arith.addf %13, %15 : vector<128x128xf32>
    %cst = arith.constant 0.000000e+00 : f32
    %17 = vector.broadcast %cst : f32 to vector<128x128xf32>
    %18 = arith.maximumf %16, %17 : vector<128x128xf32>
    %c0_11 = arith.constant 0 : index
    %c0_12 = arith.constant 0 : index
    %19 = vector.load %arg7[%c0_11, %c0_12] : memref<128x128xf32, #tpu.memory_space<vmem>>, vector<128x128xf32>
    tpu.vector_store %arg7[%c0_11, %c0_12], %18 {strides = array<i32>} : memref<128x128xf32, #tpu.memory_space<vmem>>, vector<128x128xf32>,
    return
  }
  func.func @transform_0(%arg0: i32) -> (i32, i32) {
    %c0_i32 = arith.constant 0 : i32
    %c0_i32_0 = arith.constant 0 : i32
    return %arg0, %c0_i32 : i32, i32
  }
  func.func @transform_1(%arg0: i32) -> (i32, i32) {
    %c0_i32 = arith.constant 0 : i32
    %c0_i32_0 = arith.constant 0 : i32
    %c0_i32_1 = arith.constant 0 : i32
    return %c0_i32, %c0_i32_0 : i32, i32
  }
  func.func @transform_2(%arg0: i32) -> (i32, i32) {
    %c0_i32 = arith.constant 0 : i32
    %c0_i32_0 = arith.constant 0 : i32
    %c0_i32_1 = arith.constant 0 : i32
    return %c0_i32, %c0_i32_0 : i32, i32
  }
  func.func @transform_3(%arg0: i32) -> (i32, i32) {
    %c0_i32 = arith.constant 0 : i32
    %c0_i32_0 = arith.constant 0 : i32
    return %arg0, %c0_i32 : i32, i32
  }
  func.func @transform_4(%arg0: i32) -> (i32, i32) {
    %c0_i32 = arith.constant 0 : i32
    %c0_i32_0 = arith.constant 0 : i32
    %c0_i32_1 = arith.constant 0 : i32
    return %c0_i32, %c0_i32_0 : i32, i32
  }
  func.func @transform_5(%arg0: i32) -> (i32, i32) {
    %c0_i32 = arith.constant 0 : i32
    %c0_i32_0 = arith.constant 0 : i32
    %c0_i32_1 = arith.constant 0 : i32
    return %c0_i32, %c0_i32_0 : i32, i32
  }
  func.func @transform_6(%arg0: i32) -> (i32, i32) {
    %c0_i32 = arith.constant 0 : i32
    %c0_i32_0 = arith.constant 0 : i32
    return %arg0, %c0_i32 : i32, i32
  }
}

</mosaic_0001>

<llo_original>
// kernel: residual_block_forward.4
$region0: #{residual_block_forward.4}
  #allocation0 [shape = 'u32[]', space=smem, size = 0x4, offset = 0x4, fixed_abs, tag = 'smem constant byte address 0x4 - core index']
  #allocation1 [shape = 'u32[144,128]{1,0:T(1,128)}', space=vmem, size = 0x12000, scoped, tag = 'internal scratch']
  %s0 = inlined_call_operand.vmem [shape: bf16[8,9,9,4], index: 0, kind: input, shape index: {}]
  %s1 = inlined_call_operand.vmem [shape: bf16[9,4,128], index: 1, kind: input, shape index: {}]
  %s2 = inlined_call_operand.vmem [shape: bf16[128,128], index: 2, kind: output, shape index: {0}]
  %s3 = inlined_call_operand.vmem [shape: f32[16,128], index: 3, kind: output, shape index: {1}]
  %s4 = inlined_call_operand.vmem [shape: f32[16,128], index: 4, kind: output, shape index: {2}]
  %5 = xla_tuple %s2, %s3, %s4
  %s6 = sld [smem:[#allocation0]]
  $region57: #{residual_block_forward.4} parent=0
    _
  %s8 = ssub.s32 1, %s6
  %s9 = scalar_select 0, %s8, %s6
  loop: start=0, step=1, limit=4
  $region2: #{residual_block_forward.4} parent=0 // loop_pre_header
    _
  $region3: #{residual_block_forward.4} parent=0 // loop_header
    %s11 = sphi 0, %s15
    %p12 = scmp.ge.s32.totalorder %s11, 4
    %s21 = sphi 0, %s23
    %s24 = sphi 0, %s21
    %s25 = sphi 0, %s24
    %s41 = sphi 0, %s25
    %s45 = sphi 0, %s45
    %s47 = sphi 0, %s45
    %s48 = sphi 0, %s47
    %s62 = sphi 0, %s48
    %s68 = sphi 0, %s70
    %s71 = sphi 0, %s68
    %s72 = sphi 0, %s71
    %s88 = sphi 0, %s72
    %s94 = sphi 0, %s96
    %s97 = sphi 0, %s94
    %s98 = sphi 0, %s97
    %s114 = sphi 0, %s98
    %s120 = sphi 0, %s122
    %s123 = sphi 0, %s120
    %s124 = sphi 0, %s123
    %s140 = sphi 0, %s124
  $region4: #{residual_block_forward.4} parent=0 // loop_header_branch
    %14 = sbr.rel (%p12) target = $region8
  $region5: #{residual_block_forward.4} parent=0 // loop_body
    %s16 = ssub.s32 %s11, 1
    %s17 = ssub.s32 %s11, 2
    %s18 = sadd.s32 %s11, 1
    %s19 = ssub.s32 %s11, %s18
    %p20 = scmp.eq.s32.totalorder %s19, 0
    %s22 = sadd.s32 %s21, 1
    %s23 = scalar_select %p20, %s21, %s22
    %p26 = pneg %p20
    %p27 = scmp.eq.s32.totalorder %s11, 1
    %p28 = por %p26, %p27
    %p29 = scmp.ne.s32.totalorder %s21, %s24
    %p30 = scmp.eq.s32.totalorder %s11, 0
    %p31 = por %p29, %p30
    %p32 = scmp.ne.s32.totalorder %s21, %s24
    %p33 = scmp.eq.s32.totalorder %s16, 1
    %p34 = por %p32, %p33
    %p35 = scmp.ne.s32.totalorder %s24, %s25
    %p36 = scmp.eq.s32.totalorder %s16, 0
    %p37 = por %p35, %p36
    %p38 = scmp.ne.s32.totalorder %s24, %s25
    %p39 = scmp.eq.s32.totalorder %s17, 1
    %p40 = por %p38, %p39
    %p42 = scmp.ne.s32.totalorder %s25, %s41
    %p43 = scmp.eq.s32.totalorder %s17, 0
    %p44 = por %p42, %p43
    %s46 = sadd.s32 %s45, 1
    %p49 = scmp.eq.s32.totalorder %s11, 1
    %p50 = scmp.ne.s32.totalorder %s45, %s47
    %p51 = scmp.eq.s32.totalorder %s11, 0
    %p52 = por %p50, %p51
    %p53 = scmp.ne.s32.totalorder %s45, %s47
    %p54 = scmp.eq.s32.totalorder %s16, 1
    %p55 = por %p53, %p54
    %p56 = scmp.ne.s32.totalorder %s47, %s48
    %p57 = scmp.eq.s32.totalorder %s16, 0
    %p58 = por %p56, %p57
    %p59 = scmp.ne.s32.totalorder %s47, %s48
    %p60 = scmp.eq.s32.totalorder %s17, 1
    %p61 = por %p59, %p60
    %p63 = scmp.ne.s32.totalorder %s48, %s62
    %p64 = scmp.eq.s32.totalorder %s17, 0
    %p65 = por %p63, %p64
    %s66 = ssub.s32 %s11, %s18
    %p67 = scmp.eq.s32.totalorder %s66, 0
    %s69 = sadd.s32 %s68, 1
    %s70 = scalar_select %p67, %s68, %s69
    %p73 = pneg %p67
    %p74 = scmp.eq.s32.totalorder %s11, 1
    %p75 = por %p73, %p74
    %p76 = scmp.ne.s32.totalorder %s68, %s71
    %p77 = scmp.eq.s32.totalorder %s11, 0
    %p78 = por %p76, %p77
    %p79 = scmp.ne.s32.totalorder %s68, %s71
    %p80 = scmp.eq.s32.totalorder %s16, 1
    %p81 = por %p79, %p80
    %p82 = scmp.ne.s32.totalorder %s71, %s72
    %p83 = scmp.eq.s32.totalorder %s16, 0
    %p84 = por %p82, %p83
    %p85 = scmp.ne.s32.totalorder %s71, %s72
    %p86 = scmp.eq.s32.totalorder %s17, 1
    %p87 = por %p85, %p86
    %p89 = scmp.ne.s32.totalorder %s72, %s88
    %p90 = scmp.eq.s32.totalorder %s17, 0
    %p91 = por %p89, %p90
    %s92 = ssub.s32 %s11, %s18
    %p93 = scmp.eq.s32.totalorder %s92, 0
    %s95 = sadd.s32 %s94, 1
    %s96 = scalar_select %p93, %s94, %s95
    %p99 = pneg %p93
    %p100 = scmp.eq.s32.totalorder %s11, 1
    %p101 = por %p99, %p100
    %p102 = scmp.ne.s32.totalorder %s94, %s97
    %p103 = scmp.eq.s32.totalorder %s11, 0
    %p104 = por %p102, %p103
    %p105 = scmp.ne.s32.totalorder %s94, %s97
    %p106 = scmp.eq.s32.totalorder %s16, 1
    %p107 = por %p105, %p106
    %p108 = scmp.ne.s32.totalorder %s97, %s98
    %p109 = scmp.eq.s32.totalorder %s16, 0
    %p110 = por %p108, %p109
    %p111 = scmp.ne.s32.totalorder %s97, %s98
    %p112 = scmp.eq.s32.totalorder %s17, 1
    %p113 = por %p111, %p112
    %p115 = scmp.ne.s32.totalorder %s98, %s114
    %p116 = scmp.eq.s32.totalorder %s17, 0
    %p117 = por %p115, %p116
    %s118 = ssub.s32 %s11, %s18
    %p119 = scmp.eq.s32.totalorder %s118, 0
    %s121 = sadd.s32 %s120, 1
    %s122 = scalar_select %p119, %s120, %s121
    %p125 = pneg %p119
    %p126 = scmp.eq.s32.totalorder %s11, 1
    %p127 = por %p125, %p126
    %p128 = scmp.ne.s32.totalorder %s120, %s123
    %p129 = scmp.eq.s32.totalorder %s11, 0
    %p130 = por %p128, %p129
    %p131 = scmp.ne.s32.totalorder %s120, %s123
    %p132 = scmp.eq.s32.totalorder %s16, 1
    %p133 = por %p131, %p132
    %p134 = scmp.ne.s32.totalorder %s123, %s124
    %p135 = scmp.eq.s32.totalorder %s16, 0
    %p136 = por %p134, %p135
    %p137 = scmp.ne.s32.totalorder %s123, %s124
    %p138 = scmp.eq.s32.totalorder %s17, 1
    %p139 = por %p137, %p138
    %p141 = scmp.ne.s32.totalorder %s124, %s140
    %p142 = scmp.eq.s32.totalorder %s17, 0
    %p143 = por %p141, %p142
    %p144 = scmp.le.s32.totalorder 1, %s11
    %p145 = scmp.lt.s32.totalorder %s11, 3
    %p146 = pnand %p144, %p145
    %p147 = pneg %p146
    // Predicated region
    $region9: #{residual_block_forward.4} parent=5 // pred_check
      _
    $region10: #{residual_block_forward.4} parent=5 // pred_check_branch
      %149 = sbr.rel (%p146) target = $region12
    $region11: #{residual_block_forward.4} parent=5 // pred_region
      %s150 = ssub.s32 %s11, 1
      // Predicated region
      $region13: #{residual_block_forward.4} parent=11 // pred_check
        %p151 = pneg %p58
      $region14: #{residual_block_forward.4} parent=11 // pred_check_branch
        %153 = sbr.rel (%p151) target = $region16
      $region15: #{residual_block_forward.4} parent=11 // pred_region
        _
      $region16: #{residual_block_forward.4} parent=11 // pred_fallthru
        _
    $region12: #{residual_block_forward.4} parent=5 // pred_fallthru
      _
    %p154 = scmp.lt.s32.totalorder %s11, 2
    // Predicated region
    $region17: #{residual_block_forward.4} parent=5 // pred_check
      %p155 = pneg %p154
    $region18: #{residual_block_forward.4} parent=5 // pred_check_branch
      %157 = sbr.rel (%p155) target = $region20
    $region19: #{residual_block_forward.4} parent=5 // pred_region
      // Predicated region
      $region21: #{residual_block_forward.4} parent=19 // pred_check
        %p158 = pneg %p31
      $region22: #{residual_block_forward.4} parent=19 // pred_check_branch
        %160 = sbr.rel (%p158) target = $region24
      $region23: #{residual_block_forward.4} parent=19 // pred_region
        %s161 = smul.u32 4, %s11
        %p162 = scmp.lt.s32.totalorder %s161, 7
        %s163 = scalar_select %p162, %s161, 7
        %s164 = smul.addr %s163, 18
        %s165 = smul.addr %s164, 4
        %s166 = scalar_lea.vmem %s0, %s165
        %s167 = smul.u32 4, %s11
      $region24: #{residual_block_forward.4} parent=19 // pred_fallthru
        _
    $region20: #{residual_block_forward.4} parent=5 // pred_fallthru
      _
    %p168 = scmp.le.s32.totalorder 1, %s11
    %p169 = scmp.lt.s32.totalorder %s11, 3
    %p170 = pnand %p168, %p169
    %p171 = pneg %p170
    // Predicated region
    $region25: #{residual_block_forward.4} parent=5 // pred_check
      _
    $region26: #{residual_block_forward.4} parent=5 // pred_check_branch
      %173 = sbr.rel (%p170) target = $region28
    $region27: #{residual_block_forward.4} parent=5 // pred_region
      %s174 = ssub.s32 %s11, 1
      %s175 = smul.u32 4, %s16
      %p176 = scmp.lt.s32.totalorder %s175, 7
      %s177 = scalar_select %p176, %s175, 7
      %s178 = smul.addr %s177, 18
      %s179 = smul.addr %s178, 4
      %s180 = scalar_lea.vmem %s0, %s179
      %p181 = pneg %p37
      %p182 = pneg %p34
      %p183 = pneg %p58
      %p184 = pneg %p55
      %p185 = pneg %p84
      %p186 = pneg %p81
      %s187 = smul.u32 8, %s16
      %p188 = scmp.lt.s32.totalorder %s187, 15
      %s189 = scalar_select %p188, %s187, 15
      %s190 = smul.addr %s189, 4
      %s191 = scalar_lea.vmem %s2, %s190
      %p192 = pneg %p110
      %p193 = pneg %p107
      %p194 = scmp.lt.s32.totalorder %s16, 1
      %s195 = scalar_select %p194, %s16, 1
      %s196 = smul.addr %s195, 8
      %s197 = scalar_lea.vmem %s3, %s196
      %p198 = pneg %p136
      %p199 = pneg %p133
      %p200 = scmp.lt.s32.totalorder %s16, 1
      %s201 = scalar_select %p200, %s16, 1
      %s202 = smul.addr %s201, 8
      %s203 = scalar_lea.vmem %s4, %s202
      %s204 = smul.u32 4, %s16
      %p205 = scmp.lt.s32.totalorder %s204, 7
      %s206 = scalar_select %p205, %s204, 7
      %s207 = smul.addr %s206, 18
      %s208 = smul.addr %s207, 4
      %s209 = scalar_lea.vmem %s0, %s208
      %s210 = smul.u32 4, %s16
      %s211 = smul.u32 8, %s16
      %p212 = scmp.lt.s32.totalorder %s211, 15
      %s213 = scalar_select %p212, %s211, 15
      %s214 = smul.addr %s213, 4
      %s215 = scalar_lea.vmem %s2, %s214
      %s216 = smul.u32 8, %s16
      %p217 = scmp.lt.s32.totalorder %s16, 1
      %s218 = scalar_select %p217, %s16, 1
      %s219 = smul.addr %s218, 8
      %s220 = scalar_lea.vmem %s3, %s219
      %p221 = scmp.lt.s32.totalorder %s16, 1
      %s222 = scalar_select %p221, %s16, 1
      %s223 = smul.addr %s222, 8
      %s224 = scalar_lea.vmem %s4, %s223
      %v226 = vld [vmem:[%s209] sm:$0xf]
      %v227 = vld [vmem:[%s209 + $0x4] sm:$0x1]
      %v228 = vld [vmem:[%s209 + $0x8] sm:$0xf]
      %v229 = vld [vmem:[%s209 + $0xc] sm:$0x1]
      %v230 = vld [vmem:[%s209 + $0x10] sm:$0xf]
      %v231 = vld [vmem:[%s209 + $0x14] sm:$0x1]
      %v232 = vld [vmem:[%s209 + $0x18] sm:$0xf]
      %v233 = vld [vmem:[%s209 + $0x1c] sm:$0x1]
      %v234 = vld [vmem:[%s209 + $0x20] sm:$0xf]
      %v235 = vld [vmem:[%s209 + $0x24] sm:$0x1]
      %v236 = vld [vmem:[%s209 + $0x28] sm:$0xf]
      %v237 = vld [vmem:[%s209 + $0x2c] sm:$0x1]
      %v238 = vld [vmem:[%s209 + $0x30] sm:$0xf]
      %v239 = vld [vmem:[%s209 + $0x34] sm:$0x1]
      %v240 = vld [vmem:[%s209 + $0x38] sm:$0xf]
      %v241 = vld [vmem:[%s209 + $0x3c] sm:$0x1]
      %v242 = vld [vmem:[%s209 + $0x40] sm:$0xf]
      %v243 = vld [vmem:[%s209 + $0x44] sm:$0x1]
      %v244 = vunpack.c.l.bf16 %v226
      %v245 = vunpack.c.l.bf16 %v227
      %v246 = vunpack.c.l.bf16 %v228
      %v247 = vunpack.c.l.bf16 %v229
      %v248 = vunpack.c.l.bf16 %v230
      %v249 = vunpack.c.l.bf16 %v231
      %v250 = vunpack.c.l.bf16 %v232
      %v251 = vunpack.c.l.bf16 %v233
      %v252 = vunpack.c.l.bf16 %v234
      %v253 = vunpack.c.l.bf16 %v235
      %v254 = vunpack.c.l.bf16 %v236
      %v255 = vunpack.c.l.bf16 %v237
      %v256 = vunpack.c.l.bf16 %v238
      %v257 = vunpack.c.l.bf16 %v239
      %v258 = vunpack.c.l.bf16 %v240
      %v259 = vunpack.c.l.bf16 %v241
      %v260 = vunpack.c.l.bf16 %v242
      %v261 = vunpack.c.l.bf16 %v243
      %s262 = scalar_lea.vmem %s209, 72
      %v263 = vld [vmem:[%s262] sm:$0xf]
      %v264 = vld [vmem:[%s262 + $0x8] sm:$0xf]
      %v265 = vld [vmem:[%s262 + $0x10] sm:$0xf]
      %v266 = vld [vmem:[%s262 + $0x18] sm:$0xf]
      %v267 = vld [vmem:[%s262 + $0x20] sm:$0xf]
      %v268 = vld [vmem:[%s262 + $0x28] sm:$0xf]
      %v269 = vld [vmem:[%s262 + $0x30] sm:$0xf]
      %v270 = vld [vmem:[%s262 + $0x38] sm:$0xf]
      %v271 = vld [vmem:[%s262 + $0x40] sm:$0xf]
      %v272 = vunpack.c.l.bf16 %v263
      %v273 = vunpack.c.l.bf16 %v264
      %v274 = vunpack.c.l.bf16 %v265
      %v275 = vunpack.c.l.bf16 %v266
      %v276 = vunpack.c.l.bf16 %v267
      %v277 = vunpack.c.l.bf16 %v268
      %v278 = vunpack.c.l.bf16 %v269
      %v279 = vunpack.c.l.bf16 %v270
      %v280 = vunpack.c.l.bf16 %v271
      %s281 = scalar_lea.vmem %s209, 144
      %v282 = vld [vmem:[%s281] sm:$0xf]
      %v283 = vld [vmem:[%s281 + $0x4] sm:$0x1]
      %v284 = vld [vmem:[%s281 + $0x8] sm:$0xf]
      %v285 = vld [vmem:[%s281 + $0xc] sm:$0x1]
      %v286 = vld [vmem:[%s281 + $0x10] sm:$0xf]
      %v287 = vld [vmem:[%s281 + $0x14] sm:$0x1]
      %v288 = vld [vmem:[%s281 + $0x18] sm:$0xf]
      %v289 = vld [vmem:[%s281 + $0x1c] sm:$0x1]
      %v290 = vld [vmem:[%s281 + $0x20] sm:$0xf]
      %v291 = vld [vmem:[%s281 + $0x24] sm:$0x1]
      %v292 = vld [vmem:[%s281 + $0x28] sm:$0xf]
      %v293 = vld [vmem:[%s281 + $0x2c] sm:$0x1]
      %v294 = vld [vmem:[%s281 + $0x30] sm:$0xf]
      %v295 = vld [vmem:[%s281 + $0x34] sm:$0x1]
      %v296 = vld [vmem:[%s281 + $0x38] sm:$0xf]
      %v297 = vld [vmem:[%s281 + $0x3c] sm:$0x1]
      %v298 = vunpack.c.l.bf16 %v282
      %v299 = vunpack.c.l.bf16 %v283
      %v300 = vunpack.c.l.bf16 %v284
      %v301 = vunpack.c.l.bf16 %v285
      %v302 = vunpack.c.l.bf16 %v286
      %v303 = vunpack.c.l.bf16 %v287
      %v304 = vunpack.c.l.bf16 %v288
      %v305 = vunpack.c.l.bf16 %v289
      %v306 = vunpack.c.l.bf16 %v290
      %v307 = vunpack.c.l.bf16 %v291
      %v308 = vunpack.c.l.bf16 %v292
      %v309 = vunpack.c.l.bf16 %v293
      %v310 = vunpack.c.l.bf16 %v294
      %v311 = vunpack.c.l.bf16 %v295
      %v312 = vunpack.c.l.bf16 %v296
      %v313 = vunpack.c.l.bf16 %v297
      %s314 = scalar_lea.vmem %s209, 216
      %v315 = vld [vmem:[%s314] sm:$0xf]
      %v316 = vld [vmem:[%s314 + $0x8] sm:$0xf]
      %v317 = vld [vmem:[%s314 + $0x10] sm:$0xf]
      %v318 = vld [vmem:[%s314 + $0x18] sm:$0xf]
      %v319 = vld [vmem:[%s314 + $0x20] sm:$0xf]
      %v320 = vld [vmem:[%s314 + $0x28] sm:$0xf]
      %v321 = vld [vmem:[%s314 + $0x30] sm:$0xf]
      %v322 = vld [vmem:[%s314 + $0x38] sm:$0xf]
      %v323 = vunpack.c.l.bf16 %v315
      %v324 = vunpack.c.l.bf16 %v316
      %v325 = vunpack.c.l.bf16 %v317
      %v326 = vunpack.c.l.bf16 %v318
      %v327 = vunpack.c.l.bf16 %v319
      %v328 = vunpack.c.l.bf16 %v320
      %v329 = vunpack.c.l.bf16 %v321
      %v330 = vunpack.c.l.bf16 %v322
      %v331 = vpack.c.bf16 %v246, %v244
      %v332 = vpack.c.bf16 %v250, %v248
      %v333 = vpack.c.bf16 %v254, %v252
      %v334 = vpack.c.bf16 %v258, %v256
      %v335 = vld [vmem:[%s1] sm:$0x3]
      %v336 = vpack.c.bf16 %v273, %v272
      %v337 = vpack.c.bf16 %v275, %v274
      %v338 = vpack.c.bf16 %v277, %v276
      %v339 = vpack.c.bf16 %v279, %v278
      %s340 = scalar_lea.vmem %s1, 2
      %v341 = vld [vmem:[%s340] sm:$0x3]
      %vm342 = vcmask 31744
      %v344 = vsel %vm342, %v336, 0
      %v347 = vsel %vm342, %v337, 0
      %v350 = vsel %vm342, %v338, 0
      %v353 = vsel %vm342, %v339, 0
      %vm355 = vcmask 1041408
      %v357 = vsel %vm355, %v341, 0
      %359 = vmatprep.subr.bf16.mxu0 0
      %360 = vmatpush1.bf16.msra.mxu0 0
      %361 = vmatprep.subr.bf16.mxu0 0
      %362 = vmatpush1.bf16.msra.mxu0 0
      %363 = vmatprep.subr.bf16.mxu0 0
      %364 = vmatpush1.bf16.msra.mxu0 0
      %365 = vmatprep.subr.bf16.mxu0 0
      %366 = vmatpush1.bf16.msra.mxu0 0
      %367 = vmatprep.subr.bf16.mxu0 0
      %368 = vmatpush1.bf16.msra.mxu0 0
      %369 = vmatprep.subr.bf16.mxu0 0
      %370 = vmatpush1.bf16.msra.mxu0 0
      %371 = vmatprep.subr.bf16.mxu0 0
      %372 = vmatpush1.bf16.msra.mxu0 0
      %373 = vmatprep.subr.bf16.mxu0 0
      %374 = vmatpush1.bf16.msra.mxu0 %v357
      %375 = vmatprep.subr.bf16.mxu0 0
      %376 = vmatpush2.bf16.msra.mxu0 0
      %377 = vmatprep.subr.bf16.mxu0 0
      %378 = vmatpush2.bf16.msra.mxu0 0
      %379 = vmatprep.subr.bf16.mxu0 0
      %380 = vmatpush2.bf16.msra.mxu0 0
      %381 = vmatprep.subr.bf16.mxu0 0
      %382 = vmatpush2.bf16.msra.mxu0 0
      %383 = vmatprep.subr.bf16.mxu0 0
      %384 = vmatpush2.bf16.msra.mxu0 0
      %385 = vmatprep.subr.bf16.mxu0 0
      %386 = vmatpush2.bf16.msra.mxu0 0
      %387 = vmatprep.subr.bf16.mxu0 0
      %388 = vmatpush2.bf16.msra.mxu0 0
      %389 = vmatprep.subr.bf16.mxu0 0
      %390 = vmatpush2.bf16.msra.mxu0 0
      %391 = vmatprep.mubr.bf16.mxu0 0
      %392 = vmatmul.mubr.bf16.gmra.mxu0 %v344
      %v393 = vpop.f32.mrf.mxu0
      %v394 = vadd.f32 0.0, %v393
      %v395 = vpop.f32.mrf.mxu0
      %v396 = vpop.f32.mrf.mxu0
      %v397 = vadd.f32 0.0, %v396
      %v398 = vpop.f32.mrf.mxu0
      %399 = vmatprep.mubr.bf16.mxu0 0
      %400 = vmatmul.mubr.bf16.gmra.mxu0 %v347
      %v401 = vpop.f32.mrf.mxu0
      %v402 = vadd.f32 0.0, %v401
      %v403 = vpop.f32.mrf.mxu0
      %v404 = vpop.f32.mrf.mxu0
      %v405 = vadd.f32 0.0, %v404
      %v406 = vpop.f32.mrf.mxu0
      %407 = vmatprep.mubr.bf16.mxu0 0
      %408 = vmatmul.mubr.bf16.gmra.mxu0 %v350
      %v409 = vpop.f32.mrf.mxu0
      %v410 = vadd.f32 0.0, %v409
      %v411 = vpop.f32.mrf.mxu0
      %v412 = vpop.f32.mrf.mxu0
      %v413 = vadd.f32 0.0, %v412
      %v414 = vpop.f32.mrf.mxu0
      %415 = vmatprep.mubr.bf16.mxu0 0
      %416 = vmatmul.mubr.bf16.gmra.mxu0 %v353
      %v417 = vpop.f32.mrf.mxu0
      %v418 = vadd.f32 0.0, %v417
      %v419 = vpop.f32.mrf.mxu0
      %v420 = vpop.f32.mrf.mxu0
      %v421 = vadd.f32 0.0, %v420
      %v422 = vpop.f32.mrf.mxu0
      %423 = vdwg.mxu0
      %v425 = vsel %vm342, %v331, 0
      %v428 = vsel %vm342, %v332, 0
      %v431 = vsel %vm342, %v333, 0
      %v434 = vsel %vm342, %v334, 0
      %v437 = vsel %vm355, %v335, 0
      %439 = vmatprep.subr.bf16.mxu0 0
      %440 = vmatpush1.bf16.msra.mxu0 0
      %441 = vmatprep.subr.bf16.mxu0 0
      %442 = vmatpush1.bf16.msra.mxu0 0
      %443 = vmatprep.subr.bf16.mxu0 0
      %444 = vmatpush1.bf16.msra.mxu0 0
      %445 = vmatprep.subr.bf16.mxu0 0
      %446 = vmatpush1.bf16.msra.mxu0 0
      %447 = vmatprep.subr.bf16.mxu0 0
      %448 = vmatpush1.bf16.msra.mxu0 0
      %449 = vmatprep.subr.bf16.mxu0 0
      %450 = vmatpush1.bf16.msra.mxu0 0
      %451 = vmatprep.subr.bf16.mxu0 0
      %452 = vmatpush1.bf16.msra.mxu0 0
      %453 = vmatprep.subr.bf16.mxu0 0
      %454 = vmatpush1.bf16.msra.mxu0 %v437
      %455 = vmatprep.subr.bf16.mxu0 0
      %456 = vmatpush2.bf16.msra.mxu0 0
      %457 = vmatprep.subr.bf16.mxu0 0
      %458 = vmatpush2.bf16.msra.mxu0 0
      %459 = vmatprep.subr.bf16.mxu0 0
      %460 = vmatpush2.bf16.msra.mxu0 0
      %461 = vmatprep.subr.bf16.mxu0 0
      %462 = vmatpush2.bf16.msra.mxu0 0
      %463 = vmatprep.subr.bf16.mxu0 0
      %464 = vmatpush2.bf16.msra.mxu0 0
      %465 = vmatprep.subr.bf16.mxu0 0
      %466 = vmatpush2.bf16.msra.mxu0 0
      %467 = vmatprep.subr.bf16.mxu0 0
      %468 = vmatpush2.bf16.msra.mxu0 0
      %469 = vmatprep.subr.bf16.mxu0 0
      %470 = vmatpush2.bf16.msra.mxu0 0
      %471 = vmatprep.mubr.bf16.mxu0 0
      %472 = vmatmul.mubr.bf16.gmra.mxu0 %v425
      %v473 = vpop.f32.mrf.mxu0
      %v474 = vadd.f32 %v394, %v473
      %v475 = vpop.f32.mrf.mxu0
      %v476 = vpop.f32.mrf.mxu0
      %v477 = vadd.f32 %v397, %v476
      %v478 = vpop.f32.mrf.mxu0
      %479 = vmatprep.mubr.bf16.mxu0 0
      %480 = vmatmul.mubr.bf16.gmra.mxu0 %v428
      %v481 = vpop.f32.mrf.mxu0
      %v482 = vadd.f32 %v402, %v481
      %v483 = vpop.f32.mrf.mxu0
      %v484 = vpop.f32.mrf.mxu0
      %v485 = vadd.f32 %v405, %v484
      %v486 = vpop.f32.mrf.mxu0
      %487 = vmatprep.mubr.bf16.mxu0 0
      %488 = vmatmul.mubr.bf16.gmra.mxu0 %v431
      %v489 = vpop.f32.mrf.mxu0
      %v490 = vadd.f32 %v410, %v489
      %v491 = vpop.f32.mrf.mxu0
      %v492 = vpop.f32.mrf.mxu0
      %v493 = vadd.f32 %v413, %v492
      %v494 = vpop.f32.mrf.mxu0
      %495 = vmatprep.mubr.bf16.mxu0 0
      %496 = vmatmul.mubr.bf16.gmra.mxu0 %v434
      %v497 = vpop.f32.mrf.mxu0
      %v498 = vadd.f32 %v418, %v497
      %v499 = vpop.f32.mrf.mxu0
      %v500 = vpop.f32.mrf.mxu0
      %v501 = vadd.f32 %v421, %v500
      %v502 = vpop.f32.mrf.mxu0
      %503 = vdwg.mxu0
      %vm520 = vcmask 1046528
      %v521 = vrot.slane %v244, 1
      %v522 = vrot.slane %v245, 1
      %v523 = vsel %vm520, %v521, %v522
      %v524 = vrot.slane %v246, 1
      %v525 = vrot.slane %v247, 1
      %v526 = vsel %vm520, %v524, %v525
      %v527 = vrot.slane %v248, 1
      %v528 = vrot.slane %v249, 1
      %v529 = vsel %vm520, %v527, %v528
      %v530 = vrot.slane %v250, 1
      %v531 = vrot.slane %v251, 1
      %v532 = vsel %vm520, %v530, %v531
      %v533 = vrot.slane %v252, 1
      %v534 = vrot.slane %v253, 1
      %v535 = vsel %vm520, %v533, %v534
      %v536 = vrot.slane %v254, 1
      %v537 = vrot.slane %v255, 1
      %v538 = vsel %vm520, %v536, %v537
      %v539 = vrot.slane %v256, 1
      %v540 = vrot.slane %v257, 1
      %v541 = vsel %vm520, %v539, %v540
      %v542 = vrot.slane %v258, 1
      %v543 = vrot.slane %v259, 1
      %v544 = vsel %vm520, %v542, %v543
      %v553 = vpack.c.bf16 %v526, %v523
      %v554 = vpack.c.bf16 %v532, %v529
      %v555 = vpack.c.bf16 %v538, %v535
      %v556 = vpack.c.bf16 %v544, %v541
      %s557 = scalar_lea.vmem %s1, 4
      %v558 = vld [vmem:[%s557] sm:$0x3]
      %v560 = vsel %vm342, %v553, 0
      %v563 = vsel %vm342, %v554, 0
      %v566 = vsel %vm342, %v555, 0
      %v569 = vsel %vm342, %v556, 0
      %v572 = vsel %vm355, %v558, 0
      %574 = vmatprep.subr.bf16.mxu0 0
      %575 = vmatpush1.bf16.msra.mxu0 0
      %576 = vmatprep.subr.bf16.mxu0 0
      %577 = vmatpush1.bf16.msra.mxu0 0
      %578 = vmatprep.subr.bf16.mxu0 0
      %579 = vmatpush1.bf16.msra.mxu0 0
      %580 = vmatprep.subr.bf16.mxu0 0
      %581 = vmatpush1.bf16.msra.mxu0 0
      %582 = vmatprep.subr.bf16.mxu0 0
      %583 = vmatpush1.bf16.msra.mxu0 0
      %584 = vmatprep.subr.bf16.mxu0 0
      %585 = vmatpush1.bf16.msra.mxu0 0
      %586 = vmatprep.subr.bf16.mxu0 0
      %587 = vmatpush1.bf16.msra.mxu0 0
      %588 = vmatprep.subr.bf16.mxu0 0
      %589 = vmatpush1.bf16.msra.mxu0 %v572
      %590 = vmatprep.subr.bf16.mxu0 0
      %591 = vmatpush2.bf16.msra.mxu0 0
      %592 = vmatprep.subr.bf16.mxu0 0
      %593 = vmatpush2.bf16.msra.mxu0 0
      %594 = vmatprep.subr.bf16.mxu0 0
      %595 = vmatpush2.bf16.msra.mxu0 0
      %596 = vmatprep.subr.bf16.mxu0 0
      %597 = vmatpush2.bf16.msra.mxu0 0
      %598 = vmatprep.subr.bf16.mxu0 0
      %599 = vmatpush2.bf16.msra.mxu0 0
      %600 = vmatprep.subr.bf16.mxu0 0
      %601 = vmatpush2.bf16.msra.mxu0 0
      %602 = vmatprep.subr.bf16.mxu0 0
      %603 = vmatpush2.bf16.msra.mxu0 0
      %604 = vmatprep.subr.bf16.mxu0 0
      %605 = vmatpush2.bf16.msra.mxu0 0
      %606 = vmatprep.mubr.bf16.mxu0 0
      %607 = vmatmul.mubr.bf16.gmra.mxu0 %v560
      %v608 = vpop.f32.mrf.mxu0
      %v609 = vadd.f32 0.0, %v608
      %v610 = vpop.f32.mrf.mxu0
      %v611 = vpop.f32.mrf.mxu0
      %v612 = vadd.f32 0.0, %v611
      %v613 = vpop.f32.mrf.mxu0
      %614 = vmatprep.mubr.bf16.mxu0 0
      %615 = vmatmul.mubr.bf16.gmra.mxu0 %v563
      %v616 = vpop.f32.mrf.mxu0
      %v617 = vadd.f32 0.0, %v616
      %v618 = vpop.f32.mrf.mxu0
      %v619 = vpop.f32.mrf.mxu0
      %v620 = vadd.f32 0.0, %v619
      %v621 = vpop.f32.mrf.mxu0
      %622 = vmatprep.mubr.bf16.mxu0 0
      %623 = vmatmul.mubr.bf16.gmra.mxu0 %v566
      %v624 = vpop.f32.mrf.mxu0
      %v625 = vadd.f32 0.0, %v624
      %v626 = vpop.f32.mrf.mxu0
      %v627 = vpop.f32.mrf.mxu0
      %v628 = vadd.f32 0.0, %v627
      %v629 = vpop.f32.mrf.mxu0
      %630 = vmatprep.mubr.bf16.mxu0 0
      %631 = vmatmul.mubr.bf16.gmra.mxu0 %v569
      %v632 = vpop.f32.mrf.mxu0
      %v633 = vadd.f32 0.0, %v632
      %v634 = vpop.f32.mrf.mxu0
      %v635 = vpop.f32.mrf.mxu0
      %v636 = vadd.f32 0.0, %v635
      %v637 = vpop.f32.mrf.mxu0
      %638 = vdwg.mxu0
      %v639 = vadd.f32 %v474, %v609
      %v640 = vadd.f32 %v477, %v612
      %v641 = vadd.f32 %v482, %v617
      %v642 = vadd.f32 %v485, %v620
      %v643 = vadd.f32 %v490, %v625
      %v644 = vadd.f32 %v493, %v628
      %v645 = vadd.f32 %v498, %v633
      %v646 = vadd.f32 %v501, %v636
      %v647 = vpack.c.bf16 %v300, %v298
      %v648 = vpack.c.bf16 %v304, %v302
      %v649 = vpack.c.bf16 %v308, %v306
      %v650 = vpack.c.bf16 %v312, %v310
      %s651 = scalar_lea.vmem %s1, 6
      %v652 = vld [vmem:[%s651] sm:$0x3]
      %v654 = vsel %vm342, %v647, 0
      %v657 = vsel %vm342, %v648, 0
      %v660 = vsel %vm342, %v649, 0
      %v663 = vsel %vm342, %v650, 0
      %v666 = vsel %vm355, %v652, 0
      %668 = vmatprep.subr.bf16.mxu0 0
      %669 = vmatpush1.bf16.msra.mxu0 0
      %670 = vmatprep.subr.bf16.mxu0 0
      %671 = vmatpush1.bf16.msra.mxu0 0
      %672 = vmatprep.subr.bf16.mxu0 0
      %673 = vmatpush1.bf16.msra.mxu0 0
      %674 = vmatprep.subr.bf16.mxu0 0
      %675 = vmatpush1.bf16.msra.mxu0 0
      %676 = vmatprep.subr.bf16.mxu0 0
      %677 = vmatpush1.bf16.msra.mxu0 0
      %678 = vmatprep.subr.bf16.mxu0 0
      %679 = vmatpush1.bf16.msra.mxu0 0
      %680 = vmatprep.subr.bf16.mxu0 0
      %681 = vmatpush1.bf16.msra.mxu0 0
      %682 = vmatprep.subr.bf16.mxu0 0
      %683 = vmatpush1.bf16.msra.mxu0 %v666
      %684 = vmatprep.subr.bf16.mxu0 0
      %685 = vmatpush2.bf16.msra.mxu0 0
      %686 = vmatprep.subr.bf16.mxu0 0
      %687 = vmatpush2.bf16.msra.mxu0 0
      %688 = vmatprep.subr.bf16.mxu0 0
      %689 = vmatpush2.bf16.msra.mxu0 0
      %690 = vmatprep.subr.bf16.mxu0 0
      %691 = vmatpush2.bf16.msra.mxu0 0
      %692 = vmatprep.subr.bf16.mxu0 0
      %693 = vmatpush2.bf16.msra.mxu0 0
      %694 = vmatprep.subr.bf16.mxu0 0
      %695 = vmatpush2.bf16.msra.mxu0 0
      %696 = vmatprep.subr.bf16.mxu0 0
      %697 = vmatpush2.bf16.msra.mxu0 0
      %698 = vmatprep.subr.bf16.mxu0 0
      %699 = vmatpush2.bf16.msra.mxu0 0
      %700 = vmatprep.mubr.bf16.mxu0 0
      %701 = vmatmul.mubr.bf16.gmra.mxu0 %v654
      %v702 = vpop.f32.mrf.mxu0
      %v703 = vadd.f32 0.0, %v702
      %v704 = vpop.f32.mrf.mxu0
      %v705 = vpop.f32.mrf.mxu0
      %v706 = vadd.f32 0.0, %v705
      %v707 = vpop.f32.mrf.mxu0
      %708 = vmatprep.mubr.bf16.mxu0 0
      %709 = vmatmul.mubr.bf16.gmra.mxu0 %v657
      %v710 = vpop.f32.mrf.mxu0
      %v711 = vadd.f32 0.0, %v710
      %v712 = vpop.f32.mrf.mxu0
      %v713 = vpop.f32.mrf.mxu0
      %v714 = vadd.f32 0.0, %v713
      %v715 = vpop.f32.mrf.mxu0
      %716 = vmatprep.mubr.bf16.mxu0 0
      %717 = vmatmul.mubr.bf16.gmra.mxu0 %v660
      %v718 = vpop.f32.mrf.mxu0
      %v719 = vadd.f32 0.0, %v718
      %v720 = vpop.f32.mrf.mxu0
      %v721 = vpop.f32.mrf.mxu0
      %v722 = vadd.f32 0.0, %v721
      %v723 = vpop.f32.mrf.mxu0
      %724 = vmatprep.mubr.bf16.mxu0 0
      %725 = vmatmul.mubr.bf16.gmra.mxu0 %v663
      %v726 = vpop.f32.mrf.mxu0
      %v727 = vadd.f32 0.0, %v726
      %v728 = vpop.f32.mrf.mxu0
      %v729 = vpop.f32.mrf.mxu0
      %v730 = vadd.f32 0.0, %v729
      %v731 = vpop.f32.mrf.mxu0
      %732 = vdwg.mxu0
      %v733 = vadd.f32 %v639, %v703
      %v734 = vadd.f32 %v640, %v706
      %v735 = vadd.f32 %v641, %v711
      %v736 = vadd.f32 %v642, %v714
      %v737 = vadd.f32 %v643, %v719
      %v738 = vadd.f32 %v644, %v722
      %v739 = vadd.f32 %v645, %v727
      %v740 = vadd.f32 %v646, %v730
      %v741 = vpack.c.bf16 %v324, %v323
      %v742 = vpack.c.bf16 %v326, %v325
      %v743 = vpack.c.bf16 %v328, %v327
      %v744 = vpack.c.bf16 %v330, %v329
      %s745 = scalar_lea.vmem %s1, 8
      %v746 = vld [vmem:[%s745] sm:$0x3]
      %v748 = vsel %vm342, %v741, 0
      %v751 = vsel %vm342, %v742, 0
      %v754 = vsel %vm342, %v743, 0
      %v757 = vsel %vm342, %v744, 0
      %v760 = vsel %vm355, %v746, 0
      %762 = vmatprep.subr.bf16.mxu0 0
      %763 = vmatpush1.bf16.msra.mxu0 0
      %764 = vmatprep.subr.bf16.mxu0 0
      %765 = vmatpush1.bf16.msra.mxu0 0
      %766 = vmatprep.subr.bf16.mxu0 0
      %767 = vmatpush1.bf16.msra.mxu0 0
      %768 = vmatprep.subr.bf16.mxu0 0
      %769 = vmatpush1.bf16.msra.mxu0 0
      %770 = vmatprep.subr.bf16.mxu0 0
      %771 = vmatpush1.bf16.msra.mxu0 0
      %772 = vmatprep.subr.bf16.mxu0 0
      %773 = vmatpush1.bf16.msra.mxu0 0
      %774 = vmatprep.subr.bf16.mxu0 0
      %775 = vmatpush1.bf16.msra.mxu0 0
      %776 = vmatprep.subr.bf16.mxu0 0
      %777 = vmatpush1.bf16.msra.mxu0 %v760
      %778 = vmatprep.subr.bf16.mxu0 0
      %779 = vmatpush2.bf16.msra.mxu0 0
      %780 = vmatprep.subr.bf16.mxu0 0
      %781 = vmatpush2.bf16.msra.mxu0 0
      %782 = vmatprep.subr.bf16.mxu0 0
      %783 = vmatpush2.bf16.msra.mxu0 0
      %784 = vmatprep.subr.bf16.mxu0 0
      %785 = vmatpush2.bf16.msra.mxu0 0
      %786 = vmatprep.subr.bf16.mxu0 0
      %787 = vmatpush2.bf16.msra.mxu0 0
      %788 = vmatprep.subr.bf16.mxu0 0
      %789 = vmatpush2.bf16.msra.mxu0 0
      %790 = vmatprep.subr.bf16.mxu0 0
      %791 = vmatpush2.bf16.msra.mxu0 0
      %792 = vmatprep.subr.bf16.mxu0 0
      %793 = vmatpush2.bf16.msra.mxu0 0
      %794 = vmatprep.mubr.bf16.mxu0 0
      %795 = vmatmul.mubr.bf16.gmra.mxu0 %v748
      %v796 = vpop.f32.mrf.mxu0
      %v797 = vadd.f32 0.0, %v796
      %v798 = vpop.f32.mrf.mxu0
      %v799 = vpop.f32.mrf.mxu0
      %v800 = vadd.f32 0.0, %v799
      %v801 = vpop.f32.mrf.mxu0
      %802 = vmatprep.mubr.bf16.mxu0 0
      %803 = vmatmul.mubr.bf16.gmra.mxu0 %v751
      %v804 = vpop.f32.mrf.mxu0
      %v805 = vadd.f32 0.0, %v804
      %v806 = vpop.f32.mrf.mxu0
      %v807 = vpop.f32.mrf.mxu0
      %v808 = vadd.f32 0.0, %v807
      %v809 = vpop.f32.mrf.mxu0
      %810 = vmatprep.mubr.bf16.mxu0 0
      %811 = vmatmul.mubr.bf16.gmra.mxu0 %v754
      %v812 = vpop.f32.mrf.mxu0
      %v813 = vadd.f32 0.0, %v812
      %v814 = vpop.f32.mrf.mxu0
      %v815 = vpop.f32.mrf.mxu0
      %v816 = vadd.f32 0.0, %v815
      %v817 = vpop.f32.mrf.mxu0
      %818 = vmatprep.mubr.bf16.mxu0 0
      %819 = vmatmul.mubr.bf16.gmra.mxu0 %v757
      %v820 = vpop.f32.mrf.mxu0
      %v821 = vadd.f32 0.0, %v820
      %v822 = vpop.f32.mrf.mxu0
      %v823 = vpop.f32.mrf.mxu0
      %v824 = vadd.f32 0.0, %v823
      %v825 = vpop.f32.mrf.mxu0
      %826 = vdwg.mxu0
      %v827 = vadd.f32 %v733, %v797
      %v828 = vadd.f32 %v734, %v800
      %v829 = vadd.f32 %v735, %v805
      %v830 = vadd.f32 %v736, %v808
      %v831 = vadd.f32 %v737, %v813
      %v832 = vadd.f32 %v738, %v816
      %v833 = vadd.f32 %v739, %v821
      %v834 = vadd.f32 %v740, %v824
      %v851 = vrot.slane %v298, 1
      %v852 = vrot.slane %v299, 1
      %v853 = vsel %vm520, %v851, %v852
      %v854 = vrot.slane %v300, 1
      %v855 = vrot.slane %v301, 1
      %v856 = vsel %vm520, %v854, %v855
      %v857 = vrot.slane %v302, 1
      %v858 = vrot.slane %v303, 1
      %v859 = vsel %vm520, %v857, %v858
      %v860 = vrot.slane %v304, 1
      %v861 = vrot.slane %v305, 1
      %v862 = vsel %vm520, %v860, %v861
      %v863 = vrot.slane %v306, 1
      %v864 = vrot.slane %v307, 1
      %v865 = vsel %vm520, %v863, %v864
      %v866 = vrot.slane %v308, 1
      %v867 = vrot.slane %v309, 1
      %v868 = vsel %vm520, %v866, %v867
      %v869 = vrot.slane %v310, 1
      %v870 = vrot.slane %v311, 1
      %v871 = vsel %vm520, %v869, %v870
      %v872 = vrot.slane %v312, 1
      %v873 = vrot.slane %v313, 1
      %v874 = vsel %vm520, %v872, %v873
      %v883 = vpack.c.bf16 %v856, %v853
      %v884 = vpack.c.bf16 %v862, %v859
      %v885 = vpack.c.bf16 %v868, %v865
      %v886 = vpack.c.bf16 %v874, %v871
      %s887 = scalar_lea.vmem %s1, 10
      %v888 = vld [vmem:[%s887] sm:$0x3]
      %v890 = vsel %vm342, %v883, 0
      %v893 = vsel %vm342, %v884, 0
      %v896 = vsel %vm342, %v885, 0
      %v899 = vsel %vm342, %v886, 0
      %v902 = vsel %vm355, %v888, 0
      %904 = vmatprep.subr.bf16.mxu0 0
      %905 = vmatpush1.bf16.msra.mxu0 0
      %906 = vmatprep.subr.bf16.mxu0 0
      %907 = vmatpush1.bf16.msra.mxu0 0
      %908 = vmatprep.subr.bf16.mxu0 0
      %909 = vmatpush1.bf16.msra.mxu0 0
      %910 = vmatprep.subr.bf16.mxu0 0
      %911 = vmatpush1.bf16.msra.mxu0 0
      %912 = vmatprep.subr.bf16.mxu0 0
      %913 = vmatpush1.bf16.msra.mxu0 0
      %914 = vmatprep.subr.bf16.mxu0 0
      %915 = vmatpush1.bf16.msra.mxu0 0
      %916 = vmatprep.subr.bf16.mxu0 0
      %917 = vmatpush1.bf16.msra.mxu0 0
      %918 = vmatprep.subr.bf16.mxu0 0
      %919 = vmatpush1.bf16.msra.mxu0 %v902
      %920 = vmatprep.subr.bf16.mxu0 0
      %921 = vmatpush2.bf16.msra.mxu0 0
      %922 = vmatprep.subr.bf16.mxu0 0
      %923 = vmatpush2.bf16.msra.mxu0 0
      %924 = vmatprep.subr.bf16.mxu0 0
      %925 = vmatpush2.bf16.msra.mxu0 0
      %926 = vmatprep.subr.bf16.mxu0 0
      %927 = vmatpush2.bf16.msra.mxu0 0
      %928 = vmatprep.subr.bf16.mxu0 0
      %929 = vmatpush2.bf16.msra.mxu0 0
      %930 = vmatprep.subr.bf16.mxu0 0
      %931 = vmatpush2.bf16.msra.mxu0 0
      %932 = vmatprep.subr.bf16.mxu0 0
      %933 = vmatpush2.bf16.msra.mxu0 0
      %934 = vmatprep.subr.bf16.mxu0 0
      %935 = vmatpush2.bf16.msra.mxu0 0
      %936 = vmatprep.mubr.bf16.mxu0 0
      %937 = vmatmul.mubr.bf16.gmra.mxu0 %v890
      %v938 = vpop.f32.mrf.mxu0
      %v939 = vadd.f32 0.0, %v938
      %v940 = vpop.f32.mrf.mxu0
      %v941 = vpop.f32.mrf.mxu0
      %v942 = vadd.f32 0.0, %v941
      %v943 = vpop.f32.mrf.mxu0
      %944 = vmatprep.mubr.bf16.mxu0 0
      %945 = vmatmul.mubr.bf16.gmra.mxu0 %v893
      %v946 = vpop.f32.mrf.mxu0
      %v947 = vadd.f32 0.0, %v946
      %v948 = vpop.f32.mrf.mxu0
      %v949 = vpop.f32.mrf.mxu0
      %v950 = vadd.f32 0.0, %v949
      %v951 = vpop.f32.mrf.mxu0
      %952 = vmatprep.mubr.bf16.mxu0 0
      %953 = vmatmul.mubr.bf16.gmra.mxu0 %v896
      %v954 = vpop.f32.mrf.mxu0
      %v955 = vadd.f32 0.0, %v954
      %v956 = vpop.f32.mrf.mxu0
      %v957 = vpop.f32.mrf.mxu0
      %v958 = vadd.f32 0.0, %v957
      %v959 = vpop.f32.mrf.mxu0
      %960 = vmatprep.mubr.bf16.mxu0 0
      %961 = vmatmul.mubr.bf16.gmra.mxu0 %v899
      %v962 = vpop.f32.mrf.mxu0
      %v963 = vadd.f32 0.0, %v962
      %v964 = vpop.f32.mrf.mxu0
      %v965 = vpop.f32.mrf.mxu0
      %v966 = vadd.f32 0.0, %v965
      %v967 = vpop.f32.mrf.mxu0
      %968 = vdwg.mxu0
      %v969 = vadd.f32 %v827, %v939
      %v970 = vadd.f32 %v828, %v942
      %v971 = vadd.f32 %v829, %v947
      %v972 = vadd.f32 %v830, %v950
      %v973 = vadd.f32 %v831, %v955
      %v974 = vadd.f32 %v832, %v958
      %v975 = vadd.f32 %v833, %v963
      %v976 = vadd.f32 %v834, %v966
      %v977 = vpack.c.bf16 %v248, %v246
      %v978 = vpack.c.bf16 %v252, %v250
      %v979 = vpack.c.bf16 %v256, %v254
      %v980 = vpack.c.bf16 %v260, %v258
      %s981 = scalar_lea.vmem %s1, 12
      %v982 = vld [vmem:[%s981] sm:$0x3]
      %v984 = vsel %vm342, %v977, 0
      %v987 = vsel %vm342, %v978, 0
      %v990 = vsel %vm342, %v979, 0
      %v993 = vsel %vm342, %v980, 0
      %v996 = vsel %vm355, %v982, 0
      %998 = vmatprep.subr.bf16.mxu0 0
      %999 = vmatpush1.bf16.msra.mxu0 0
      %1000 = vmatprep.subr.bf16.mxu0 0
      %1001 = vmatpush1.bf16.msra.mxu0 0
      %1002 = vmatprep.subr.bf16.mxu0 0
      %1003 = vmatpush1.bf16.msra.mxu0 0
      %1004 = vmatprep.subr.bf16.mxu0 0
      %1005 = vmatpush1.bf16.msra.mxu0 0
      %1006 = vmatprep.subr.bf16.mxu0 0
      %1007 = vmatpush1.bf16.msra.mxu0 0
      %1008 = vmatprep.subr.bf16.mxu0 0
      %1009 = vmatpush1.bf16.msra.mxu0 0
      %1010 = vmatprep.subr.bf16.mxu0 0
      %1011 = vmatpush1.bf16.msra.mxu0 0
      %1012 = vmatprep.subr.bf16.mxu0 0
      %1013 = vmatpush1.bf16.msra.mxu0 %v996
      %1014 = vmatprep.subr.bf16.mxu0 0
      %1015 = vmatpush2.bf16.msra.mxu0 0
      %1016 = vmatprep.subr.bf16.mxu0 0
      %1017 = vmatpush2.bf16.msra.mxu0 0
      %1018 = vmatprep.subr.bf16.mxu0 0
      %1019 = vmatpush2.bf16.msra.mxu0 0
      %1020 = vmatprep.subr.bf16.mxu0 0
      %1021 = vmatpush2.bf16.msra.mxu0 0
      %1022 = vmatprep.subr.bf16.mxu0 0
      %1023 = vmatpush2.bf16.msra.mxu0 0
      %1024 = vmatprep.subr.bf16.mxu0 0
      %1025 = vmatpush2.bf16.msra.mxu0 0
      %1026 = vmatprep.subr.bf16.mxu0 0
      %1027 = vmatpush2.bf16.msra.mxu0 0
      %1028 = vmatprep.subr.bf16.mxu0 0
      %1029 = vmatpush2.bf16.msra.mxu0 0
      %1030 = vmatprep.mubr.bf16.mxu0 0
      %1031 = vmatmul.mubr.bf16.gmra.mxu0 %v984
      %v1032 = vpop.f32.mrf.mxu0
      %v1033 = vadd.f32 0.0, %v1032
      %v1034 = vpop.f32.mrf.mxu0
      %v1035 = vpop.f32.mrf.mxu0
      %v1036 = vadd.f32 0.0, %v1035
      %v1037 = vpop.f32.mrf.mxu0
      %1038 = vmatprep.mubr.bf16.mxu0 0
      %1039 = vmatmul.mubr.bf16.gmra.mxu0 %v987
      %v1040 = vpop.f32.mrf.mxu0
      %v1041 = vadd.f32 0.0, %v1040
      %v1042 = vpop.f32.mrf.mxu0
      %v1043 = vpop.f32.mrf.mxu0
      %v1044 = vadd.f32 0.0, %v1043
      %v1045 = vpop.f32.mrf.mxu0
      %1046 = vmatprep.mubr.bf16.mxu0 0
      %1047 = vmatmul.mubr.bf16.gmra.mxu0 %v990
      %v1048 = vpop.f32.mrf.mxu0
      %v1049 = vadd.f32 0.0, %v1048
      %v1050 = vpop.f32.mrf.mxu0
      %v1051 = vpop.f32.mrf.mxu0
      %v1052 = vadd.f32 0.0, %v1051
      %v1053 = vpop.f32.mrf.mxu0
      %1054 = vmatprep.mubr.bf16.mxu0 0
      %1055 = vmatmul.mubr.bf16.gmra.mxu0 %v993
      %v1056 = vpop.f32.mrf.mxu0
      %v1057 = vadd.f32 0.0, %v1056
      %v1058 = vpop.f32.mrf.mxu0
      %v1059 = vpop.f32.mrf.mxu0
      %v1060 = vadd.f32 0.0, %v1059
      %v1061 = vpop.f32.mrf.mxu0
      %1062 = vdwg.mxu0
      %v1063 = vadd.f32 %v969, %v1033
      %v1064 = vadd.f32 %v970, %v1036
      %v1065 = vadd.f32 %v971, %v1041
      %v1066 = vadd.f32 %v972, %v1044
      %v1067 = vadd.f32 %v973, %v1049
      %v1068 = vadd.f32 %v974, %v1052
      %v1069 = vadd.f32 %v975, %v1057
      %v1070 = vadd.f32 %v976, %v1060
      %v1071 = vpack.c.bf16 %v274, %v273
      %v1072 = vpack.c.bf16 %v276, %v275
      %v1073 = vpack.c.bf16 %v278, %v277
      %v1074 = vpack.c.bf16 %v280, %v279
      %s1075 = scalar_lea.vmem %s1, 14
      %v1076 = vld [vmem:[%s1075] sm:$0x3]
      %v1078 = vsel %vm342, %v1071, 0
      %v1081 = vsel %vm342, %v1072, 0
      %v1084 = vsel %vm342, %v1073, 0
      %v1087 = vsel %vm342, %v1074, 0
      %v1090 = vsel %vm355, %v1076, 0
      %1092 = vmatprep.subr.bf16.mxu0 0
      %1093 = vmatpush1.bf16.msra.mxu0 0
      %1094 = vmatprep.subr.bf16.mxu0 0
      %1095 = vmatpush1.bf16.msra.mxu0 0
      %1096 = vmatprep.subr.bf16.mxu0 0
      %1097 = vmatpush1.bf16.msra.mxu0 0
      %1098 = vmatprep.subr.bf16.mxu0 0
      %1099 = vmatpush1.bf16.msra.mxu0 0
      %1100 = vmatprep.subr.bf16.mxu0 0
      %1101 = vmatpush1.bf16.msra.mxu0 0
      %1102 = vmatprep.subr.bf16.mxu0 0
      %1103 = vmatpush1.bf16.msra.mxu0 0
      %1104 = vmatprep.subr.bf16.mxu0 0
      %1105 = vmatpush1.bf16.msra.mxu0 0
      %1106 = vmatprep.subr.bf16.mxu0 0
      %1107 = vmatpush1.bf16.msra.mxu0 %v1090
      %1108 = vmatprep.subr.bf16.mxu0 0
      %1109 = vmatpush2.bf16.msra.mxu0 0
      %1110 = vmatprep.subr.bf16.mxu0 0
      %1111 = vmatpush2.bf16.msra.mxu0 0
      %1112 = vmatprep.subr.bf16.mxu0 0
      %1113 = vmatpush2.bf16.msra.mxu0 0
      %1114 = vmatprep.subr.bf16.mxu0 0
      %1115 = vmatpush2.bf16.msra.mxu0 0
      %1116 = vmatprep.subr.bf16.mxu0 0
      %1117 = vmatpush2.bf16.msra.mxu0 0
      %1118 = vmatprep.subr.bf16.mxu0 0
      %1119 = vmatpush2.bf16.msra.mxu0 0
      %1120 = vmatprep.subr.bf16.mxu0 0
      %1121 = vmatpush2.bf16.msra.mxu0 0
      %1122 = vmatprep.subr.bf16.mxu0 0
      %1123 = vmatpush2.bf16.msra.mxu0 0
      %1124 = vmatprep.mubr.bf16.mxu0 0
      %1125 = vmatmul.mubr.bf16.gmra.mxu0 %v1078
      %v1126 = vpop.f32.mrf.mxu0
      %v1127 = vadd.f32 0.0, %v1126
      %v1128 = vpop.f32.mrf.mxu0
      %v1129 = vpop.f32.mrf.mxu0
      %v1130 = vadd.f32 0.0, %v1129
      %v1131 = vpop.f32.mrf.mxu0
      %1132 = vmatprep.mubr.bf16.mxu0 0
      %1133 = vmatmul.mubr.bf16.gmra.mxu0 %v1081
      %v1134 = vpop.f32.mrf.mxu0
      %v1135 = vadd.f32 0.0, %v1134
      %v1136 = vpop.f32.mrf.mxu0
      %v1137 = vpop.f32.mrf.mxu0
      %v1138 = vadd.f32 0.0, %v1137
      %v1139 = vpop.f32.mrf.mxu0
      %1140 = vmatprep.mubr.bf16.mxu0 0
      %1141 = vmatmul.mubr.bf16.gmra.mxu0 %v1084
      %v1142 = vpop.f32.mrf.mxu0
      %v1143 = vadd.f32 0.0, %v1142
      %v1144 = vpop.f32.mrf.mxu0
      %v1145 = vpop.f32.mrf.mxu0
      %v1146 = vadd.f32 0.0, %v1145
      %v1147 = vpop.f32.mrf.mxu0
      %1148 = vmatprep.mubr.bf16.mxu0 0
      %1149 = vmatmul.mubr.bf16.gmra.mxu0 %v1087
      %v1150 = vpop.f32.mrf.mxu0
      %v1151 = vadd.f32 0.0, %v1150
      %v1152 = vpop.f32.mrf.mxu0
      %v1153 = vpop.f32.mrf.mxu0
      %v1154 = vadd.f32 0.0, %v1153
      %v1155 = vpop.f32.mrf.mxu0
      %1156 = vdwg.mxu0
      %v1157 = vadd.f32 %v1063, %v1127
      %v1158 = vadd.f32 %v1064, %v1130
      %v1159 = vadd.f32 %v1065, %v1135
      %v1160 = vadd.f32 %v1066, %v1138
      %v1161 = vadd.f32 %v1067, %v1143
      %v1162 = vadd.f32 %v1068, %v1146
      %v1163 = vadd.f32 %v1069, %v1151
      %v1164 = vadd.f32 %v1070, %v1154
      %v1167 = vrot.slane %v260, 1
      %v1168 = vrot.slane %v261, 1
      %v1169 = vsel %vm520, %v1167, %v1168
      %v1171 = vpack.c.bf16 %v529, %v526
      %v1172 = vpack.c.bf16 %v535, %v532
      %v1173 = vpack.c.bf16 %v541, %v538
      %v1174 = vpack.c.bf16 %v1169, %v544
      %s1175 = scalar_lea.vmem %s1, 16
      %v1176 = vld [vmem:[%s1175] sm:$0x3]
      %v1178 = vsel %vm342, %v1171, 0
      %v1181 = vsel %vm342, %v1172, 0
      %v1184 = vsel %vm342, %v1173, 0
      %v1187 = vsel %vm342, %v1174, 0
      %v1190 = vsel %vm355, %v1176, 0
      %1192 = vmatprep.subr.bf16.mxu0 0
      %1193 = vmatpush1.bf16.msra.mxu0 0
      %1194 = vmatprep.subr.bf16.mxu0 0
      %1195 = vmatpush1.bf16.msra.mxu0 0
      %1196 = vmatprep.subr.bf16.mxu0 0
      %1197 = vmatpush1.bf16.msra.mxu0 0
      %1198 = vmatprep.subr.bf16.mxu0 0
      %1199 = vmatpush1.bf16.msra.mxu0 0
      %1200 = vmatprep.subr.bf16.mxu0 0
      %1201 = vmatpush1.bf16.msra.mxu0 0
      %1202 = vmatprep.subr.bf16.mxu0 0
      %1203 = vmatpush1.bf16.msra.mxu0 0
      %1204 = vmatprep.subr.bf16.mxu0 0
      %1205 = vmatpush1.bf16.msra.mxu0 0
      %1206 = vmatprep.subr.bf16.mxu0 0
      %1207 = vmatpush1.bf16.msra.mxu0 %v1190
      %1208 = vmatprep.subr.bf16.mxu0 0
      %1209 = vmatpush2.bf16.msra.mxu0 0
      %1210 = vmatprep.subr.bf16.mxu0 0
      %1211 = vmatpush2.bf16.msra.mxu0 0
      %1212 = vmatprep.subr.bf16.mxu0 0
      %1213 = vmatpush2.bf16.msra.mxu0 0
      %1214 = vmatprep.subr.bf16.mxu0 0
      %1215 = vmatpush2.bf16.msra.mxu0 0
      %1216 = vmatprep.subr.bf16.mxu0 0
      %1217 = vmatpush2.bf16.msra.mxu0 0
      %1218 = vmatprep.subr.bf16.mxu0 0
      %1219 = vmatpush2.bf16.msra.mxu0 0
      %1220 = vmatprep.subr.bf16.mxu0 0
      %1221 = vmatpush2.bf16.msra.mxu0 0
      %1222 = vmatprep.subr.bf16.mxu0 0
      %1223 = vmatpush2.bf16.msra.mxu0 0
      %1224 = vmatprep.mubr.bf16.mxu0 0
      %1225 = vmatmul.mubr.bf16.gmra.mxu0 %v1178
      %v1226 = vpop.f32.mrf.mxu0
      %v1227 = vadd.f32 0.0, %v1226
      %v1228 = vpop.f32.mrf.mxu0
      %v1229 = vpop.f32.mrf.mxu0
      %v1230 = vadd.f32 0.0, %v1229
      %v1231 = vpop.f32.mrf.mxu0
      %1232 = vmatprep.mubr.bf16.mxu0 0
      %1233 = vmatmul.mubr.bf16.gmra.mxu0 %v1181
      %v1234 = vpop.f32.mrf.mxu0
      %v1235 = vadd.f32 0.0, %v1234
      %v1236 = vpop.f32.mrf.mxu0
      %v1237 = vpop.f32.mrf.mxu0
      %v1238 = vadd.f32 0.0, %v1237
      %v1239 = vpop.f32.mrf.mxu0
      %1240 = vmatprep.mubr.bf16.mxu0 0
      %1241 = vmatmul.mubr.bf16.gmra.mxu0 %v1184
      %v1242 = vpop.f32.mrf.mxu0
      %v1243 = vadd.f32 0.0, %v1242
      %v1244 = vpop.f32.mrf.mxu0
      %v1245 = vpop.f32.mrf.mxu0
      %v1246 = vadd.f32 0.0, %v1245
      %v1247 = vpop.f32.mrf.mxu0
      %1248 = vmatprep.mubr.bf16.mxu0 0
      %1249 = vmatmul.mubr.bf16.gmra.mxu0 %v1187
      %v1250 = vpop.f32.mrf.mxu0
      %v1251 = vadd.f32 0.0, %v1250
      %v1252 = vpop.f32.mrf.mxu0
      %v1253 = vpop.f32.mrf.mxu0
      %v1254 = vadd.f32 0.0, %v1253
      %v1255 = vpop.f32.mrf.mxu0
      %1256 = vdwg.mxu0
      %v1257 = vadd.f32 %v1157, %v1227
      %v1258 = vadd.f32 %v1158, %v1230
      %v1259 = vadd.f32 %v1159, %v1235
      %v1260 = vadd.f32 %v1160, %v1238
      %v1261 = vadd.f32 %v1161, %v1243
      %v1262 = vadd.f32 %v1162, %v1246
      %v1263 = vadd.f32 %v1163, %v1251
      %v1264 = vadd.f32 %v1164, %v1254
      %v1265 = vpack.c.bf16 %v1258, %v1257
      %v1266 = vpack.c.bf16 %v1260, %v1259
      %v1267 = vpack.c.bf16 %v1262, %v1261
      %v1268 = vpack.c.bf16 %v1264, %v1263
      %v1273 = vunpack.c.l.b16 %v1265
      %v1274 = vunpack.c.h.b16 %v1265
      %v1275 = vunpack.c.l.b16 %v1266
      %v1276 = vunpack.c.h.b16 %v1266
      %v1277 = vunpack.c.l.b16 %v1267
      %v1278 = vunpack.c.h.b16 %v1267
      %v1279 = vunpack.c.l.b16 %v1268
      %v1280 = vunpack.c.h.b16 %v1268
      %v1281 = vpack.c.b16 %v1273, %v1273
      %v1282 = vpack.c.b16 %v1274, %v1274
      %v1283 = vpack.c.b16 %v1275, %v1275
      %v1284 = vpack.c.b16 %v1276, %v1276
      %v1285 = vpack.c.b16 %v1277, %v1277
      %v1286 = vpack.c.b16 %v1278, %v1278
      %v1287 = vpack.c.b16 %v1279, %v1279
      %v1288 = vpack.c.b16 %v1280, %v1280
      %1297 = vst [vmem:[%s215] sm:$0xf] %v1281
      %1298 = vst [vmem:[%s215 + $0x4] sm:$0xf] %v1282
      %1299 = vst [vmem:[%s215 + $0x8] sm:$0xf] %v1283
      %1300 = vst [vmem:[%s215 + $0xc] sm:$0xf] %v1284
      %1301 = vst [vmem:[%s215 + $0x10] sm:$0xf] %v1285
      %1302 = vst [vmem:[%s215 + $0x14] sm:$0xf] %v1286
      %1303 = vst [vmem:[%s215 + $0x18] sm:$0xf] %v1287
      %1304 = vst [vmem:[%s215 + $0x1c] sm:$0xf] %v1288
      %v1305 = vadd.f32 %v1257, %v1258
      %v1306 = vadd.f32 %v1305, %v1259
      %v1307 = vadd.f32 %v1306, %v1260
      %v1308 = vadd.f32 %v1307, %v1261
      %v1309 = vadd.f32 %v1308, %v1262
      %v1310 = vadd.f32 %v1309, %v1263
      %v1311 = vadd.f32 %v1310, %v1264
      %v1312 = vrot.slane %v1311, 4
      %v1313 = vadd.f32 %v1311, %v1312
      %v1314 = vrot.slane %v1313, 2
      %v1315 = vadd.f32 %v1313, %v1314
      %v1316 = vrot.slane %v1315, 1
      %v1317 = vadd.f32 %v1315, %v1316
      %1318 = vst [vmem:[%s220] sm:$0xff] %v1317
      %v1319 = vmul.f32 %v1257, %v1257
      %v1320 = vmul.f32 %v1258, %v1258
      %v1321 = vmul.f32 %v1259, %v1259
      %v1322 = vmul.f32 %v1260, %v1260
      %v1323 = vmul.f32 %v1261, %v1261
      %v1324 = vmul.f32 %v1262, %v1262
      %v1325 = vmul.f32 %v1263, %v1263
      %v1326 = vmul.f32 %v1264, %v1264
      %v1327 = vadd.f32 %v1319, %v1320
      %v1328 = vadd.f32 %v1327, %v1321
      %v1329 = vadd.f32 %v1328, %v1322
      %v1330 = vadd.f32 %v1329, %v1323
      %v1331 = vadd.f32 %v1330, %v1324
      %v1332 = vadd.f32 %v1331, %v1325
      %v1333 = vadd.f32 %v1332, %v1326
      %v1334 = vrot.slane %v1333, 4
      %v1335 = vadd.f32 %v1333, %v1334
      %v1336 = vrot.slane %v1335, 2
      %v1337 = vadd.f32 %v1335, %v1336
      %v1338 = vrot.slane %v1337, 1
      %v1339 = vadd.f32 %v1337, %v1338
      %1340 = vst [vmem:[%s224] sm:$0xff] %v1339
      %s1341 = smul.u32 8, %s16
      %p1342 = scmp.lt.s32.totalorder %s1341, 15
      %s1343 = scalar_select %p1342, %s1341, 15
      %s1344 = smul.addr %s1343, 4
      %s1345 = scalar_lea.vmem %s2, %s1344
      %p1346 = scmp.lt.s32.totalorder %s16, 1
      %s1347 = scalar_select %p1346, %s16, 1
      %s1348 = smul.addr %s1347, 8
      %s1349 = scalar_lea.vmem %s3, %s1348
      %p1350 = scmp.lt.s32.totalorder %s16, 1
      %s1351 = scalar_select %p1350, %s16, 1
      %s1352 = smul.addr %s1351, 8
      %s1353 = scalar_lea.vmem %s4, %s1352
      // Predicated region
      $region29: #{residual_block_forward.4} parent=27 // pred_check
        %p1354 = pneg %p81
      $region30: #{residual_block_forward.4} parent=27 // pred_check_branch
        %1356 = sbr.rel (%p1354) target = $region32
      $region31: #{residual_block_forward.4} parent=27 // pred_region
        %s1357 = smul.u32 8, %s16
      $region32: #{residual_block_forward.4} parent=27 // pred_fallthru
        _
      // Predicated region
      $region33: #{residual_block_forward.4} parent=27 // pred_check
        %p1358 = pneg %p107
      $region34: #{residual_block_forward.4} parent=27 // pred_check_branch
        %1360 = sbr.rel (%p1358) target = $region36
      $region35: #{residual_block_forward.4} parent=27 // pred_region
        _
      $region36: #{residual_block_forward.4} parent=27 // pred_fallthru
        _
      // Predicated region
      $region37: #{residual_block_forward.4} parent=27 // pred_check
        %p1361 = pneg %p133
      $region38: #{residual_block_forward.4} parent=27 // pred_check_branch
        %1363 = sbr.rel (%p1361) target = $region40
      $region39: #{residual_block_forward.4} parent=27 // pred_region
        _
      $region40: #{residual_block_forward.4} parent=27 // pred_fallthru
        _
    $region28: #{residual_block_forward.4} parent=5 // pred_fallthru
      _
    %p1364 = scmp.le.s32.totalorder 2, %s11
    // Predicated region
    $region41: #{residual_block_forward.4} parent=5 // pred_check
      %p1365 = pneg %p1364
    $region42: #{residual_block_forward.4} parent=5 // pred_check_branch
      %1367 = sbr.rel (%p1365) target = $region44
    $region43: #{residual_block_forward.4} parent=5 // pred_region
      %s1368 = ssub.s32 %s11, 2
      // Predicated region
      $region45: #{residual_block_forward.4} parent=43 // pred_check
        %p1369 = pneg %p87
      $region46: #{residual_block_forward.4} parent=43 // pred_check_branch
        %1371 = sbr.rel (%p1369) target = $region48
      $region47: #{residual_block_forward.4} parent=43 // pred_region
        %s1372 = smul.u32 8, %s17
        %p1373 = scmp.lt.s32.totalorder %s1372, 15
        %s1374 = scalar_select %p1373, %s1372, 15
        %s1375 = smul.addr %s1374, 4
        %s1376 = scalar_lea.vmem %s2, %s1375
      $region48: #{residual_block_forward.4} parent=43 // pred_fallthru
        _
      // Predicated region
      $region49: #{residual_block_forward.4} parent=43 // pred_check
        %p1377 = pneg %p113
      $region50: #{residual_block_forward.4} parent=43 // pred_check_branch
        %1379 = sbr.rel (%p1377) target = $region52
      $region51: #{residual_block_forward.4} parent=43 // pred_region
        %p1380 = scmp.lt.s32.totalorder %s17, 1
        %s1381 = scalar_select %p1380, %s17, 1
        %s1382 = smul.addr %s1381, 8
        %s1383 = scalar_lea.vmem %s3, %s1382
      $region52: #{residual_block_forward.4} parent=43 // pred_fallthru
        _
      // Predicated region
      $region53: #{residual_block_forward.4} parent=43 // pred_check
        %p1384 = pneg %p139
      $region54: #{residual_block_forward.4} parent=43 // pred_check_branch
        %1386 = sbr.rel (%p1384) target = $region56
      $region55: #{residual_block_forward.4} parent=43 // pred_region
        %p1387 = scmp.lt.s32.totalorder %s17, 1
        %s1388 = scalar_select %p1387, %s17, 1
        %s1389 = smul.addr %s1388, 8
        %s1390 = scalar_lea.vmem %s4, %s1389
      $region56: #{residual_block_forward.4} parent=43 // pred_fallthru
        _
    $region44: #{residual_block_forward.4} parent=5 // pred_fallthru
      _
  $region6: #{residual_block_forward.4} parent=0 // loop_footer
    %s15 = sadd.s32 1, %s11
  $region7: #{residual_block_forward.4} parent=0 // loop_footer_branch
    %10 = sbr.rel target = $region3
  $region8: #{residual_block_forward.4} parent=0 // loop_exit
    _

// kernel: residual_block_forward.7
$region0: #{residual_block_forward.7}
  #allocation0 [shape = 'u32[]', space=smem, size = 0x4, offset = 0x4, fixed_abs, tag = 'smem constant byte address 0x4 - core index']
  #allocation1 [shape = 'u32[144,128]{1,0:T(1,128)}', space=vmem, size = 0x12000, scoped, tag = 'internal scratch']
  %s0 = inlined_call_operand.vmem [shape: bf16[128,128], index: 0, kind: input, shape index: {}]
  %s1 = inlined_call_operand.vmem [shape: f32[1,128], index: 1, kind: input, shape index: {}]
  %s2 = inlined_call_operand.vmem [shape: f32[1,128], index: 2, kind: input, shape index: {}]
  %s3 = inlined_call_operand.vmem [shape: bf16[128,128], index: 3, kind: input, shape index: {}]
  %s4 = inlined_call_operand.vmem [shape: f32[1,128], index: 4, kind: input, shape index: {}]
  %s5 = inlined_call_operand.vmem [shape: f32[1,128], index: 5, kind: input, shape index: {}]
  %s6 = inlined_call_operand.vmem [shape: f32[128,128], index: 6, kind: output, shape index: {}]
  %s7 = sld [smem:[#allocation0]]
  $region34: #{residual_block_forward.7} parent=0
    _
  %s9 = ssub.s32 1, %s7
  %s10 = scalar_select 0, %s9, %s7
  // Predicated region
  $region2: #{residual_block_forward.7} parent=0 // pred_check
    _
  $region3: #{residual_block_forward.7} parent=0 // pred_check_branch
    %12 = sbr.rel (0) target = $region5
  $region4: #{residual_block_forward.7} parent=0 // pred_region
    _
  $region5: #{residual_block_forward.7} parent=0 // pred_fallthru
    _
  // Predicated region
  $region6: #{residual_block_forward.7} parent=0 // pred_check
    _
  $region7: #{residual_block_forward.7} parent=0 // pred_check_branch
    %14 = sbr.rel (0) target = $region9
  $region8: #{residual_block_forward.7} parent=0 // pred_region
    _
  $region9: #{residual_block_forward.7} parent=0 // pred_fallthru
    _
  // Predicated region
  $region10: #{residual_block_forward.7} parent=0 // pred_check
    _
  $region11: #{residual_block_forward.7} parent=0 // pred_check_branch
    %16 = sbr.rel (0) target = $region13
  $region12: #{residual_block_forward.7} parent=0 // pred_region
    _
  $region13: #{residual_block_forward.7} parent=0 // pred_fallthru
    _
  // Predicated region
  $region14: #{residual_block_forward.7} parent=0 // pred_check
    _
  $region15: #{residual_block_forward.7} parent=0 // pred_check_branch
    %18 = sbr.rel (0) target = $region17
  $region16: #{residual_block_forward.7} parent=0 // pred_region
    _
  $region17: #{residual_block_forward.7} parent=0 // pred_fallthru
    _
  // Predicated region
  $region18: #{residual_block_forward.7} parent=0 // pred_check
    _
  $region19: #{residual_block_forward.7} parent=0 // pred_check_branch
    %20 = sbr.rel (0) target = $region21
  $region20: #{residual_block_forward.7} parent=0 // pred_region
    _
  $region21: #{residual_block_forward.7} parent=0 // pred_fallthru
    _
  // Predicated region
  $region22: #{residual_block_forward.7} parent=0 // pred_check
    _
  $region23: #{residual_block_forward.7} parent=0 // pred_check_branch
    %22 = sbr.rel (0) target = $region25
  $region24: #{residual_block_forward.7} parent=0 // pred_region
    _
  $region25: #{residual_block_forward.7} parent=0 // pred_fallthru
    _
  %v23 = vld [vmem:[%s0] sm:$0xf]
  %v24 = vld [vmem:[%s0 + $0x4] sm:$0xf]
  %v25 = vld [vmem:[%s0 + $0x8] sm:$0xf]
  %v26 = vld [vmem:[%s0 + $0xc] sm:$0xf]
  %v27 = vld [vmem:[%s0 + $0x10] sm:$0xf]
  %v28 = vld [vmem:[%s0 + $0x14] sm:$0xf]
  %v29 = vld [vmem:[%s0 + $0x18] sm:$0xf]
  %v30 = vld [vmem:[%s0 + $0x1c] sm:$0xf]
  %v31 = vld [vmem:[%s0 + $0x20] sm:$0xf]
  %v32 = vld [vmem:[%s0 + $0x24] sm:$0xf]
  %v33 = vld [vmem:[%s0 + $0x28] sm:$0xf]
  %v34 = vld [vmem:[%s0 + $0x2c] sm:$0xf]
  %v35 = vld [vmem:[%s0 + $0x30] sm:$0xf]
  %v36 = vld [vmem:[%s0 + $0x34] sm:$0xf]
  %v37 = vld [vmem:[%s0 + $0x38] sm:$0xf]
  %v38 = vld [vmem:[%s0 + $0x3c] sm:$0xf]
  %v39 = vunpack.c.l.bf16 %v23
  %v40 = vunpack.c.l.bf16 %v24
  %v41 = vunpack.c.l.bf16 %v25
  %v42 = vunpack.c.l.bf16 %v26
  %v43 = vunpack.c.l.bf16 %v27
  %v44 = vunpack.c.l.bf16 %v28
  %v45 = vunpack.c.l.bf16 %v29
  %v46 = vunpack.c.l.bf16 %v30
  %v47 = vunpack.c.l.bf16 %v31
  %v48 = vunpack.c.l.bf16 %v32
  %v49 = vunpack.c.l.bf16 %v33
  %v50 = vunpack.c.l.bf16 %v34
  %v51 = vunpack.c.l.bf16 %v35
  %v52 = vunpack.c.l.bf16 %v36
  %v53 = vunpack.c.l.bf16 %v37
  %v54 = vunpack.c.l.bf16 %v38
  %v55 = vld [vmem:[%s1] sm:$0x1]
  %v57 = vlaneseq
  %v58 = vshrl.u32 %v57, 7
  %v59 = vsub.s32 0, %v58
  %v60 = vrot.slane %v55, %v59
  %v62 = vmul.f32 %v39, %v60
  %v63 = vmul.f32 %v40, %v60
  %v64 = vmul.f32 %v41, %v60
  %v65 = vmul.f32 %v42, %v60
  %v66 = vmul.f32 %v43, %v60
  %v67 = vmul.f32 %v44, %v60
  %v68 = vmul.f32 %v45, %v60
  %v69 = vmul.f32 %v46, %v60
  %v70 = vmul.f32 %v47, %v60
  %v71 = vmul.f32 %v48, %v60
  %v72 = vmul.f32 %v49, %v60
  %v73 = vmul.f32 %v50, %v60
  %v74 = vmul.f32 %v51, %v60
  %v75 = vmul.f32 %v52, %v60
  %v76 = vmul.f32 %v53, %v60
  %v77 = vmul.f32 %v54, %v60
  %v78 = vld [vmem:[%s2] sm:$0x1]
  %v80 = vlaneseq
  %v81 = vshrl.u32 %v80, 7
  %v82 = vsub.s32 0, %v81
  %v83 = vrot.slane %v78, %v82
  %v85 = vadd.f32 %v62, %v83
  %v86 = vadd.f32 %v63, %v83
  %v87 = vadd.f32 %v64, %v83
  %v88 = vadd.f32 %v65, %v83
  %v89 = vadd.f32 %v66, %v83
  %v90 = vadd.f32 %v67, %v83
  %v91 = vadd.f32 %v68, %v83
  %v92 = vadd.f32 %v69, %v83
  %v93 = vadd.f32 %v70, %v83
  %v94 = vadd.f32 %v71, %v83
  %v95 = vadd.f32 %v72, %v83
  %v96 = vadd.f32 %v73, %v83
  %v97 = vadd.f32 %v74, %v83
  %v98 = vadd.f32 %v75, %v83
  %v99 = vadd.f32 %v76, %v83
  %v100 = vadd.f32 %v77, %v83
  %v101 = vld [vmem:[%s3] sm:$0xf]
  %v102 = vld [vmem:[%s3 + $0x4] sm:$0xf]
  %v103 = vld [vmem:[%s3 + $0x8] sm:$0xf]
  %v104 = vld [vmem:[%s3 + $0xc] sm:$0xf]
  %v105 = vld [vmem:[%s3 + $0x10] sm:$0xf]
  %v106 = vld [vmem:[%s3 + $0x14] sm:$0xf]
  %v107 = vld [vmem:[%s3 + $0x18] sm:$0xf]
  %v108 = vld [vmem:[%s3 + $0x1c] sm:$0xf]
  %v109 = vld [vmem:[%s3 + $0x20] sm:$0xf]
  %v110 = vld [vmem:[%s3 + $0x24] sm:$0xf]
  %v111 = vld [vmem:[%s3 + $0x28] sm:$0xf]
  %v112 = vld [vmem:[%s3 + $0x2c] sm:$0xf]
  %v113 = vld [vmem:[%s3 + $0x30] sm:$0xf]
  %v114 = vld [vmem:[%s3 + $0x34] sm:$0xf]
  %v115 = vld [vmem:[%s3 + $0x38] sm:$0xf]
  %v116 = vld [vmem:[%s3 + $0x3c] sm:$0xf]
  %v117 = vunpack.c.l.bf16 %v101
  %v118 = vunpack.c.l.bf16 %v102
  %v119 = vunpack.c.l.bf16 %v103
  %v120 = vunpack.c.l.bf16 %v104
  %v121 = vunpack.c.l.bf16 %v105
  %v122 = vunpack.c.l.bf16 %v106
  %v123 = vunpack.c.l.bf16 %v107
  %v124 = vunpack.c.l.bf16 %v108
  %v125 = vunpack.c.l.bf16 %v109
  %v126 = vunpack.c.l.bf16 %v110
  %v127 = vunpack.c.l.bf16 %v111
  %v128 = vunpack.c.l.bf16 %v112
  %v129 = vunpack.c.l.bf16 %v113
  %v130 = vunpack.c.l.bf16 %v114
  %v131 = vunpack.c.l.bf16 %v115
  %v132 = vunpack.c.l.bf16 %v116
  %v133 = vld [vmem:[%s4] sm:$0x1]
  %v135 = vlaneseq
  %v136 = vshrl.u32 %v135, 7
  %v137 = vsub.s32 0, %v136
  %v138 = vrot.slane %v133, %v137
  %v140 = vmul.f32 %v117, %v138
  %v141 = vmul.f32 %v118, %v138
  %v142 = vmul.f32 %v119, %v138
  %v143 = vmul.f32 %v120, %v138
  %v144 = vmul.f32 %v121, %v138
  %v145 = vmul.f32 %v122, %v138
  %v146 = vmul.f32 %v123, %v138
  %v147 = vmul.f32 %v124, %v138
  %v148 = vmul.f32 %v125, %v138
  %v149 = vmul.f32 %v126, %v138
  %v150 = vmul.f32 %v127, %v138
  %v151 = vmul.f32 %v128, %v138
  %v152 = vmul.f32 %v129, %v138
  %v153 = vmul.f32 %v130, %v138
  %v154 = vmul.f32 %v131, %v138
  %v155 = vmul.f32 %v132, %v138
  %v156 = vadd.f32 %v85, %v140
  %v157 = vadd.f32 %v86, %v141
  %v158 = vadd.f32 %v87, %v142
  %v159 = vadd.f32 %v88, %v143
  %v160 = vadd.f32 %v89, %v144
  %v161 = vadd.f32 %v90, %v145
  %v162 = vadd.f32 %v91, %v146
  %v163 = vadd.f32 %v92, %v147
  %v164 = vadd.f32 %v93, %v148
  %v165 = vadd.f32 %v94, %v149
  %v166 = vadd.f32 %v95, %v150
  %v167 = vadd.f32 %v96, %v151
  %v168 = vadd.f32 %v97, %v152
  %v169 = vadd.f32 %v98, %v153
  %v170 = vadd.f32 %v99, %v154
  %v171 = vadd.f32 %v100, %v155
  %v172 = vld [vmem:[%s5] sm:$0x1]
  %v174 = vlaneseq
  %v175 = vshrl.u32 %v174, 7
  %v176 = vsub.s32 0, %v175
  %v177 = vrot.slane %v172, %v176
  %v179 = vadd.f32 %v156, %v177
  %v180 = vadd.f32 %v157, %v177
  %v181 = vadd.f32 %v158, %v177
  %v182 = vadd.f32 %v159, %v177
  %v183 = vadd.f32 %v160, %v177
  %v184 = vadd.f32 %v161, %v177
  %v185 = vadd.f32 %v162, %v177
  %v186 = vadd.f32 %v163, %v177
  %v187 = vadd.f32 %v164, %v177
  %v188 = vadd.f32 %v165, %v177
  %v189 = vadd.f32 %v166, %v177
  %v190 = vadd.f32 %v167, %v177
  %v191 = vadd.f32 %v168, %v177
  %v192 = vadd.f32 %v169, %v177
  %v193 = vadd.f32 %v170, %v177
  %v194 = vadd.f32 %v171, %v177
  %v195 = vmax.f32 %v179, 0.0
  %v196 = vmax.f32 %v180, 0.0
  %v197 = vmax.f32 %v181, 0.0
  %v198 = vmax.f32 %v182, 0.0
  %v199 = vmax.f32 %v183, 0.0
  %v200 = vmax.f32 %v184, 0.0
  %v201 = vmax.f32 %v185, 0.0
  %v202 = vmax.f32 %v186, 0.0
  %v203 = vmax.f32 %v187, 0.0
  %v204 = vmax.f32 %v188, 0.0
  %v205 = vmax.f32 %v189, 0.0
  %v206 = vmax.f32 %v190, 0.0
  %v207 = vmax.f32 %v191, 0.0
  %v208 = vmax.f32 %v192, 0.0
  %v209 = vmax.f32 %v193, 0.0
  %v210 = vmax.f32 %v194, 0.0
  %211 = vst [vmem:[%s6] sm:$0xff] %v195
  %212 = vst [vmem:[%s6 + $0x8] sm:$0xff] %v196
  %213 = vst [vmem:[%s6 + $0x10] sm:$0xff] %v197
  %214 = vst [vmem:[%s6 + $0x18] sm:$0xff] %v198
  %215 = vst [vmem:[%s6 + $0x20] sm:$0xff] %v199
  %216 = vst [vmem:[%s6 + $0x28] sm:$0xff] %v200
  %217 = vst [vmem:[%s6 + $0x30] sm:$0xff] %v201
  %218 = vst [vmem:[%s6 + $0x38] sm:$0xff] %v202
  %219 = vst [vmem:[%s6 + $0x40] sm:$0xff] %v203
  %220 = vst [vmem:[%s6 + $0x48] sm:$0xff] %v204
  %221 = vst [vmem:[%s6 + $0x50] sm:$0xff] %v205
  %222 = vst [vmem:[%s6 + $0x58] sm:$0xff] %v206
  %223 = vst [vmem:[%s6 + $0x60] sm:$0xff] %v207
  %224 = vst [vmem:[%s6 + $0x68] sm:$0xff] %v208
  %225 = vst [vmem:[%s6 + $0x70] sm:$0xff] %v209
  %226 = vst [vmem:[%s6 + $0x78] sm:$0xff] %v210
  // Predicated region
  $region26: #{residual_block_forward.7} parent=0 // pred_check
    _
  $region27: #{residual_block_forward.7} parent=0 // pred_check_branch
    %228 = sbr.rel (0) target = $region29
  $region28: #{residual_block_forward.7} parent=0 // pred_region
    _
  $region29: #{residual_block_forward.7} parent=0 // pred_fallthru
    _
  // Predicated region
  $region30: #{residual_block_forward.7} parent=0 // pred_check
    _
  $region31: #{residual_block_forward.7} parent=0 // pred_check_branch
    %230 = sbr.rel (0) target = $region33
  $region32: #{residual_block_forward.7} parent=0 // pred_region
    _
  $region33: #{residual_block_forward.7} parent=0 // pred_fallthru
    _

// kernel: residual_block_forward.6
$region0: #{residual_block_forward.6}
  #allocation0 [shape = 'u32[]', space=smem, size = 0x4, offset = 0x4, fixed_abs, tag = 'smem constant byte address 0x4 - core index']
  #allocation1 [shape = 'u32[144,128]{1,0:T(1,128)}', space=vmem, size = 0x12000, scoped, tag = 'internal scratch']
  %s0 = inlined_call_operand.vmem [shape: bf16[128,4], index: 0, kind: input, shape index: {}]
  %s1 = inlined_call_operand.vmem [shape: bf16[4,128], index: 1, kind: input, shape index: {}]
  %s2 = inlined_call_operand.vmem [shape: bf16[128,128], index: 2, kind: output, shape index: {0}]
  %s3 = inlined_call_operand.vmem [shape: f32[8,128], index: 3, kind: output, shape index: {1}]
  %s4 = inlined_call_operand.vmem [shape: f32[8,128], index: 4, kind: output, shape index: {2}]
  %5 = xla_tuple %s2, %s3, %s4
  %s6 = sld [smem:[#allocation0]]
  $region34: #{residual_block_forward.6} parent=0
    _
  %s8 = ssub.s32 1, %s6
  %s9 = scalar_select 0, %s8, %s6
  // Predicated region
  $region2: #{residual_block_forward.6} parent=0 // pred_check
    _
  $region3: #{residual_block_forward.6} parent=0 // pred_check_branch
    %11 = sbr.rel (0) target = $region5
  $region4: #{residual_block_forward.6} parent=0 // pred_region
    _
  $region5: #{residual_block_forward.6} parent=0 // pred_fallthru
    _
  // Predicated region
  $region6: #{residual_block_forward.6} parent=0 // pred_check
    _
  $region7: #{residual_block_forward.6} parent=0 // pred_check_branch
    %13 = sbr.rel (0) target = $region9
  $region8: #{residual_block_forward.6} parent=0 // pred_region
    _
  $region9: #{residual_block_forward.6} parent=0 // pred_fallthru
    _
  %v15 = vld [vmem:[%s0] sm:$0xf]
  %v16 = vld [vmem:[%s0 + $0x4] sm:$0xf]
  %v17 = vld [vmem:[%s0 + $0x8] sm:$0xf]
  %v18 = vld [vmem:[%s0 + $0xc] sm:$0xf]
  %v19 = vld [vmem:[%s0 + $0x10] sm:$0xf]
  %v20 = vld [vmem:[%s0 + $0x14] sm:$0xf]
  %v21 = vld [vmem:[%s0 + $0x18] sm:$0xf]
  %v22 = vld [vmem:[%s0 + $0x1c] sm:$0xf]
  %v23 = vld [vmem:[%s0 + $0x20] sm:$0xf]
  %v24 = vld [vmem:[%s0 + $0x24] sm:$0xf]
  %v25 = vld [vmem:[%s0 + $0x28] sm:$0xf]
  %v26 = vld [vmem:[%s0 + $0x2c] sm:$0xf]
  %v27 = vld [vmem:[%s0 + $0x30] sm:$0xf]
  %v28 = vld [vmem:[%s0 + $0x34] sm:$0xf]
  %v29 = vld [vmem:[%s0 + $0x38] sm:$0xf]
  %v30 = vld [vmem:[%s0 + $0x3c] sm:$0xf]
  %v31 = vld [vmem:[%s1] sm:$0x3]
  %v48 = vunpack.c.l.b16 %v15
  %v49 = vunpack.c.l.b16 %v16
  %v50 = vunpack.c.l.b16 %v17
  %v51 = vunpack.c.l.b16 %v18
  %v52 = vunpack.c.l.b16 %v19
  %v53 = vunpack.c.l.b16 %v20
  %v54 = vunpack.c.l.b16 %v21
  %v55 = vunpack.c.l.b16 %v22
  %v56 = vunpack.c.l.b16 %v23
  %v57 = vunpack.c.l.b16 %v24
  %v58 = vunpack.c.l.b16 %v25
  %v59 = vunpack.c.l.b16 %v26
  %v60 = vunpack.c.l.b16 %v27
  %v61 = vunpack.c.l.b16 %v28
  %v62 = vunpack.c.l.b16 %v29
  %v63 = vunpack.c.l.b16 %v30
  %v64 = vpack.c.b16 %v49, %v48
  %v65 = vpack.c.b16 %v51, %v50
  %v66 = vpack.c.b16 %v53, %v52
  %v67 = vpack.c.b16 %v55, %v54
  %v68 = vpack.c.b16 %v57, %v56
  %v69 = vpack.c.b16 %v59, %v58
  %v70 = vpack.c.b16 %v61, %v60
  %v71 = vpack.c.b16 %v63, %v62
  %vm72 = vcmask 31744
  %v74 = vsel %vm72, %v64, 0
  %v77 = vsel %vm72, %v65, 0
  %v80 = vsel %vm72, %v66, 0
  %v83 = vsel %vm72, %v67, 0
  %v86 = vsel %vm72, %v68, 0
  %v89 = vsel %vm72, %v69, 0
  %v92 = vsel %vm72, %v70, 0
  %v95 = vsel %vm72, %v71, 0
  %vm97 = vcmask 1041408
  %v99 = vsel %vm97, %v31, 0
  %101 = vmatprep.subr.bf16.mxu0 0
  %102 = vmatpush1.bf16.msra.mxu0 0
  %103 = vmatprep.subr.bf16.mxu0 0
  %104 = vmatpush1.bf16.msra.mxu0 0
  %105 = vmatprep.subr.bf16.mxu0 0
  %106 = vmatpush1.bf16.msra.mxu0 0
  %107 = vmatprep.subr.bf16.mxu0 0
  %108 = vmatpush1.bf16.msra.mxu0 0
  %109 = vmatprep.subr.bf16.mxu0 0
  %110 = vmatpush1.bf16.msra.mxu0 0
  %111 = vmatprep.subr.bf16.mxu0 0
  %112 = vmatpush1.bf16.msra.mxu0 0
  %113 = vmatprep.subr.bf16.mxu0 0
  %114 = vmatpush1.bf16.msra.mxu0 0
  %115 = vmatprep.subr.bf16.mxu0 0
  %116 = vmatpush1.bf16.msra.mxu0 %v99
  %117 = vmatprep.subr.bf16.mxu0 0
  %118 = vmatpush2.bf16.msra.mxu0 0
  %119 = vmatprep.subr.bf16.mxu0 0
  %120 = vmatpush2.bf16.msra.mxu0 0
  %121 = vmatprep.subr.bf16.mxu0 0
  %122 = vmatpush2.bf16.msra.mxu0 0
  %123 = vmatprep.subr.bf16.mxu0 0
  %124 = vmatpush2.bf16.msra.mxu0 0
  %125 = vmatprep.subr.bf16.mxu0 0
  %126 = vmatpush2.bf16.msra.mxu0 0
  %127 = vmatprep.subr.bf16.mxu0 0
  %128 = vmatpush2.bf16.msra.mxu0 0
  %129 = vmatprep.subr.bf16.mxu0 0
  %130 = vmatpush2.bf16.msra.mxu0 0
  %131 = vmatprep.subr.bf16.mxu0 0
  %132 = vmatpush2.bf16.msra.mxu0 0
  %133 = vmatprep.mubr.bf16.mxu0 0
  %134 = vmatmul.mubr.bf16.gmra.mxu0 %v74
  %v135 = vpop.f32.mrf.mxu0
  %v136 = vadd.f32 0.0, %v135
  %v137 = vpop.f32.mrf.mxu0
  %v138 = vpop.f32.mrf.mxu0
  %v139 = vadd.f32 0.0, %v138
  %v140 = vpop.f32.mrf.mxu0
  %141 = vmatprep.mubr.bf16.mxu0 0
  %142 = vmatmul.mubr.bf16.gmra.mxu0 %v77
  %v143 = vpop.f32.mrf.mxu0
  %v144 = vadd.f32 0.0, %v143
  %v145 = vpop.f32.mrf.mxu0
  %v146 = vpop.f32.mrf.mxu0
  %v147 = vadd.f32 0.0, %v146
  %v148 = vpop.f32.mrf.mxu0
  %149 = vmatprep.mubr.bf16.mxu0 0
  %150 = vmatmul.mubr.bf16.gmra.mxu0 %v80
  %v151 = vpop.f32.mrf.mxu0
  %v152 = vadd.f32 0.0, %v151
  %v153 = vpop.f32.mrf.mxu0
  %v154 = vpop.f32.mrf.mxu0
  %v155 = vadd.f32 0.0, %v154
  %v156 = vpop.f32.mrf.mxu0
  %157 = vmatprep.mubr.bf16.mxu0 0
  %158 = vmatmul.mubr.bf16.gmra.mxu0 %v83
  %v159 = vpop.f32.mrf.mxu0
  %v160 = vadd.f32 0.0, %v159
  %v161 = vpop.f32.mrf.mxu0
  %v162 = vpop.f32.mrf.mxu0
  %v163 = vadd.f32 0.0, %v162
  %v164 = vpop.f32.mrf.mxu0
  %165 = vmatprep.mubr.bf16.mxu0 0
  %166 = vmatmul.mubr.bf16.gmra.mxu0 %v86
  %v167 = vpop.f32.mrf.mxu0
  %v168 = vadd.f32 0.0, %v167
  %v169 = vpop.f32.mrf.mxu0
  %v170 = vpop.f32.mrf.mxu0
  %v171 = vadd.f32 0.0, %v170
  %v172 = vpop.f32.mrf.mxu0
  %173 = vmatprep.mubr.bf16.mxu0 0
  %174 = vmatmul.mubr.bf16.gmra.mxu0 %v89
  %v175 = vpop.f32.mrf.mxu0
  %v176 = vadd.f32 0.0, %v175
  %v177 = vpop.f32.mrf.mxu0
  %v178 = vpop.f32.mrf.mxu0
  %v179 = vadd.f32 0.0, %v178
  %v180 = vpop.f32.mrf.mxu0
  %181 = vmatprep.mubr.bf16.mxu0 0
  %182 = vmatmul.mubr.bf16.gmra.mxu0 %v92
  %v183 = vpop.f32.mrf.mxu0
  %v184 = vadd.f32 0.0, %v183
  %v185 = vpop.f32.mrf.mxu0
  %v186 = vpop.f32.mrf.mxu0
  %v187 = vadd.f32 0.0, %v186
  %v188 = vpop.f32.mrf.mxu0
  %189 = vmatprep.mubr.bf16.mxu0 0
  %190 = vmatmul.mubr.bf16.gmra.mxu0 %v95
  %v191 = vpop.f32.mrf.mxu0
  %v192 = vadd.f32 0.0, %v191
  %v193 = vpop.f32.mrf.mxu0
  %v194 = vpop.f32.mrf.mxu0
  %v195 = vadd.f32 0.0, %v194
  %v196 = vpop.f32.mrf.mxu0
  %197 = vdwg.mxu0
  %v198 = vpack.c.bf16 %v139, %v136
  %v199 = vpack.c.bf16 %v147, %v144
  %v200 = vpack.c.bf16 %v155, %v152
  %v201 = vpack.c.bf16 %v163, %v160
  %v202 = vpack.c.bf16 %v171, %v168
  %v203 = vpack.c.bf16 %v179, %v176
  %v204 = vpack.c.bf16 %v187, %v184
  %v205 = vpack.c.bf16 %v195, %v192
  %v214 = vunpack.c.l.b16 %v198
  %v215 = vunpack.c.h.b16 %v198
  %v216 = vunpack.c.l.b16 %v199
  %v217 = vunpack.c.h.b16 %v199
  %v218 = vunpack.c.l.b16 %v200
  %v219 = vunpack.c.h.b16 %v200
  %v220 = vunpack.c.l.b16 %v201
  %v221 = vunpack.c.h.b16 %v201
  %v222 = vunpack.c.l.b16 %v202
  %v223 = vunpack.c.h.b16 %v202
  %v224 = vunpack.c.l.b16 %v203
  %v225 = vunpack.c.h.b16 %v203
  %v226 = vunpack.c.l.b16 %v204
  %v227 = vunpack.c.h.b16 %v204
  %v228 = vunpack.c.l.b16 %v205
  %v229 = vunpack.c.h.b16 %v205
  %v230 = vpack.c.b16 %v214, %v214
  %v231 = vpack.c.b16 %v215, %v215
  %v232 = vpack.c.b16 %v216, %v216
  %v233 = vpack.c.b16 %v217, %v217
  %v234 = vpack.c.b16 %v218, %v218
  %v235 = vpack.c.b16 %v219, %v219
  %v236 = vpack.c.b16 %v220, %v220
  %v237 = vpack.c.b16 %v221, %v221
  %v238 = vpack.c.b16 %v222, %v222
  %v239 = vpack.c.b16 %v223, %v223
  %v240 = vpack.c.b16 %v224, %v224
  %v241 = vpack.c.b16 %v225, %v225
  %v242 = vpack.c.b16 %v226, %v226
  %v243 = vpack.c.b16 %v227, %v227
  %v244 = vpack.c.b16 %v228, %v228
  %v245 = vpack.c.b16 %v229, %v229
  %262 = vst [vmem:[%s2] sm:$0xf] %v230
  %263 = vst [vmem:[%s2 + $0x4] sm:$0xf] %v231
  %264 = vst [vmem:[%s2 + $0x8] sm:$0xf] %v232
  %265 = vst [vmem:[%s2 + $0xc] sm:$0xf] %v233
  %266 = vst [vmem:[%s2 + $0x10] sm:$0xf] %v234
  %267 = vst [vmem:[%s2 + $0x14] sm:$0xf] %v235
  %268 = vst [vmem:[%s2 + $0x18] sm:$0xf] %v236
  %269 = vst [vmem:[%s2 + $0x1c] sm:$0xf] %v237
  %270 = vst [vmem:[%s2 + $0x20] sm:$0xf] %v238
  %271 = vst [vmem:[%s2 + $0x24] sm:$0xf] %v239
  %272 = vst [vmem:[%s2 + $0x28] sm:$0xf] %v240
  %273 = vst [vmem:[%s2 + $0x2c] sm:$0xf] %v241
  %274 = vst [vmem:[%s2 + $0x30] sm:$0xf] %v242
  %275 = vst [vmem:[%s2 + $0x34] sm:$0xf] %v243
  %276 = vst [vmem:[%s2 + $0x38] sm:$0xf] %v244
  %277 = vst [vmem:[%s2 + $0x3c] sm:$0xf] %v245
  %v278 = vlaneseq
  %v279 = vshrl.u32 %v278, 7
  %v280 = vadd.s32 %v279, 8
  %v281 = vadd.s32 %v279, 16
  %v282 = vadd.s32 %v279, 24
  %v283 = vadd.s32 %v279, 32
  %v284 = vadd.s32 %v279, 40
  %v285 = vadd.s32 %v279, 48
  %v286 = vadd.s32 %v279, 56
  %v287 = vadd.s32 %v279, 64
  %v288 = vadd.s32 %v279, 72
  %v289 = vadd.s32 %v279, 80
  %v290 = vadd.s32 %v279, 88
  %v291 = vadd.s32 %v279, 96
  %v292 = vadd.s32 %v279, 104
  %v293 = vadd.s32 %v279, 112
  %v294 = vadd.s32 %v279, 120
  %s295 = smul.u32 0, 128
  %v296 = vstv %s295
  %v297 = vadd.s32 %v279, %v296
  %v298 = vadd.s32 %v280, %v296
  %v299 = vadd.s32 %v281, %v296
  %v300 = vadd.s32 %v282, %v296
  %v301 = vadd.s32 %v283, %v296
  %v302 = vadd.s32 %v284, %v296
  %v303 = vadd.s32 %v285, %v296
  %v304 = vadd.s32 %v286, %v296
  %v305 = vadd.s32 %v287, %v296
  %v306 = vadd.s32 %v288, %v296
  %v307 = vadd.s32 %v289, %v296
  %v308 = vadd.s32 %v290, %v296
  %v309 = vadd.s32 %v291, %v296
  %v310 = vadd.s32 %v292, %v296
  %v311 = vadd.s32 %v293, %v296
  %v312 = vadd.s32 %v294, %v296
  %vm313 = vcmp.lt.s32.totalorder %v297, 128
  %vm314 = vcmp.lt.s32.totalorder %v298, 128
  %vm315 = vcmp.lt.s32.totalorder %v299, 128
  %vm316 = vcmp.lt.s32.totalorder %v300, 128
  %vm317 = vcmp.lt.s32.totalorder %v301, 128
  %vm318 = vcmp.lt.s32.totalorder %v302, 128
  %vm319 = vcmp.lt.s32.totalorder %v303, 128
  %vm320 = vcmp.lt.s32.totalorder %v304, 128
  %vm321 = vcmp.lt.s32.totalorder %v305, 128
  %vm322 = vcmp.lt.s32.totalorder %v306, 128
  %vm323 = vcmp.lt.s32.totalorder %v307, 128
  %vm324 = vcmp.lt.s32.totalorder %v308, 128
  %vm325 = vcmp.lt.s32.totalorder %v309, 128
  %vm326 = vcmp.lt.s32.totalorder %v310, 128
  %vm327 = vcmp.lt.s32.totalorder %v311, 128
  %vm328 = vcmp.lt.s32.totalorder %v312, 128
  %v329 = vsel %vm313, 1, 0
  %v330 = vsel %vm314, 1, 0
  %v331 = vsel %vm315, 1, 0
  %v332 = vsel %vm316, 1, 0
  %v333 = vsel %vm317, 1, 0
  %v334 = vsel %vm318, 1, 0
  %v335 = vsel %vm319, 1, 0
  %v336 = vsel %vm320, 1, 0
  %v337 = vsel %vm321, 1, 0
  %v338 = vsel %vm322, 1, 0
  %v339 = vsel %vm323, 1, 0
  %v340 = vsel %vm324, 1, 0
  %v341 = vsel %vm325, 1, 0
  %v342 = vsel %vm326, 1, 0
  %v343 = vsel %vm327, 1, 0
  %v344 = vsel %vm328, 1, 0
  %vm345 = vcmp.eq.s32.totalorder %v329, 1
  %vm346 = vcmp.eq.s32.totalorder %v330, 1
  %vm347 = vcmp.eq.s32.totalorder %v331, 1
  %vm348 = vcmp.eq.s32.totalorder %v332, 1
  %vm349 = vcmp.eq.s32.totalorder %v333, 1
  %vm350 = vcmp.eq.s32.totalorder %v334, 1
  %vm351 = vcmp.eq.s32.totalorder %v335, 1
  %vm352 = vcmp.eq.s32.totalorder %v336, 1
  %vm353 = vcmp.eq.s32.totalorder %v337, 1
  %vm354 = vcmp.eq.s32.totalorder %v338, 1
  %vm355 = vcmp.eq.s32.totalorder %v339, 1
  %vm356 = vcmp.eq.s32.totalorder %v340, 1
  %vm357 = vcmp.eq.s32.totalorder %v341, 1
  %vm358 = vcmp.eq.s32.totalorder %v342, 1
  %vm359 = vcmp.eq.s32.totalorder %v343, 1
  %vm360 = vcmp.eq.s32.totalorder %v344, 1
  %v361 = vsel %vm345, %v136, 0.0
  %v362 = vsel %vm346, %v139, 0.0
  %v363 = vsel %vm347, %v144, 0.0
  %v364 = vsel %vm348, %v147, 0.0
  %v365 = vsel %vm349, %v152, 0.0
  %v366 = vsel %vm350, %v155, 0.0
  %v367 = vsel %vm351, %v160, 0.0
  %v368 = vsel %vm352, %v163, 0.0
  %v369 = vsel %vm353, %v168, 0.0
  %v370 = vsel %vm354, %v171, 0.0
  %v371 = vsel %vm355, %v176, 0.0
  %v372 = vsel %vm356, %v179, 0.0
  %v373 = vsel %vm357, %v184, 0.0
  %v374 = vsel %vm358, %v187, 0.0
  %v375 = vsel %vm359, %v192, 0.0
  %v376 = vsel %vm360, %v195, 0.0
  %v377 = vadd.f32 %v361, %v362
  %v378 = vadd.f32 %v377, %v363
  %v379 = vadd.f32 %v378, %v364
  %v380 = vadd.f32 %v379, %v365
  %v381 = vadd.f32 %v380, %v366
  %v382 = vadd.f32 %v381, %v367
  %v383 = vadd.f32 %v382, %v368
  %v384 = vadd.f32 %v383, %v369
  %v385 = vadd.f32 %v384, %v370
  %v386 = vadd.f32 %v385, %v371
  %v387 = vadd.f32 %v386, %v372
  %v388 = vadd.f32 %v387, %v373
  %v389 = vadd.f32 %v388, %v374
  %v390 = vadd.f32 %v389, %v375
  %v391 = vadd.f32 %v390, %v376
  %v392 = vrot.slane %v391, 4
  %v393 = vadd.f32 %v391, %v392
  %v394 = vrot.slane %v393, 2
  %v395 = vadd.f32 %v393, %v394
  %v396 = vrot.slane %v395, 1
  %v397 = vadd.f32 %v395, %v396
  %398 = vst [vmem:[%s3] sm:$0xff] %v397
  %v399 = vmul.f32 %v361, %v361
  %v400 = vmul.f32 %v362, %v362
  %v401 = vmul.f32 %v363, %v363
  %v402 = vmul.f32 %v364, %v364
  %v403 = vmul.f32 %v365, %v365
  %v404 = vmul.f32 %v366, %v366
  %v405 = vmul.f32 %v367, %v367
  %v406 = vmul.f32 %v368, %v368
  %v407 = vmul.f32 %v369, %v369
  %v408 = vmul.f32 %v370, %v370
  %v409 = vmul.f32 %v371, %v371
  %v410 = vmul.f32 %v372, %v372
  %v411 = vmul.f32 %v373, %v373
  %v412 = vmul.f32 %v374, %v374
  %v413 = vmul.f32 %v375, %v375
  %v414 = vmul.f32 %v376, %v376
  %v415 = vadd.f32 %v399, %v400
  %v416 = vadd.f32 %v415, %v401
  %v417 = vadd.f32 %v416, %v402
  %v418 = vadd.f32 %v417, %v403
  %v419 = vadd.f32 %v418, %v404
  %v420 = vadd.f32 %v419, %v405
  %v421 = vadd.f32 %v420, %v406
  %v422 = vadd.f32 %v421, %v407
  %v423 = vadd.f32 %v422, %v408
  %v424 = vadd.f32 %v423, %v409
  %v425 = vadd.f32 %v424, %v410
  %v426 = vadd.f32 %v425, %v411
  %v427 = vadd.f32 %v426, %v412
  %v428 = vadd.f32 %v427, %v413
  %v429 = vadd.f32 %v428, %v414
  %v430 = vrot.slane %v429, 4
  %v431 = vadd.f32 %v429, %v430
  %v432 = vrot.slane %v431, 2
  %v433 = vadd.f32 %v431, %v432
  %v434 = vrot.slane %v433, 1
  %v435 = vadd.f32 %v433, %v434
  %436 = vst [vmem:[%s4] sm:$0xff] %v435
  // Predicated region
  $region10: #{residual_block_forward.6} parent=0 // pred_check
    _
  $region11: #{residual_block_forward.6} parent=0 // pred_check_branch
    %438 = sbr.rel (0) target = $region13
  $region12: #{residual_block_forward.6} parent=0 // pred_region
    _
  $region13: #{residual_block_forward.6} parent=0 // pred_fallthru
    _
  // Predicated region
  $region14: #{residual_block_forward.6} parent=0 // pred_check
    _
  $region15: #{residual_block_forward.6} parent=0 // pred_check_branch
    %440 = sbr.rel (0) target = $region17
  $region16: #{residual_block_forward.6} parent=0 // pred_region
    _
  $region17: #{residual_block_forward.6} parent=0 // pred_fallthru
    _
  // Predicated region
  $region18: #{residual_block_forward.6} parent=0 // pred_check
    _
  $region19: #{residual_block_forward.6} parent=0 // pred_check_branch
    %442 = sbr.rel (0) target = $region21
  $region20: #{residual_block_forward.6} parent=0 // pred_region
    _
  $region21: #{residual_block_forward.6} parent=0 // pred_fallthru
    _
  // Predicated region
  $region22: #{residual_block_forward.6} parent=0 // pred_check
    _
  $region23: #{residual_block_forward.6} parent=0 // pred_check_branch
    %444 = sbr.rel (0) target = $region25
  $region24: #{residual_block_forward.6} parent=0 // pred_region
    _
  $region25: #{residual_block_forward.6} parent=0 // pred_fallthru
    _
  // Predicated region
  $region26: #{residual_block_forward.6} parent=0 // pred_check
    _
  $region27: #{residual_block_forward.6} parent=0 // pred_check_branch
    %446 = sbr.rel (0) target = $region29
  $region28: #{residual_block_forward.6} parent=0 // pred_region
    _
  $region29: #{residual_block_forward.6} parent=0 // pred_fallthru
    _
  // Predicated region
  $region30: #{residual_block_forward.6} parent=0 // pred_check
    _
  $region31: #{residual_block_forward.6} parent=0 // pred_check_branch
    %448 = sbr.rel (0) target = $region33
  $region32: #{residual_block_forward.6} parent=0 // pred_region
    _
  $region33: #{residual_block_forward.6} parent=0 // pred_fallthru
    _

// kernel: residual_block_forward.5
$region0: #{residual_block_forward.5}
  #allocation0 [shape = 'u32[]', space=smem, size = 0x4, offset = 0x4, fixed_abs, tag = 'smem constant byte address 0x4 - core index']
  #allocation1 [shape = 'u32[144,128]{1,0:T(1,128)}', space=vmem, size = 0x12000, scoped, tag = 'internal scratch']
  %s0 = inlined_call_operand.vmem [shape: bf16[2,10,10,128], index: 0, kind: input, shape index: {}]
  %s1 = inlined_call_operand.vmem [shape: bf16[9,128,128], index: 1, kind: input, shape index: {}]
  %s2 = inlined_call_operand.vmem [shape: f32[1,1,128], index: 2, kind: input, shape index: {}]
  %s3 = inlined_call_operand.vmem [shape: f32[1,1,128], index: 3, kind: input, shape index: {}]
  %s4 = inlined_call_operand.vmem [shape: f32[10,10,1], index: 4, kind: input, shape index: {}]
  %s5 = inlined_call_operand.vmem [shape: bf16[128,128], index: 5, kind: output, shape index: {0}]
  %s6 = inlined_call_operand.vmem [shape: f32[16,128], index: 6, kind: output, shape index: {1}]
  %s7 = inlined_call_operand.vmem [shape: f32[16,128], index: 7, kind: output, shape index: {2}]
  %8 = xla_tuple %s5, %s6, %s7
  %s9 = sld [smem:[#allocation0]]
  $region69: #{residual_block_forward.5} parent=0
    _
  %s11 = ssub.s32 1, %s9
  %s12 = scalar_select 0, %s11, %s9
  loop: start=0, step=1, limit=4
  $region2: #{residual_block_forward.5} parent=0 // loop_pre_header
    _
  $region3: #{residual_block_forward.5} parent=0 // loop_header
    %s14 = sphi 0, %s18
    %p15 = scmp.ge.s32.totalorder %s14, 4
    %s24 = sphi 0, %s26
    %s27 = sphi 0, %s24
    %s28 = sphi 0, %s27
    %s44 = sphi 0, %s28
    %s48 = sphi 0, %s48
    %s50 = sphi 0, %s48
    %s51 = sphi 0, %s50
    %s65 = sphi 0, %s51
    %s69 = sphi 0, %s69
    %s71 = sphi 0, %s69
    %s72 = sphi 0, %s71
    %s86 = sphi 0, %s72
    %s90 = sphi 0, %s90
    %s92 = sphi 0, %s90
    %s93 = sphi 0, %s92
    %s107 = sphi 0, %s93
    %s111 = sphi 0, %s111
    %s113 = sphi 0, %s111
    %s114 = sphi 0, %s113
    %s128 = sphi 0, %s114
    %s134 = sphi 0, %s136
    %s137 = sphi 0, %s134
    %s138 = sphi 0, %s137
    %s154 = sphi 0, %s138
    %s160 = sphi 0, %s162
    %s163 = sphi 0, %s160
    %s164 = sphi 0, %s163
    %s180 = sphi 0, %s164
    %s186 = sphi 0, %s188
    %s189 = sphi 0, %s186
    %s190 = sphi 0, %s189
    %s206 = sphi 0, %s190
  $region4: #{residual_block_forward.5} parent=0 // loop_header_branch
    %17 = sbr.rel (%p15) target = $region8
  $region5: #{residual_block_forward.5} parent=0 // loop_body
    %s19 = ssub.s32 %s14, 1
    %s20 = ssub.s32 %s14, 2
    %s21 = sadd.s32 %s14, 1
    %s22 = ssub.s32 %s14, %s21
    %p23 = scmp.eq.s32.totalorder %s22, 0
    %s25 = sadd.s32 %s24, 1
    %s26 = scalar_select %p23, %s24, %s25
    %p29 = pneg %p23
    %p30 = scmp.eq.s32.totalorder %s14, 1
    %p31 = por %p29, %p30
    %p32 = scmp.ne.s32.totalorder %s24, %s27
    %p33 = scmp.eq.s32.totalorder %s14, 0
    %p34 = por %p32, %p33
    %p35 = scmp.ne.s32.totalorder %s24, %s27
    %p36 = scmp.eq.s32.totalorder %s19, 1
    %p37 = por %p35, %p36
    %p38 = scmp.ne.s32.totalorder %s27, %s28
    %p39 = scmp.eq.s32.totalorder %s19, 0
    %p40 = por %p38, %p39
    %p41 = scmp.ne.s32.totalorder %s27, %s28
    %p42 = scmp.eq.s32.totalorder %s20, 1
    %p43 = por %p41, %p42
    %p45 = scmp.ne.s32.totalorder %s28, %s44
    %p46 = scmp.eq.s32.totalorder %s20, 0
    %p47 = por %p45, %p46
    %s49 = sadd.s32 %s48, 1
    %p52 = scmp.eq.s32.totalorder %s14, 1
    %p53 = scmp.ne.s32.totalorder %s48, %s50
    %p54 = scmp.eq.s32.totalorder %s14, 0
    %p55 = por %p53, %p54
    %p56 = scmp.ne.s32.totalorder %s48, %s50
    %p57 = scmp.eq.s32.totalorder %s19, 1
    %p58 = por %p56, %p57
    %p59 = scmp.ne.s32.totalorder %s50, %s51
    %p60 = scmp.eq.s32.totalorder %s19, 0
    %p61 = por %p59, %p60
    %p62 = scmp.ne.s32.totalorder %s50, %s51
    %p63 = scmp.eq.s32.totalorder %s20, 1
    %p64 = por %p62, %p63
    %p66 = scmp.ne.s32.totalorder %s51, %s65
    %p67 = scmp.eq.s32.totalorder %s20, 0
    %p68 = por %p66, %p67
    %s70 = sadd.s32 %s69, 1
    %p73 = scmp.eq.s32.totalorder %s14, 1
    %p74 = scmp.ne.s32.totalorder %s69, %s71
    %p75 = scmp.eq.s32.totalorder %s14, 0
    %p76 = por %p74, %p75
    %p77 = scmp.ne.s32.totalorder %s69, %s71
    %p78 = scmp.eq.s32.totalorder %s19, 1
    %p79 = por %p77, %p78
    %p80 = scmp.ne.s32.totalorder %s71, %s72
    %p81 = scmp.eq.s32.totalorder %s19, 0
    %p82 = por %p80, %p81
    %p83 = scmp.ne.s32.totalorder %s71, %s72
    %p84 = scmp.eq.s32.totalorder %s20, 1
    %p85 = por %p83, %p84
    %p87 = scmp.ne.s32.totalorder %s72, %s86
    %p88 = scmp.eq.s32.totalorder %s20, 0
    %p89 = por %p87, %p88
    %s91 = sadd.s32 %s90, 1
    %p94 = scmp.eq.s32.totalorder %s14, 1
    %p95 = scmp.ne.s32.totalorder %s90, %s92
    %p96 = scmp.eq.s32.totalorder %s14, 0
    %p97 = por %p95, %p96
    %p98 = scmp.ne.s32.totalorder %s90, %s92
    %p99 = scmp.eq.s32.totalorder %s19, 1
    %p100 = por %p98, %p99
    %p101 = scmp.ne.s32.totalorder %s92, %s93
    %p102 = scmp.eq.s32.totalorder %s19, 0
    %p103 = por %p101, %p102
    %p104 = scmp.ne.s32.totalorder %s92, %s93
    %p105 = scmp.eq.s32.totalorder %s20, 1
    %p106 = por %p104, %p105
    %p108 = scmp.ne.s32.totalorder %s93, %s107
    %p109 = scmp.eq.s32.totalorder %s20, 0
    %p110 = por %p108, %p109
    %s112 = sadd.s32 %s111, 1
    %p115 = scmp.eq.s32.totalorder %s14, 1
    %p116 = scmp.ne.s32.totalorder %s111, %s113
    %p117 = scmp.eq.s32.totalorder %s14, 0
    %p118 = por %p116, %p117
    %p119 = scmp.ne.s32.totalorder %s111, %s113
    %p120 = scmp.eq.s32.totalorder %s19, 1
    %p121 = por %p119, %p120
    %p122 = scmp.ne.s32.totalorder %s113, %s114
    %p123 = scmp.eq.s32.totalorder %s19, 0
    %p124 = por %p122, %p123
    %p125 = scmp.ne.s32.totalorder %s113, %s114
    %p126 = scmp.eq.s32.totalorder %s20, 1
    %p127 = por %p125, %p126
    %p129 = scmp.ne.s32.totalorder %s114, %s128
    %p130 = scmp.eq.s32.totalorder %s20, 0
    %p131 = por %p129, %p130
    %s132 = ssub.s32 %s14, %s21
    %p133 = scmp.eq.s32.totalorder %s132, 0
    %s135 = sadd.s32 %s134, 1
    %s136 = scalar_select %p133, %s134, %s135
    %p139 = pneg %p133
    %p140 = scmp.eq.s32.totalorder %s14, 1
    %p141 = por %p139, %p140
    %p142 = scmp.ne.s32.totalorder %s134, %s137
    %p143 = scmp.eq.s32.totalorder %s14, 0
    %p144 = por %p142, %p143
    %p145 = scmp.ne.s32.totalorder %s134, %s137
    %p146 = scmp.eq.s32.totalorder %s19, 1
    %p147 = por %p145, %p146
    %p148 = scmp.ne.s32.totalorder %s137, %s138
    %p149 = scmp.eq.s32.totalorder %s19, 0
    %p150 = por %p148, %p149
    %p151 = scmp.ne.s32.totalorder %s137, %s138
    %p152 = scmp.eq.s32.totalorder %s20, 1
    %p153 = por %p151, %p152
    %p155 = scmp.ne.s32.totalorder %s138, %s154
    %p156 = scmp.eq.s32.totalorder %s20, 0
    %p157 = por %p155, %p156
    %s158 = ssub.s32 %s14, %s21
    %p159 = scmp.eq.s32.totalorder %s158, 0
    %s161 = sadd.s32 %s160, 1
    %s162 = scalar_select %p159, %s160, %s161
    %p165 = pneg %p159
    %p166 = scmp.eq.s32.totalorder %s14, 1
    %p167 = por %p165, %p166
    %p168 = scmp.ne.s32.totalorder %s160, %s163
    %p169 = scmp.eq.s32.totalorder %s14, 0
    %p170 = por %p168, %p169
    %p171 = scmp.ne.s32.totalorder %s160, %s163
    %p172 = scmp.eq.s32.totalorder %s19, 1
    %p173 = por %p171, %p172
    %p174 = scmp.ne.s32.totalorder %s163, %s164
    %p175 = scmp.eq.s32.totalorder %s19, 0
    %p176 = por %p174, %p175
    %p177 = scmp.ne.s32.totalorder %s163, %s164
    %p178 = scmp.eq.s32.totalorder %s20, 1
    %p179 = por %p177, %p178
    %p181 = scmp.ne.s32.totalorder %s164, %s180
    %p182 = scmp.eq.s32.totalorder %s20, 0
    %p183 = por %p181, %p182
    %s184 = ssub.s32 %s14, %s21
    %p185 = scmp.eq.s32.totalorder %s184, 0
    %s187 = sadd.s32 %s186, 1
    %s188 = scalar_select %p185, %s186, %s187
    %p191 = pneg %p185
    %p192 = scmp.eq.s32.totalorder %s14, 1
    %p193 = por %p191, %p192
    %p194 = scmp.ne.s32.totalorder %s186, %s189
    %p195 = scmp.eq.s32.totalorder %s14, 0
    %p196 = por %p194, %p195
    %p197 = scmp.ne.s32.totalorder %s186, %s189
    %p198 = scmp.eq.s32.totalorder %s19, 1
    %p199 = por %p197, %p198
    %p200 = scmp.ne.s32.totalorder %s189, %s190
    %p201 = scmp.eq.s32.totalorder %s19, 0
    %p202 = por %p200, %p201
    %p203 = scmp.ne.s32.totalorder %s189, %s190
    %p204 = scmp.eq.s32.totalorder %s20, 1
    %p205 = por %p203, %p204
    %p207 = scmp.ne.s32.totalorder %s190, %s206
    %p208 = scmp.eq.s32.totalorder %s20, 0
    %p209 = por %p207, %p208
    %p210 = scmp.le.s32.totalorder 1, %s14
    %p211 = scmp.lt.s32.totalorder %s14, 3
    %p212 = pnand %p210, %p211
    %p213 = pneg %p212
    // Predicated region
    $region9: #{residual_block_forward.5} parent=5 // pred_check
      _
    $region10: #{residual_block_forward.5} parent=5 // pred_check_branch
      %215 = sbr.rel (%p212) target = $region12
    $region11: #{residual_block_forward.5} parent=5 // pred_region
      %s216 = ssub.s32 %s14, 1
      // Predicated region
      $region13: #{residual_block_forward.5} parent=11 // pred_check
        %p217 = pneg %p61
      $region14: #{residual_block_forward.5} parent=11 // pred_check_branch
        %219 = sbr.rel (%p217) target = $region16
      $region15: #{residual_block_forward.5} parent=11 // pred_region
        _
      $region16: #{residual_block_forward.5} parent=11 // pred_fallthru
        _
      // Predicated region
      $region17: #{residual_block_forward.5} parent=11 // pred_check
        %p220 = pneg %p82
      $region18: #{residual_block_forward.5} parent=11 // pred_check_branch
        %222 = sbr.rel (%p220) target = $region20
      $region19: #{residual_block_forward.5} parent=11 // pred_region
        _
      $region20: #{residual_block_forward.5} parent=11 // pred_fallthru
        _
      // Predicated region
      $region21: #{residual_block_forward.5} parent=11 // pred_check
        %p223 = pneg %p103
      $region22: #{residual_block_forward.5} parent=11 // pred_check_branch
        %225 = sbr.rel (%p223) target = $region24
      $region23: #{residual_block_forward.5} parent=11 // pred_region
        _
      $region24: #{residual_block_forward.5} parent=11 // pred_fallthru
        _
      // Predicated region
      $region25: #{residual_block_forward.5} parent=11 // pred_check
        %p226 = pneg %p124
      $region26: #{residual_block_forward.5} parent=11 // pred_check_branch
        %228 = sbr.rel (%p226) target = $region28
      $region27: #{residual_block_forward.5} parent=11 // pred_region
        _
      $region28: #{residual_block_forward.5} parent=11 // pred_fallthru
        _
    $region12: #{residual_block_forward.5} parent=5 // pred_fallthru
      _
    %p229 = scmp.lt.s32.totalorder %s14, 2
    // Predicated region
    $region29: #{residual_block_forward.5} parent=5 // pred_check
      %p230 = pneg %p229
    $region30: #{residual_block_forward.5} parent=5 // pred_check_branch
      %232 = sbr.rel (%p230) target = $region32
    $region31: #{residual_block_forward.5} parent=5 // pred_region
      // Predicated region
      $region33: #{residual_block_forward.5} parent=31 // pred_check
        %p233 = pneg %p34
      $region34: #{residual_block_forward.5} parent=31 // pred_check_branch
        %235 = sbr.rel (%p233) target = $region36
      $region35: #{residual_block_forward.5} parent=31 // pred_region
        %p236 = scmp.lt.s32.totalorder %s14, 1
        %s237 = scalar_select %p236, %s14, 1
        %s238 = smul.addr %s237, 20
        %s239 = smul.addr %s238, 4
        %s240 = scalar_lea.vmem %s0, %s239
      $region36: #{residual_block_forward.5} parent=31 // pred_fallthru
        _
    $region32: #{residual_block_forward.5} parent=5 // pred_fallthru
      _
    %p241 = scmp.le.s32.totalorder 1, %s14
    %p242 = scmp.lt.s32.totalorder %s14, 3
    %p243 = pnand %p241, %p242
    %p244 = pneg %p243
    // Predicated region
    $region37: #{residual_block_forward.5} parent=5 // pred_check
      _
    $region38: #{residual_block_forward.5} parent=5 // pred_check_branch
      %246 = sbr.rel (%p243) target = $region40
    $region39: #{residual_block_forward.5} parent=5 // pred_region
      %s247 = ssub.s32 %s14, 1
      %p248 = scmp.lt.s32.totalorder %s19, 1
      %s249 = scalar_select %p248, %s19, 1
      %s250 = smul.addr %s249, 20
      %s251 = smul.addr %s250, 4
      %s252 = scalar_lea.vmem %s0, %s251
      %p253 = pneg %p40
      %p254 = pneg %p37
      %p255 = pneg %p61
      %p256 = pneg %p58
      %p257 = pneg %p82
      %p258 = pneg %p79
      %p259 = pneg %p103
      %p260 = pneg %p100
      %p261 = pneg %p124
      %p262 = pneg %p121
      %p263 = pneg %p150
      %p264 = pneg %p147
      %s265 = smul.u32 8, %s19
      %p266 = scmp.lt.s32.totalorder %s265, 15
      %s267 = scalar_select %p266, %s265, 15
      %s268 = smul.addr %s267, 4
      %s269 = scalar_lea.vmem %s5, %s268
      %p270 = pneg %p176
      %p271 = pneg %p173
      %p272 = scmp.lt.s32.totalorder %s19, 1
      %s273 = scalar_select %p272, %s19, 1
      %s274 = smul.addr %s273, 8
      %s275 = scalar_lea.vmem %s6, %s274
      %p276 = pneg %p202
      %p277 = pneg %p199
      %p278 = scmp.lt.s32.totalorder %s19, 1
      %s279 = scalar_select %p278, %s19, 1
      %s280 = smul.addr %s279, 8
      %s281 = scalar_lea.vmem %s7, %s280
      %p282 = scmp.lt.s32.totalorder %s19, 1
      %s283 = scalar_select %p282, %s19, 1
      %s284 = smul.addr %s283, 20
      %s285 = smul.addr %s284, 4
      %s286 = scalar_lea.vmem %s0, %s285
      %s287 = smul.u32 8, %s19
      %p288 = scmp.lt.s32.totalorder %s287, 15
      %s289 = scalar_select %p288, %s287, 15
      %s290 = smul.addr %s289, 4
      %s291 = scalar_lea.vmem %s5, %s290
      %s292 = smul.u32 8, %s19
      %p293 = scmp.lt.s32.totalorder %s19, 1
      %s294 = scalar_select %p293, %s19, 1
      %s295 = smul.addr %s294, 8
      %s296 = scalar_lea.vmem %s6, %s295
      %p297 = scmp.lt.s32.totalorder %s19, 1
      %s298 = scalar_select %p297, %s19, 1
      %s299 = smul.addr %s298, 8
      %s300 = scalar_lea.vmem %s7, %s299
      %v302 = vld [vmem:[%s286] sm:$0xf]
      %v303 = vld [vmem:[%s286 + $0x4] sm:$0x1]
      %v304 = vld [vmem:[%s286 + $0x8] sm:$0xf]
      %v305 = vld [vmem:[%s286 + $0xc] sm:$0x1]
      %v306 = vld [vmem:[%s286 + $0x10] sm:$0xf]
      %v307 = vld [vmem:[%s286 + $0x14] sm:$0x1]
      %v308 = vld [vmem:[%s286 + $0x18] sm:$0xf]
      %v309 = vld [vmem:[%s286 + $0x1c] sm:$0x1]
      %v310 = vld [vmem:[%s286 + $0x20] sm:$0xf]
      %v311 = vld [vmem:[%s286 + $0x24] sm:$0x1]
      %v312 = vld [vmem:[%s286 + $0x28] sm:$0xf]
      %v313 = vld [vmem:[%s286 + $0x2c] sm:$0x1]
      %v314 = vld [vmem:[%s286 + $0x30] sm:$0xf]
      %v315 = vld [vmem:[%s286 + $0x34] sm:$0x1]
      %v316 = vld [vmem:[%s286 + $0x38] sm:$0xf]
      %v317 = vld [vmem:[%s286 + $0x3c] sm:$0x1]
      %v318 = vld [vmem:[%s286 + $0x40] sm:$0xf]
      %v319 = vld [vmem:[%s286 + $0x44] sm:$0x1]
      %v320 = vld [vmem:[%s286 + $0x48] sm:$0xf]
      %v321 = vld [vmem:[%s286 + $0x4c] sm:$0x1]
      %v322 = vunpack.c.l.bf16 %v302
      %v323 = vunpack.c.l.bf16 %v303
      %v324 = vunpack.c.l.bf16 %v304
      %v325 = vunpack.c.l.bf16 %v305
      %v326 = vunpack.c.l.bf16 %v306
      %v327 = vunpack.c.l.bf16 %v307
      %v328 = vunpack.c.l.bf16 %v308
      %v329 = vunpack.c.l.bf16 %v309
      %v330 = vunpack.c.l.bf16 %v310
      %v331 = vunpack.c.l.bf16 %v311
      %v332 = vunpack.c.l.bf16 %v312
      %v333 = vunpack.c.l.bf16 %v313
      %v334 = vunpack.c.l.bf16 %v314
      %v335 = vunpack.c.l.bf16 %v315
      %v336 = vunpack.c.l.bf16 %v316
      %v337 = vunpack.c.l.bf16 %v317
      %v338 = vunpack.c.l.bf16 %v318
      %v339 = vunpack.c.l.bf16 %v319
      %v340 = vunpack.c.l.bf16 %v320
      %v341 = vunpack.c.l.bf16 %v321
      %v342 = vld [vmem:[%s2] sm:$0x1]
      %v344 = vlaneseq
      %v345 = vshrl.u32 %v344, 7
      %v346 = vsub.s32 0, %v345
      %v347 = vrot.slane %v342, %v346
      %v349 = vmul.f32 %v322, %v347
      %v350 = vmul.f32 %v323, %v347
      %v351 = vmul.f32 %v324, %v347
      %v352 = vmul.f32 %v325, %v347
      %v353 = vmul.f32 %v326, %v347
      %v354 = vmul.f32 %v327, %v347
      %v355 = vmul.f32 %v328, %v347
      %v356 = vmul.f32 %v329, %v347
      %v357 = vmul.f32 %v330, %v347
      %v358 = vmul.f32 %v331, %v347
      %v359 = vmul.f32 %v332, %v347
      %v360 = vmul.f32 %v333, %v347
      %v361 = vmul.f32 %v334, %v347
      %v362 = vmul.f32 %v335, %v347
      %v363 = vmul.f32 %v336, %v347
      %v364 = vmul.f32 %v337, %v347
      %v365 = vmul.f32 %v338, %v347
      %v366 = vmul.f32 %v339, %v347
      %v367 = vmul.f32 %v340, %v347
      %v368 = vmul.f32 %v341, %v347
      %v369 = vld [vmem:[%s3] sm:$0x1]
      %v371 = vlaneseq
      %v372 = vshrl.u32 %v371, 7
      %v373 = vsub.s32 0, %v372
      %v374 = vrot.slane %v369, %v373
      %v376 = vadd.f32 %v349, %v374
      %v377 = vadd.f32 %v350, %v374
      %v378 = vadd.f32 %v351, %v374
      %v379 = vadd.f32 %v352, %v374
      %v380 = vadd.f32 %v353, %v374
      %v381 = vadd.f32 %v354, %v374
      %v382 = vadd.f32 %v355, %v374
      %v383 = vadd.f32 %v356, %v374
      %v384 = vadd.f32 %v357, %v374
      %v385 = vadd.f32 %v358, %v374
      %v386 = vadd.f32 %v359, %v374
      %v387 = vadd.f32 %v360, %v374
      %v388 = vadd.f32 %v361, %v374
      %v389 = vadd.f32 %v362, %v374
      %v390 = vadd.f32 %v363, %v374
      %v391 = vadd.f32 %v364, %v374
      %v392 = vadd.f32 %v365, %v374
      %v393 = vadd.f32 %v366, %v374
      %v394 = vadd.f32 %v367, %v374
      %v395 = vadd.f32 %v368, %v374
      %v396 = vmax.f32 %v376, 0.0
      %v397 = vmax.f32 %v377, 0.0
      %v398 = vmax.f32 %v378, 0.0
      %v399 = vmax.f32 %v379, 0.0
      %v400 = vmax.f32 %v380, 0.0
      %v401 = vmax.f32 %v381, 0.0
      %v402 = vmax.f32 %v382, 0.0
      %v403 = vmax.f32 %v383, 0.0
      %v404 = vmax.f32 %v384, 0.0
      %v405 = vmax.f32 %v385, 0.0
      %v406 = vmax.f32 %v386, 0.0
      %v407 = vmax.f32 %v387, 0.0
      %v408 = vmax.f32 %v388, 0.0
      %v409 = vmax.f32 %v389, 0.0
      %v410 = vmax.f32 %v390, 0.0
      %v411 = vmax.f32 %v391, 0.0
      %v412 = vmax.f32 %v392, 0.0
      %v413 = vmax.f32 %v393, 0.0
      %v414 = vmax.f32 %v394, 0.0
      %v415 = vmax.f32 %v395, 0.0
      %v416 = vld [vmem:[%s4] sm:$0xff]
      %v417 = vld [vmem:[%s4 + $0x8] sm:$0x3]
      %v418 = vld [vmem:[%s4 + $0x10] sm:$0xff]
      %v419 = vld [vmem:[%s4 + $0x18] sm:$0x3]
      %v420 = vld [vmem:[%s4 + $0x20] sm:$0xff]
      %v421 = vld [vmem:[%s4 + $0x28] sm:$0x3]
      %v422 = vld [vmem:[%s4 + $0x30] sm:$0xff]
      %v423 = vld [vmem:[%s4 + $0x38] sm:$0x3]
      %v424 = vld [vmem:[%s4 + $0x40] sm:$0xff]
      %v425 = vld [vmem:[%s4 + $0x48] sm:$0x3]
      %v426 = vld [vmem:[%s4 + $0x50] sm:$0xff]
      %v427 = vld [vmem:[%s4 + $0x58] sm:$0x3]
      %v428 = vld [vmem:[%s4 + $0x60] sm:$0xff]
      %v429 = vld [vmem:[%s4 + $0x68] sm:$0x3]
      %v430 = vld [vmem:[%s4 + $0x70] sm:$0xff]
      %v431 = vld [vmem:[%s4 + $0x78] sm:$0x3]
      %v432 = vld [vmem:[%s4 + $0x80] sm:$0xff]
      %v433 = vld [vmem:[%s4 + $0x88] sm:$0x3]
      %v434 = vld [vmem:[%s4 + $0x90] sm:$0xff]
      %v435 = vld [vmem:[%s4 + $0x98] sm:$0x3]
      %437 = vset.pattern.permute.xlu0 0
      %438 = vperm.xlu0 %437, %v416
      %v439 = vpop.permute.xlu0 %438
      %442 = vset.pattern.permute.xlu0 0
      %443 = vperm.xlu0 %442, %v417
      %v444 = vpop.permute.xlu0 %443
      %447 = vset.pattern.permute.xlu0 0
      %448 = vperm.xlu0 %447, %v418
      %v449 = vpop.permute.xlu0 %448
      %452 = vset.pattern.permute.xlu0 0
      %453 = vperm.xlu0 %452, %v419
      %v454 = vpop.permute.xlu0 %453
      %457 = vset.pattern.permute.xlu0 0
      %458 = vperm.xlu0 %457, %v420
      %v459 = vpop.permute.xlu0 %458
      %462 = vset.pattern.permute.xlu0 0
      %463 = vperm.xlu0 %462, %v421
      %v464 = vpop.permute.xlu0 %463
      %467 = vset.pattern.permute.xlu0 0
      %468 = vperm.xlu0 %467, %v422
      %v469 = vpop.permute.xlu0 %468
      %472 = vset.pattern.permute.xlu0 0
      %473 = vperm.xlu0 %472, %v423
      %v474 = vpop.permute.xlu0 %473
      %477 = vset.pattern.permute.xlu0 0
      %478 = vperm.xlu0 %477, %v424
      %v479 = vpop.permute.xlu0 %478
      %482 = vset.pattern.permute.xlu0 0
      %483 = vperm.xlu0 %482, %v425
      %v484 = vpop.permute.xlu0 %483
      %487 = vset.pattern.permute.xlu0 0
      %488 = vperm.xlu0 %487, %v426
      %v489 = vpop.permute.xlu0 %488
      %492 = vset.pattern.permute.xlu0 0
      %493 = vperm.xlu0 %492, %v427
      %v494 = vpop.permute.xlu0 %493
      %497 = vset.pattern.permute.xlu0 0
      %498 = vperm.xlu0 %497, %v428
      %v499 = vpop.permute.xlu0 %498
      %502 = vset.pattern.permute.xlu0 0
      %503 = vperm.xlu0 %502, %v429
      %v504 = vpop.permute.xlu0 %503
      %507 = vset.pattern.permute.xlu0 0
      %508 = vperm.xlu0 %507, %v430
      %v509 = vpop.permute.xlu0 %508
      %512 = vset.pattern.permute.xlu0 0
      %513 = vperm.xlu0 %512, %v431
      %v514 = vpop.permute.xlu0 %513
      %517 = vset.pattern.permute.xlu0 0
      %518 = vperm.xlu0 %517, %v432
      %v519 = vpop.permute.xlu0 %518
      %522 = vset.pattern.permute.xlu0 0
      %523 = vperm.xlu0 %522, %v433
      %v524 = vpop.permute.xlu0 %523
      %527 = vset.pattern.permute.xlu0 0
      %528 = vperm.xlu0 %527, %v434
      %v529 = vpop.permute.xlu0 %528
      %532 = vset.pattern.permute.xlu0 0
      %533 = vperm.xlu0 %532, %v435
      %v534 = vpop.permute.xlu0 %533
      %v536 = vmul.f32 %v396, %v439
      %v537 = vmul.f32 %v397, %v444
      %v538 = vmul.f32 %v398, %v449
      %v539 = vmul.f32 %v399, %v454
      %v540 = vmul.f32 %v400, %v459
      %v541 = vmul.f32 %v401, %v464
      %v542 = vmul.f32 %v402, %v469
      %v543 = vmul.f32 %v403, %v474
      %v544 = vmul.f32 %v404, %v479
      %v545 = vmul.f32 %v405, %v484
      %v546 = vmul.f32 %v406, %v489
      %v547 = vmul.f32 %v407, %v494
      %v548 = vmul.f32 %v408, %v499
      %v549 = vmul.f32 %v409, %v504
      %v550 = vmul.f32 %v410, %v509
      %v551 = vmul.f32 %v411, %v514
      %v552 = vmul.f32 %v412, %v519
      %v553 = vmul.f32 %v413, %v524
      %v554 = vmul.f32 %v414, %v529
      %v555 = vmul.f32 %v415, %v534
      %v556 = vpack.c.bf16 %v538, %v536
      %v557 = vpack.c.bf16 %v542, %v540
      %v558 = vpack.c.bf16 %v546, %v544
      %v559 = vpack.c.bf16 %v550, %v548
      %v560 = vld [vmem:[%s1] sm:$0xf]
      %v561 = vld [vmem:[%s1 + $0x4] sm:$0xf]
      %v562 = vld [vmem:[%s1 + $0x8] sm:$0xf]
      %v563 = vld [vmem:[%s1 + $0xc] sm:$0xf]
      %v564 = vld [vmem:[%s1 + $0x10] sm:$0xf]
      %v565 = vld [vmem:[%s1 + $0x14] sm:$0xf]
      %v566 = vld [vmem:[%s1 + $0x18] sm:$0xf]
      %v567 = vld [vmem:[%s1 + $0x1c] sm:$0xf]
      %v568 = vld [vmem:[%s1 + $0x20] sm:$0xf]
      %v569 = vld [vmem:[%s1 + $0x24] sm:$0xf]
      %v570 = vld [vmem:[%s1 + $0x28] sm:$0xf]
      %v571 = vld [vmem:[%s1 + $0x2c] sm:$0xf]
      %v572 = vld [vmem:[%s1 + $0x30] sm:$0xf]
      %v573 = vld [vmem:[%s1 + $0x34] sm:$0xf]
      %v574 = vld [vmem:[%s1 + $0x38] sm:$0xf]
      %v575 = vld [vmem:[%s1 + $0x3c] sm:$0xf]
      %vm592 = vcmask 1046528
      %v593 = vrot.slane %v536, 1
      %v594 = vrot.slane %v537, 1
      %v595 = vsel %vm592, %v593, %v594
      %v596 = vrot.slane %v538, 1
      %v597 = vrot.slane %v539, 1
      %v598 = vsel %vm592, %v596, %v597
      %v599 = vrot.slane %v540, 1
      %v600 = vrot.slane %v541, 1
      %v601 = vsel %vm592, %v599, %v600
      %v602 = vrot.slane %v542, 1
      %v603 = vrot.slane %v543, 1
      %v604 = vsel %vm592, %v602, %v603
      %v605 = vrot.slane %v544, 1
      %v606 = vrot.slane %v545, 1
      %v607 = vsel %vm592, %v605, %v606
      %v608 = vrot.slane %v546, 1
      %v609 = vrot.slane %v547, 1
      %v610 = vsel %vm592, %v608, %v609
      %v611 = vrot.slane %v548, 1
      %v612 = vrot.slane %v549, 1
      %v613 = vsel %vm592, %v611, %v612
      %v614 = vrot.slane %v550, 1
      %v615 = vrot.slane %v551, 1
      %v616 = vsel %vm592, %v614, %v615
      %v625 = vpack.c.bf16 %v598, %v595
      %v626 = vpack.c.bf16 %v604, %v601
      %v627 = vpack.c.bf16 %v610, %v607
      %v628 = vpack.c.bf16 %v616, %v613
      %s629 = scalar_lea.vmem %s1, 64
      %v630 = vld [vmem:[%s629] sm:$0xf]
      %v631 = vld [vmem:[%s629 + $0x4] sm:$0xf]
      %v632 = vld [vmem:[%s629 + $0x8] sm:$0xf]
      %v633 = vld [vmem:[%s629 + $0xc] sm:$0xf]
      %v634 = vld [vmem:[%s629 + $0x10] sm:$0xf]
      %v635 = vld [vmem:[%s629 + $0x14] sm:$0xf]
      %v636 = vld [vmem:[%s629 + $0x18] sm:$0xf]
      %v637 = vld [vmem:[%s629 + $0x1c] sm:$0xf]
      %v638 = vld [vmem:[%s629 + $0x20] sm:$0xf]
      %v639 = vld [vmem:[%s629 + $0x24] sm:$0xf]
      %v640 = vld [vmem:[%s629 + $0x28] sm:$0xf]
      %v641 = vld [vmem:[%s629 + $0x2c] sm:$0xf]
      %v642 = vld [vmem:[%s629 + $0x30] sm:$0xf]
      %v643 = vld [vmem:[%s629 + $0x34] sm:$0xf]
      %v644 = vld [vmem:[%s629 + $0x38] sm:$0xf]
      %v645 = vld [vmem:[%s629 + $0x3c] sm:$0xf]
      %v662 = vunpack.c.l.b16 %v630
      %v663 = vunpack.c.l.b16 %v631
      %v664 = vunpack.c.l.b16 %v632
      %v665 = vunpack.c.l.b16 %v633
      %v666 = vunpack.c.l.b16 %v634
      %v667 = vunpack.c.l.b16 %v635
      %v668 = vunpack.c.l.b16 %v636
      %v669 = vunpack.c.l.b16 %v637
      %v670 = vunpack.c.l.b16 %v638
      %v671 = vunpack.c.l.b16 %v639
      %v672 = vunpack.c.l.b16 %v640
      %v673 = vunpack.c.l.b16 %v641
      %v674 = vunpack.c.l.b16 %v642
      %v675 = vunpack.c.l.b16 %v643
      %v676 = vunpack.c.l.b16 %v644
      %v677 = vunpack.c.l.b16 %v645
      %v678 = vpack.c.b16 %v663, %v662
      %v679 = vpack.c.b16 %v665, %v664
      %v680 = vpack.c.b16 %v667, %v666
      %v681 = vpack.c.b16 %v669, %v668
      %v682 = vpack.c.b16 %v671, %v670
      %v683 = vpack.c.b16 %v673, %v672
      %v684 = vpack.c.b16 %v675, %v674
      %v685 = vpack.c.b16 %v677, %v676
      %694 = vmatprep.subr.bf16.mxu0 0
      %695 = vmatpush1.bf16.msra.mxu0 %v685
      %696 = vmatprep.subr.bf16.mxu0 0
      %697 = vmatpush1.bf16.msra.mxu0 %v684
      %698 = vmatprep.subr.bf16.mxu0 0
      %699 = vmatpush1.bf16.msra.mxu0 %v683
      %700 = vmatprep.subr.bf16.mxu0 0
      %701 = vmatpush1.bf16.msra.mxu0 %v682
      %702 = vmatprep.subr.bf16.mxu0 0
      %703 = vmatpush1.bf16.msra.mxu0 %v681
      %704 = vmatprep.subr.bf16.mxu0 0
      %705 = vmatpush1.bf16.msra.mxu0 %v680
      %706 = vmatprep.subr.bf16.mxu0 0
      %707 = vmatpush1.bf16.msra.mxu0 %v679
      %708 = vmatprep.subr.bf16.mxu0 0
      %709 = vmatpush1.bf16.msra.mxu0 %v678
      %710 = vmatprep.subr.bf16.mxu0 0
      %711 = vmatpush2.bf16.msra.mxu0 0
      %712 = vmatprep.subr.bf16.mxu0 0
      %713 = vmatpush2.bf16.msra.mxu0 0
      %714 = vmatprep.subr.bf16.mxu0 0
      %715 = vmatpush2.bf16.msra.mxu0 0
      %716 = vmatprep.subr.bf16.mxu0 0
      %717 = vmatpush2.bf16.msra.mxu0 0
      %718 = vmatprep.subr.bf16.mxu0 0
      %719 = vmatpush2.bf16.msra.mxu0 0
      %720 = vmatprep.subr.bf16.mxu0 0
      %721 = vmatpush2.bf16.msra.mxu0 0
      %722 = vmatprep.subr.bf16.mxu0 0
      %723 = vmatpush2.bf16.msra.mxu0 0
      %724 = vmatprep.subr.bf16.mxu0 0
      %725 = vmatpush2.bf16.msra.mxu0 0
      %726 = vmatprep.mubr.bf16.mxu0 0
      %727 = vmatmul.mubr.bf16.gmra.mxu0 %v625
      %v728 = vpop.f32.mrf.mxu0
      %v729 = vadd.f32 0.0, %v728
      %v730 = vpop.f32.mrf.mxu0
      %v731 = vpop.f32.mrf.mxu0
      %v732 = vadd.f32 0.0, %v731
      %v733 = vpop.f32.mrf.mxu0
      %734 = vmatprep.mubr.bf16.mxu0 0
      %735 = vmatmul.mubr.bf16.gmra.mxu0 %v626
      %v736 = vpop.f32.mrf.mxu0
      %v737 = vadd.f32 0.0, %v736
      %v738 = vpop.f32.mrf.mxu0
      %v739 = vpop.f32.mrf.mxu0
      %v740 = vadd.f32 0.0, %v739
      %v741 = vpop.f32.mrf.mxu0
      %742 = vmatprep.mubr.bf16.mxu0 0
      %743 = vmatmul.mubr.bf16.gmra.mxu0 %v627
      %v744 = vpop.f32.mrf.mxu0
      %v745 = vadd.f32 0.0, %v744
      %v746 = vpop.f32.mrf.mxu0
      %v747 = vpop.f32.mrf.mxu0
      %v748 = vadd.f32 0.0, %v747
      %v749 = vpop.f32.mrf.mxu0
      %750 = vmatprep.mubr.bf16.mxu0 0
      %751 = vmatmul.mubr.bf16.gmra.mxu0 %v628
      %v752 = vpop.f32.mrf.mxu0
      %v753 = vadd.f32 0.0, %v752
      %v754 = vpop.f32.mrf.mxu0
      %v755 = vpop.f32.mrf.mxu0
      %v756 = vadd.f32 0.0, %v755
      %v757 = vpop.f32.mrf.mxu0
      %758 = vdwg.mxu0
      %v775 = vunpack.c.l.b16 %v560
      %v776 = vunpack.c.l.b16 %v561
      %v777 = vunpack.c.l.b16 %v562
      %v778 = vunpack.c.l.b16 %v563
      %v779 = vunpack.c.l.b16 %v564
      %v780 = vunpack.c.l.b16 %v565
      %v781 = vunpack.c.l.b16 %v566
      %v782 = vunpack.c.l.b16 %v567
      %v783 = vunpack.c.l.b16 %v568
      %v784 = vunpack.c.l.b16 %v569
      %v785 = vunpack.c.l.b16 %v570
      %v786 = vunpack.c.l.b16 %v571
      %v787 = vunpack.c.l.b16 %v572
      %v788 = vunpack.c.l.b16 %v573
      %v789 = vunpack.c.l.b16 %v574
      %v790 = vunpack.c.l.b16 %v575
      %v791 = vpack.c.b16 %v776, %v775
      %v792 = vpack.c.b16 %v778, %v777
      %v793 = vpack.c.b16 %v780, %v779
      %v794 = vpack.c.b16 %v782, %v781
      %v795 = vpack.c.b16 %v784, %v783
      %v796 = vpack.c.b16 %v786, %v785
      %v797 = vpack.c.b16 %v788, %v787
      %v798 = vpack.c.b16 %v790, %v789
      %807 = vmatprep.subr.bf16.mxu0 0
      %808 = vmatpush1.bf16.msra.mxu0 %v798
      %809 = vmatprep.subr.bf16.mxu0 0
      %810 = vmatpush1.bf16.msra.mxu0 %v797
      %811 = vmatprep.subr.bf16.mxu0 0
      %812 = vmatpush1.bf16.msra.mxu0 %v796
      %813 = vmatprep.subr.bf16.mxu0 0
      %814 = vmatpush1.bf16.msra.mxu0 %v795
      %815 = vmatprep.subr.bf16.mxu0 0
      %816 = vmatpush1.bf16.msra.mxu0 %v794
      %817 = vmatprep.subr.bf16.mxu0 0
      %818 = vmatpush1.bf16.msra.mxu0 %v793
      %819 = vmatprep.subr.bf16.mxu0 0
      %820 = vmatpush1.bf16.msra.mxu0 %v792
      %821 = vmatprep.subr.bf16.mxu0 0
      %822 = vmatpush1.bf16.msra.mxu0 %v791
      %823 = vmatprep.subr.bf16.mxu0 0
      %824 = vmatpush2.bf16.msra.mxu0 0
      %825 = vmatprep.subr.bf16.mxu0 0
      %826 = vmatpush2.bf16.msra.mxu0 0
      %827 = vmatprep.subr.bf16.mxu0 0
      %828 = vmatpush2.bf16.msra.mxu0 0
      %829 = vmatprep.subr.bf16.mxu0 0
      %830 = vmatpush2.bf16.msra.mxu0 0
      %831 = vmatprep.subr.bf16.mxu0 0
      %832 = vmatpush2.bf16.msra.mxu0 0
      %833 = vmatprep.subr.bf16.mxu0 0
      %834 = vmatpush2.bf16.msra.mxu0 0
      %835 = vmatprep.subr.bf16.mxu0 0
      %836 = vmatpush2.bf16.msra.mxu0 0
      %837 = vmatprep.subr.bf16.mxu0 0
      %838 = vmatpush2.bf16.msra.mxu0 0
      %839 = vmatprep.mubr.bf16.mxu0 0
      %840 = vmatmul.mubr.bf16.gmra.mxu0 %v556
      %v841 = vpop.f32.mrf.mxu0
      %v842 = vadd.f32 %v729, %v841
      %v843 = vpop.f32.mrf.mxu0
      %v844 = vpop.f32.mrf.mxu0
      %v845 = vadd.f32 %v732, %v844
      %v846 = vpop.f32.mrf.mxu0
      %847 = vmatprep.mubr.bf16.mxu0 0
      %848 = vmatmul.mubr.bf16.gmra.mxu0 %v557
      %v849 = vpop.f32.mrf.mxu0
      %v850 = vadd.f32 %v737, %v849
      %v851 = vpop.f32.mrf.mxu0
      %v852 = vpop.f32.mrf.mxu0
      %v853 = vadd.f32 %v740, %v852
      %v854 = vpop.f32.mrf.mxu0
      %855 = vmatprep.mubr.bf16.mxu0 0
      %856 = vmatmul.mubr.bf16.gmra.mxu0 %v558
      %v857 = vpop.f32.mrf.mxu0
      %v858 = vadd.f32 %v745, %v857
      %v859 = vpop.f32.mrf.mxu0
      %v860 = vpop.f32.mrf.mxu0
      %v861 = vadd.f32 %v748, %v860
      %v862 = vpop.f32.mrf.mxu0
      %863 = vmatprep.mubr.bf16.mxu0 0
      %864 = vmatmul.mubr.bf16.gmra.mxu0 %v559
      %v865 = vpop.f32.mrf.mxu0
      %v866 = vadd.f32 %v753, %v865
      %v867 = vpop.f32.mrf.mxu0
      %v868 = vpop.f32.mrf.mxu0
      %v869 = vadd.f32 %v756, %v868
      %v870 = vpop.f32.mrf.mxu0
      %871 = vdwg.mxu0
      %vm872 = vcmask 1045504
      %v873 = vrot.slane %v536, 2
      %v874 = vrot.slane %v537, 2
      %v875 = vsel %vm872, %v873, %v874
      %v876 = vrot.slane %v538, 2
      %v877 = vrot.slane %v539, 2
      %v878 = vsel %vm872, %v876, %v877
      %v879 = vrot.slane %v540, 2
      %v880 = vrot.slane %v541, 2
      %v881 = vsel %vm872, %v879, %v880
      %v882 = vrot.slane %v542, 2
      %v883 = vrot.slane %v543, 2
      %v884 = vsel %vm872, %v882, %v883
      %v885 = vrot.slane %v544, 2
      %v886 = vrot.slane %v545, 2
      %v887 = vsel %vm872, %v885, %v886
      %v888 = vrot.slane %v546, 2
      %v889 = vrot.slane %v547, 2
      %v890 = vsel %vm872, %v888, %v889
      %v891 = vrot.slane %v548, 2
      %v892 = vrot.slane %v549, 2
      %v893 = vsel %vm872, %v891, %v892
      %v894 = vrot.slane %v550, 2
      %v895 = vrot.slane %v551, 2
      %v896 = vsel %vm872, %v894, %v895
      %v905 = vpack.c.bf16 %v878, %v875
      %v906 = vpack.c.bf16 %v884, %v881
      %v907 = vpack.c.bf16 %v890, %v887
      %v908 = vpack.c.bf16 %v896, %v893
      %s909 = scalar_lea.vmem %s1, 128
      %v910 = vld [vmem:[%s909] sm:$0xf]
      %v911 = vld [vmem:[%s909 + $0x4] sm:$0xf]
      %v912 = vld [vmem:[%s909 + $0x8] sm:$0xf]
      %v913 = vld [vmem:[%s909 + $0xc] sm:$0xf]
      %v914 = vld [vmem:[%s909 + $0x10] sm:$0xf]
      %v915 = vld [vmem:[%s909 + $0x14] sm:$0xf]
      %v916 = vld [vmem:[%s909 + $0x18] sm:$0xf]
      %v917 = vld [vmem:[%s909 + $0x1c] sm:$0xf]
      %v918 = vld [vmem:[%s909 + $0x20] sm:$0xf]
      %v919 = vld [vmem:[%s909 + $0x24] sm:$0xf]
      %v920 = vld [vmem:[%s909 + $0x28] sm:$0xf]
      %v921 = vld [vmem:[%s909 + $0x2c] sm:$0xf]
      %v922 = vld [vmem:[%s909 + $0x30] sm:$0xf]
      %v923 = vld [vmem:[%s909 + $0x34] sm:$0xf]
      %v924 = vld [vmem:[%s909 + $0x38] sm:$0xf]
      %v925 = vld [vmem:[%s909 + $0x3c] sm:$0xf]
      %v942 = vunpack.c.l.b16 %v910
      %v943 = vunpack.c.l.b16 %v911
      %v944 = vunpack.c.l.b16 %v912
      %v945 = vunpack.c.l.b16 %v913
      %v946 = vunpack.c.l.b16 %v914
      %v947 = vunpack.c.l.b16 %v915
      %v948 = vunpack.c.l.b16 %v916
      %v949 = vunpack.c.l.b16 %v917
      %v950 = vunpack.c.l.b16 %v918
      %v951 = vunpack.c.l.b16 %v919
      %v952 = vunpack.c.l.b16 %v920
      %v953 = vunpack.c.l.b16 %v921
      %v954 = vunpack.c.l.b16 %v922
      %v955 = vunpack.c.l.b16 %v923
      %v956 = vunpack.c.l.b16 %v924
      %v957 = vunpack.c.l.b16 %v925
      %v958 = vpack.c.b16 %v943, %v942
      %v959 = vpack.c.b16 %v945, %v944
      %v960 = vpack.c.b16 %v947, %v946
      %v961 = vpack.c.b16 %v949, %v948
      %v962 = vpack.c.b16 %v951, %v950
      %v963 = vpack.c.b16 %v953, %v952
      %v964 = vpack.c.b16 %v955, %v954
      %v965 = vpack.c.b16 %v957, %v956
      %974 = vmatprep.subr.bf16.mxu0 0
      %975 = vmatpush1.bf16.msra.mxu0 %v965
      %976 = vmatprep.subr.bf16.mxu0 0
      %977 = vmatpush1.bf16.msra.mxu0 %v964
      %978 = vmatprep.subr.bf16.mxu0 0
      %979 = vmatpush1.bf16.msra.mxu0 %v963
      %980 = vmatprep.subr.bf16.mxu0 0
      %981 = vmatpush1.bf16.msra.mxu0 %v962
      %982 = vmatprep.subr.bf16.mxu0 0
      %983 = vmatpush1.bf16.msra.mxu0 %v961
      %984 = vmatprep.subr.bf16.mxu0 0
      %985 = vmatpush1.bf16.msra.mxu0 %v960
      %986 = vmatprep.subr.bf16.mxu0 0
      %987 = vmatpush1.bf16.msra.mxu0 %v959
      %988 = vmatprep.subr.bf16.mxu0 0
      %989 = vmatpush1.bf16.msra.mxu0 %v958
      %990 = vmatprep.subr.bf16.mxu0 0
      %991 = vmatpush2.bf16.msra.mxu0 0
      %992 = vmatprep.subr.bf16.mxu0 0
      %993 = vmatpush2.bf16.msra.mxu0 0
      %994 = vmatprep.subr.bf16.mxu0 0
      %995 = vmatpush2.bf16.msra.mxu0 0
      %996 = vmatprep.subr.bf16.mxu0 0
      %997 = vmatpush2.bf16.msra.mxu0 0
      %998 = vmatprep.subr.bf16.mxu0 0
      %999 = vmatpush2.bf16.msra.mxu0 0
      %1000 = vmatprep.subr.bf16.mxu0 0
      %1001 = vmatpush2.bf16.msra.mxu0 0
      %1002 = vmatprep.subr.bf16.mxu0 0
      %1003 = vmatpush2.bf16.msra.mxu0 0
      %1004 = vmatprep.subr.bf16.mxu0 0
      %1005 = vmatpush2.bf16.msra.mxu0 0
      %1006 = vmatprep.mubr.bf16.mxu0 0
      %1007 = vmatmul.mubr.bf16.gmra.mxu0 %v905
      %v1008 = vpop.f32.mrf.mxu0
      %v1009 = vadd.f32 0.0, %v1008
      %v1010 = vpop.f32.mrf.mxu0
      %v1011 = vpop.f32.mrf.mxu0
      %v1012 = vadd.f32 0.0, %v1011
      %v1013 = vpop.f32.mrf.mxu0
      %1014 = vmatprep.mubr.bf16.mxu0 0
      %1015 = vmatmul.mubr.bf16.gmra.mxu0 %v906
      %v1016 = vpop.f32.mrf.mxu0
      %v1017 = vadd.f32 0.0, %v1016
      %v1018 = vpop.f32.mrf.mxu0
      %v1019 = vpop.f32.mrf.mxu0
      %v1020 = vadd.f32 0.0, %v1019
      %v1021 = vpop.f32.mrf.mxu0
      %1022 = vmatprep.mubr.bf16.mxu0 0
      %1023 = vmatmul.mubr.bf16.gmra.mxu0 %v907
      %v1024 = vpop.f32.mrf.mxu0
      %v1025 = vadd.f32 0.0, %v1024
      %v1026 = vpop.f32.mrf.mxu0
      %v1027 = vpop.f32.mrf.mxu0
      %v1028 = vadd.f32 0.0, %v1027
      %v1029 = vpop.f32.mrf.mxu0
      %1030 = vmatprep.mubr.bf16.mxu0 0
      %1031 = vmatmul.mubr.bf16.gmra.mxu0 %v908
      %v1032 = vpop.f32.mrf.mxu0
      %v1033 = vadd.f32 0.0, %v1032
      %v1034 = vpop.f32.mrf.mxu0
      %v1035 = vpop.f32.mrf.mxu0
      %v1036 = vadd.f32 0.0, %v1035
      %v1037 = vpop.f32.mrf.mxu0
      %1038 = vdwg.mxu0
      %v1039 = vadd.f32 %v842, %v1009
      %v1040 = vadd.f32 %v845, %v1012
      %v1041 = vadd.f32 %v850, %v1017
      %v1042 = vadd.f32 %v853, %v1020
      %v1043 = vadd.f32 %v858, %v1025
      %v1044 = vadd.f32 %v861, %v1028
      %v1045 = vadd.f32 %v866, %v1033
      %v1046 = vadd.f32 %v869, %v1036
      %v1047 = vpack.c.bf16 %v540, %v538
      %v1048 = vpack.c.bf16 %v544, %v542
      %v1049 = vpack.c.bf16 %v548, %v546
      %v1050 = vpack.c.bf16 %v552, %v550
      %s1051 = scalar_lea.vmem %s1, 192
      %v1052 = vld [vmem:[%s1051] sm:$0xf]
      %v1053 = vld [vmem:[%s1051 + $0x4] sm:$0xf]
      %v1054 = vld [vmem:[%s1051 + $0x8] sm:$0xf]
      %v1055 = vld [vmem:[%s1051 + $0xc] sm:$0xf]
      %v1056 = vld [vmem:[%s1051 + $0x10] sm:$0xf]
      %v1057 = vld [vmem:[%s1051 + $0x14] sm:$0xf]
      %v1058 = vld [vmem:[%s1051 + $0x18] sm:$0xf]
      %v1059 = vld [vmem:[%s1051 + $0x1c] sm:$0xf]
      %v1060 = vld [vmem:[%s1051 + $0x20] sm:$0xf]
      %v1061 = vld [vmem:[%s1051 + $0x24] sm:$0xf]
      %v1062 = vld [vmem:[%s1051 + $0x28] sm:$0xf]
      %v1063 = vld [vmem:[%s1051 + $0x2c] sm:$0xf]
      %v1064 = vld [vmem:[%s1051 + $0x30] sm:$0xf]
      %v1065 = vld [vmem:[%s1051 + $0x34] sm:$0xf]
      %v1066 = vld [vmem:[%s1051 + $0x38] sm:$0xf]
      %v1067 = vld [vmem:[%s1051 + $0x3c] sm:$0xf]
      %v1084 = vunpack.c.l.b16 %v1052
      %v1085 = vunpack.c.l.b16 %v1053
      %v1086 = vunpack.c.l.b16 %v1054
      %v1087 = vunpack.c.l.b16 %v1055
      %v1088 = vunpack.c.l.b16 %v1056
      %v1089 = vunpack.c.l.b16 %v1057
      %v1090 = vunpack.c.l.b16 %v1058
      %v1091 = vunpack.c.l.b16 %v1059
      %v1092 = vunpack.c.l.b16 %v1060
      %v1093 = vunpack.c.l.b16 %v1061
      %v1094 = vunpack.c.l.b16 %v1062
      %v1095 = vunpack.c.l.b16 %v1063
      %v1096 = vunpack.c.l.b16 %v1064
      %v1097 = vunpack.c.l.b16 %v1065
      %v1098 = vunpack.c.l.b16 %v1066
      %v1099 = vunpack.c.l.b16 %v1067
      %v1100 = vpack.c.b16 %v1085, %v1084
      %v1101 = vpack.c.b16 %v1087, %v1086
      %v1102 = vpack.c.b16 %v1089, %v1088
      %v1103 = vpack.c.b16 %v1091, %v1090
      %v1104 = vpack.c.b16 %v1093, %v1092
      %v1105 = vpack.c.b16 %v1095, %v1094
      %v1106 = vpack.c.b16 %v1097, %v1096
      %v1107 = vpack.c.b16 %v1099, %v1098
      %1116 = vmatprep.subr.bf16.mxu0 0
      %1117 = vmatpush1.bf16.msra.mxu0 %v1107
      %1118 = vmatprep.subr.bf16.mxu0 0
      %1119 = vmatpush1.bf16.msra.mxu0 %v1106
      %1120 = vmatprep.subr.bf16.mxu0 0
      %1121 = vmatpush1.bf16.msra.mxu0 %v1105
      %1122 = vmatprep.subr.bf16.mxu0 0
      %1123 = vmatpush1.bf16.msra.mxu0 %v1104
      %1124 = vmatprep.subr.bf16.mxu0 0
      %1125 = vmatpush1.bf16.msra.mxu0 %v1103
      %1126 = vmatprep.subr.bf16.mxu0 0
      %1127 = vmatpush1.bf16.msra.mxu0 %v1102
      %1128 = vmatprep.subr.bf16.mxu0 0
      %1129 = vmatpush1.bf16.msra.mxu0 %v1101
      %1130 = vmatprep.subr.bf16.mxu0 0
      %1131 = vmatpush1.bf16.msra.mxu0 %v1100
      %1132 = vmatprep.subr.bf16.mxu0 0
      %1133 = vmatpush2.bf16.msra.mxu0 0
      %1134 = vmatprep.subr.bf16.mxu0 0
      %1135 = vmatpush2.bf16.msra.mxu0 0
      %1136 = vmatprep.subr.bf16.mxu0 0
      %1137 = vmatpush2.bf16.msra.mxu0 0
      %1138 = vmatprep.subr.bf16.mxu0 0
      %1139 = vmatpush2.bf16.msra.mxu0 0
      %1140 = vmatprep.subr.bf16.mxu0 0
      %1141 = vmatpush2.bf16.msra.mxu0 0
      %1142 = vmatprep.subr.bf16.mxu0 0
      %1143 = vmatpush2.bf16.msra.mxu0 0
      %1144 = vmatprep.subr.bf16.mxu0 0
      %1145 = vmatpush2.bf16.msra.mxu0 0
      %1146 = vmatprep.subr.bf16.mxu0 0
      %1147 = vmatpush2.bf16.msra.mxu0 0
      %1148 = vmatprep.mubr.bf16.mxu0 0
      %1149 = vmatmul.mubr.bf16.gmra.mxu0 %v1047
      %v1150 = vpop.f32.mrf.mxu0
      %v1151 = vadd.f32 0.0, %v1150
      %v1152 = vpop.f32.mrf.mxu0
      %v1153 = vpop.f32.mrf.mxu0
      %v1154 = vadd.f32 0.0, %v1153
      %v1155 = vpop.f32.mrf.mxu0
      %1156 = vmatprep.mubr.bf16.mxu0 0
      %1157 = vmatmul.mubr.bf16.gmra.mxu0 %v1048
      %v1158 = vpop.f32.mrf.mxu0
      %v1159 = vadd.f32 0.0, %v1158
      %v1160 = vpop.f32.mrf.mxu0
      %v1161 = vpop.f32.mrf.mxu0
      %v1162 = vadd.f32 0.0, %v1161
      %v1163 = vpop.f32.mrf.mxu0
      %1164 = vmatprep.mubr.bf16.mxu0 0
      %1165 = vmatmul.mubr.bf16.gmra.mxu0 %v1049
      %v1166 = vpop.f32.mrf.mxu0
      %v1167 = vadd.f32 0.0, %v1166
      %v1168 = vpop.f32.mrf.mxu0
      %v1169 = vpop.f32.mrf.mxu0
      %v1170 = vadd.f32 0.0, %v1169
      %v1171 = vpop.f32.mrf.mxu0
      %1172 = vmatprep.mubr.bf16.mxu0 0
      %1173 = vmatmul.mubr.bf16.gmra.mxu0 %v1050
      %v1174 = vpop.f32.mrf.mxu0
      %v1175 = vadd.f32 0.0, %v1174
      %v1176 = vpop.f32.mrf.mxu0
      %v1177 = vpop.f32.mrf.mxu0
      %v1178 = vadd.f32 0.0, %v1177
      %v1179 = vpop.f32.mrf.mxu0
      %1180 = vdwg.mxu0
      %v1181 = vadd.f32 %v1039, %v1151
      %v1182 = vadd.f32 %v1040, %v1154
      %v1183 = vadd.f32 %v1041, %v1159
      %v1184 = vadd.f32 %v1042, %v1162
      %v1185 = vadd.f32 %v1043, %v1167
      %v1186 = vadd.f32 %v1044, %v1170
      %v1187 = vadd.f32 %v1045, %v1175
      %v1188 = vadd.f32 %v1046, %v1178
      %v1191 = vrot.slane %v552, 1
      %v1192 = vrot.slane %v553, 1
      %v1193 = vsel %vm592, %v1191, %v1192
      %v1195 = vpack.c.bf16 %v601, %v598
      %v1196 = vpack.c.bf16 %v607, %v604
      %v1197 = vpack.c.bf16 %v613, %v610
      %v1198 = vpack.c.bf16 %v1193, %v616
      %s1199 = scalar_lea.vmem %s1, 256
      %v1200 = vld [vmem:[%s1199] sm:$0xf]
      %v1201 = vld [vmem:[%s1199 + $0x4] sm:$0xf]
      %v1202 = vld [vmem:[%s1199 + $0x8] sm:$0xf]
      %v1203 = vld [vmem:[%s1199 + $0xc] sm:$0xf]
      %v1204 = vld [vmem:[%s1199 + $0x10] sm:$0xf]
      %v1205 = vld [vmem:[%s1199 + $0x14] sm:$0xf]
      %v1206 = vld [vmem:[%s1199 + $0x18] sm:$0xf]
      %v1207 = vld [vmem:[%s1199 + $0x1c] sm:$0xf]
      %v1208 = vld [vmem:[%s1199 + $0x20] sm:$0xf]
      %v1209 = vld [vmem:[%s1199 + $0x24] sm:$0xf]
      %v1210 = vld [vmem:[%s1199 + $0x28] sm:$0xf]
      %v1211 = vld [vmem:[%s1199 + $0x2c] sm:$0xf]
      %v1212 = vld [vmem:[%s1199 + $0x30] sm:$0xf]
      %v1213 = vld [vmem:[%s1199 + $0x34] sm:$0xf]
      %v1214 = vld [vmem:[%s1199 + $0x38] sm:$0xf]
      %v1215 = vld [vmem:[%s1199 + $0x3c] sm:$0xf]
      %v1232 = vunpack.c.l.b16 %v1200
      %v1233 = vunpack.c.l.b16 %v1201
      %v1234 = vunpack.c.l.b16 %v1202
      %v1235 = vunpack.c.l.b16 %v1203
      %v1236 = vunpack.c.l.b16 %v1204
      %v1237 = vunpack.c.l.b16 %v1205
      %v1238 = vunpack.c.l.b16 %v1206
      %v1239 = vunpack.c.l.b16 %v1207
      %v1240 = vunpack.c.l.b16 %v1208
      %v1241 = vunpack.c.l.b16 %v1209
      %v1242 = vunpack.c.l.b16 %v1210
      %v1243 = vunpack.c.l.b16 %v1211
      %v1244 = vunpack.c.l.b16 %v1212
      %v1245 = vunpack.c.l.b16 %v1213
      %v1246 = vunpack.c.l.b16 %v1214
      %v1247 = vunpack.c.l.b16 %v1215
      %v1248 = vpack.c.b16 %v1233, %v1232
      %v1249 = vpack.c.b16 %v1235, %v1234
      %v1250 = vpack.c.b16 %v1237, %v1236
      %v1251 = vpack.c.b16 %v1239, %v1238
      %v1252 = vpack.c.b16 %v1241, %v1240
      %v1253 = vpack.c.b16 %v1243, %v1242
      %v1254 = vpack.c.b16 %v1245, %v1244
      %v1255 = vpack.c.b16 %v1247, %v1246
      %1264 = vmatprep.subr.bf16.mxu0 0
      %1265 = vmatpush1.bf16.msra.mxu0 %v1255
      %1266 = vmatprep.subr.bf16.mxu0 0
      %1267 = vmatpush1.bf16.msra.mxu0 %v1254
      %1268 = vmatprep.subr.bf16.mxu0 0
      %1269 = vmatpush1.bf16.msra.mxu0 %v1253
      %1270 = vmatprep.subr.bf16.mxu0 0
      %1271 = vmatpush1.bf16.msra.mxu0 %v1252
      %1272 = vmatprep.subr.bf16.mxu0 0
      %1273 = vmatpush1.bf16.msra.mxu0 %v1251
      %1274 = vmatprep.subr.bf16.mxu0 0
      %1275 = vmatpush1.bf16.msra.mxu0 %v1250
      %1276 = vmatprep.subr.bf16.mxu0 0
      %1277 = vmatpush1.bf16.msra.mxu0 %v1249
      %1278 = vmatprep.subr.bf16.mxu0 0
      %1279 = vmatpush1.bf16.msra.mxu0 %v1248
      %1280 = vmatprep.subr.bf16.mxu0 0
      %1281 = vmatpush2.bf16.msra.mxu0 0
      %1282 = vmatprep.subr.bf16.mxu0 0
      %1283 = vmatpush2.bf16.msra.mxu0 0
      %1284 = vmatprep.subr.bf16.mxu0 0
      %1285 = vmatpush2.bf16.msra.mxu0 0
      %1286 = vmatprep.subr.bf16.mxu0 0
      %1287 = vmatpush2.bf16.msra.mxu0 0
      %1288 = vmatprep.subr.bf16.mxu0 0
      %1289 = vmatpush2.bf16.msra.mxu0 0
      %1290 = vmatprep.subr.bf16.mxu0 0
      %1291 = vmatpush2.bf16.msra.mxu0 0
      %1292 = vmatprep.subr.bf16.mxu0 0
      %1293 = vmatpush2.bf16.msra.mxu0 0
      %1294 = vmatprep.subr.bf16.mxu0 0
      %1295 = vmatpush2.bf16.msra.mxu0 0
      %1296 = vmatprep.mubr.bf16.mxu0 0
      %1297 = vmatmul.mubr.bf16.gmra.mxu0 %v1195
      %v1298 = vpop.f32.mrf.mxu0
      %v1299 = vadd.f32 0.0, %v1298
      %v1300 = vpop.f32.mrf.mxu0
      %v1301 = vpop.f32.mrf.mxu0
      %v1302 = vadd.f32 0.0, %v1301
      %v1303 = vpop.f32.mrf.mxu0
      %1304 = vmatprep.mubr.bf16.mxu0 0
      %1305 = vmatmul.mubr.bf16.gmra.mxu0 %v1196
      %v1306 = vpop.f32.mrf.mxu0
      %v1307 = vadd.f32 0.0, %v1306
      %v1308 = vpop.f32.mrf.mxu0
      %v1309 = vpop.f32.mrf.mxu0
      %v1310 = vadd.f32 0.0, %v1309
      %v1311 = vpop.f32.mrf.mxu0
      %1312 = vmatprep.mubr.bf16.mxu0 0
      %1313 = vmatmul.mubr.bf16.gmra.mxu0 %v1197
      %v1314 = vpop.f32.mrf.mxu0
      %v1315 = vadd.f32 0.0, %v1314
      %v1316 = vpop.f32.mrf.mxu0
      %v1317 = vpop.f32.mrf.mxu0
      %v1318 = vadd.f32 0.0, %v1317
      %v1319 = vpop.f32.mrf.mxu0
      %1320 = vmatprep.mubr.bf16.mxu0 0
      %1321 = vmatmul.mubr.bf16.gmra.mxu0 %v1198
      %v1322 = vpop.f32.mrf.mxu0
      %v1323 = vadd.f32 0.0, %v1322
      %v1324 = vpop.f32.mrf.mxu0
      %v1325 = vpop.f32.mrf.mxu0
      %v1326 = vadd.f32 0.0, %v1325
      %v1327 = vpop.f32.mrf.mxu0
      %1328 = vdwg.mxu0
      %v1329 = vadd.f32 %v1181, %v1299
      %v1330 = vadd.f32 %v1182, %v1302
      %v1331 = vadd.f32 %v1183, %v1307
      %v1332 = vadd.f32 %v1184, %v1310
      %v1333 = vadd.f32 %v1185, %v1315
      %v1334 = vadd.f32 %v1186, %v1318
      %v1335 = vadd.f32 %v1187, %v1323
      %v1336 = vadd.f32 %v1188, %v1326
      %v1337 = vrot.slane %v552, 2
      %v1338 = vrot.slane %v553, 2
      %v1339 = vsel %vm872, %v1337, %v1338
      %v1341 = vpack.c.bf16 %v881, %v878
      %v1342 = vpack.c.bf16 %v887, %v884
      %v1343 = vpack.c.bf16 %v893, %v890
      %v1344 = vpack.c.bf16 %v1339, %v896
      %s1345 = scalar_lea.vmem %s1, 320
      %v1346 = vld [vmem:[%s1345] sm:$0xf]
      %v1347 = vld [vmem:[%s1345 + $0x4] sm:$0xf]
      %v1348 = vld [vmem:[%s1345 + $0x8] sm:$0xf]
      %v1349 = vld [vmem:[%s1345 + $0xc] sm:$0xf]
      %v1350 = vld [vmem:[%s1345 + $0x10] sm:$0xf]
      %v1351 = vld [vmem:[%s1345 + $0x14] sm:$0xf]
      %v1352 = vld [vmem:[%s1345 + $0x18] sm:$0xf]
      %v1353 = vld [vmem:[%s1345 + $0x1c] sm:$0xf]
      %v1354 = vld [vmem:[%s1345 + $0x20] sm:$0xf]
      %v1355 = vld [vmem:[%s1345 + $0x24] sm:$0xf]
      %v1356 = vld [vmem:[%s1345 + $0x28] sm:$0xf]
      %v1357 = vld [vmem:[%s1345 + $0x2c] sm:$0xf]
      %v1358 = vld [vmem:[%s1345 + $0x30] sm:$0xf]
      %v1359 = vld [vmem:[%s1345 + $0x34] sm:$0xf]
      %v1360 = vld [vmem:[%s1345 + $0x38] sm:$0xf]
      %v1361 = vld [vmem:[%s1345 + $0x3c] sm:$0xf]
      %v1378 = vunpack.c.l.b16 %v1346
      %v1379 = vunpack.c.l.b16 %v1347
      %v1380 = vunpack.c.l.b16 %v1348
      %v1381 = vunpack.c.l.b16 %v1349
      %v1382 = vunpack.c.l.b16 %v1350
      %v1383 = vunpack.c.l.b16 %v1351
      %v1384 = vunpack.c.l.b16 %v1352
      %v1385 = vunpack.c.l.b16 %v1353
      %v1386 = vunpack.c.l.b16 %v1354
      %v1387 = vunpack.c.l.b16 %v1355
      %v1388 = vunpack.c.l.b16 %v1356
      %v1389 = vunpack.c.l.b16 %v1357
      %v1390 = vunpack.c.l.b16 %v1358
      %v1391 = vunpack.c.l.b16 %v1359
      %v1392 = vunpack.c.l.b16 %v1360
      %v1393 = vunpack.c.l.b16 %v1361
      %v1394 = vpack.c.b16 %v1379, %v1378
      %v1395 = vpack.c.b16 %v1381, %v1380
      %v1396 = vpack.c.b16 %v1383, %v1382
      %v1397 = vpack.c.b16 %v1385, %v1384
      %v1398 = vpack.c.b16 %v1387, %v1386
      %v1399 = vpack.c.b16 %v1389, %v1388
      %v1400 = vpack.c.b16 %v1391, %v1390
      %v1401 = vpack.c.b16 %v1393, %v1392
      %1410 = vmatprep.subr.bf16.mxu0 0
      %1411 = vmatpush1.bf16.msra.mxu0 %v1401
      %1412 = vmatprep.subr.bf16.mxu0 0
      %1413 = vmatpush1.bf16.msra.mxu0 %v1400
      %1414 = vmatprep.subr.bf16.mxu0 0
      %1415 = vmatpush1.bf16.msra.mxu0 %v1399
      %1416 = vmatprep.subr.bf16.mxu0 0
      %1417 = vmatpush1.bf16.msra.mxu0 %v1398
      %1418 = vmatprep.subr.bf16.mxu0 0
      %1419 = vmatpush1.bf16.msra.mxu0 %v1397
      %1420 = vmatprep.subr.bf16.mxu0 0
      %1421 = vmatpush1.bf16.msra.mxu0 %v1396
      %1422 = vmatprep.subr.bf16.mxu0 0
      %1423 = vmatpush1.bf16.msra.mxu0 %v1395
      %1424 = vmatprep.subr.bf16.mxu0 0
      %1425 = vmatpush1.bf16.msra.mxu0 %v1394
      %1426 = vmatprep.subr.bf16.mxu0 0
      %1427 = vmatpush2.bf16.msra.mxu0 0
      %1428 = vmatprep.subr.bf16.mxu0 0
      %1429 = vmatpush2.bf16.msra.mxu0 0
      %1430 = vmatprep.subr.bf16.mxu0 0
      %1431 = vmatpush2.bf16.msra.mxu0 0
      %1432 = vmatprep.subr.bf16.mxu0 0
      %1433 = vmatpush2.bf16.msra.mxu0 0
      %1434 = vmatprep.subr.bf16.mxu0 0
      %1435 = vmatpush2.bf16.msra.mxu0 0
      %1436 = vmatprep.subr.bf16.mxu0 0
      %1437 = vmatpush2.bf16.msra.mxu0 0
      %1438 = vmatprep.subr.bf16.mxu0 0
      %1439 = vmatpush2.bf16.msra.mxu0 0
      %1440 = vmatprep.subr.bf16.mxu0 0
      %1441 = vmatpush2.bf16.msra.mxu0 0
      %1442 = vmatprep.mubr.bf16.mxu0 0
      %1443 = vmatmul.mubr.bf16.gmra.mxu0 %v1341
      %v1444 = vpop.f32.mrf.mxu0
      %v1445 = vadd.f32 0.0, %v1444
      %v1446 = vpop.f32.mrf.mxu0
      %v1447 = vpop.f32.mrf.mxu0
      %v1448 = vadd.f32 0.0, %v1447
      %v1449 = vpop.f32.mrf.mxu0
      %1450 = vmatprep.mubr.bf16.mxu0 0
      %1451 = vmatmul.mubr.bf16.gmra.mxu0 %v1342
      %v1452 = vpop.f32.mrf.mxu0
      %v1453 = vadd.f32 0.0, %v1452
      %v1454 = vpop.f32.mrf.mxu0
      %v1455 = vpop.f32.mrf.mxu0
      %v1456 = vadd.f32 0.0, %v1455
      %v1457 = vpop.f32.mrf.mxu0
      %1458 = vmatprep.mubr.bf16.mxu0 0
      %1459 = vmatmul.mubr.bf16.gmra.mxu0 %v1343
      %v1460 = vpop.f32.mrf.mxu0
      %v1461 = vadd.f32 0.0, %v1460
      %v1462 = vpop.f32.mrf.mxu0
      %v1463 = vpop.f32.mrf.mxu0
      %v1464 = vadd.f32 0.0, %v1463
      %v1465 = vpop.f32.mrf.mxu0
      %1466 = vmatprep.mubr.bf16.mxu0 0
      %1467 = vmatmul.mubr.bf16.gmra.mxu0 %v1344
      %v1468 = vpop.f32.mrf.mxu0
      %v1469 = vadd.f32 0.0, %v1468
      %v1470 = vpop.f32.mrf.mxu0
      %v1471 = vpop.f32.mrf.mxu0
      %v1472 = vadd.f32 0.0, %v1471
      %v1473 = vpop.f32.mrf.mxu0
      %1474 = vdwg.mxu0
      %v1475 = vadd.f32 %v1329, %v1445
      %v1476 = vadd.f32 %v1330, %v1448
      %v1477 = vadd.f32 %v1331, %v1453
      %v1478 = vadd.f32 %v1332, %v1456
      %v1479 = vadd.f32 %v1333, %v1461
      %v1480 = vadd.f32 %v1334, %v1464
      %v1481 = vadd.f32 %v1335, %v1469
      %v1482 = vadd.f32 %v1336, %v1472
      %v1483 = vpack.c.bf16 %v554, %v552
      %s1484 = scalar_lea.vmem %s1, 384
      %v1485 = vld [vmem:[%s1484] sm:$0xf]
      %v1486 = vld [vmem:[%s1484 + $0x4] sm:$0xf]
      %v1487 = vld [vmem:[%s1484 + $0x8] sm:$0xf]
      %v1488 = vld [vmem:[%s1484 + $0xc] sm:$0xf]
      %v1489 = vld [vmem:[%s1484 + $0x10] sm:$0xf]
      %v1490 = vld [vmem:[%s1484 + $0x14] sm:$0xf]
      %v1491 = vld [vmem:[%s1484 + $0x18] sm:$0xf]
      %v1492 = vld [vmem:[%s1484 + $0x1c] sm:$0xf]
      %v1493 = vld [vmem:[%s1484 + $0x20] sm:$0xf]
      %v1494 = vld [vmem:[%s1484 + $0x24] sm:$0xf]
      %v1495 = vld [vmem:[%s1484 + $0x28] sm:$0xf]
      %v1496 = vld [vmem:[%s1484 + $0x2c] sm:$0xf]
      %v1497 = vld [vmem:[%s1484 + $0x30] sm:$0xf]
      %v1498 = vld [vmem:[%s1484 + $0x34] sm:$0xf]
      %v1499 = vld [vmem:[%s1484 + $0x38] sm:$0xf]
      %v1500 = vld [vmem:[%s1484 + $0x3c] sm:$0xf]
      %v1517 = vunpack.c.l.b16 %v1485
      %v1518 = vunpack.c.l.b16 %v1486
      %v1519 = vunpack.c.l.b16 %v1487
      %v1520 = vunpack.c.l.b16 %v1488
      %v1521 = vunpack.c.l.b16 %v1489
      %v1522 = vunpack.c.l.b16 %v1490
      %v1523 = vunpack.c.l.b16 %v1491
      %v1524 = vunpack.c.l.b16 %v1492
      %v1525 = vunpack.c.l.b16 %v1493
      %v1526 = vunpack.c.l.b16 %v1494
      %v1527 = vunpack.c.l.b16 %v1495
      %v1528 = vunpack.c.l.b16 %v1496
      %v1529 = vunpack.c.l.b16 %v1497
      %v1530 = vunpack.c.l.b16 %v1498
      %v1531 = vunpack.c.l.b16 %v1499
      %v1532 = vunpack.c.l.b16 %v1500
      %v1533 = vpack.c.b16 %v1518, %v1517
      %v1534 = vpack.c.b16 %v1520, %v1519
      %v1535 = vpack.c.b16 %v1522, %v1521
      %v1536 = vpack.c.b16 %v1524, %v1523
      %v1537 = vpack.c.b16 %v1526, %v1525
      %v1538 = vpack.c.b16 %v1528, %v1527
      %v1539 = vpack.c.b16 %v1530, %v1529
      %v1540 = vpack.c.b16 %v1532, %v1531
      %1549 = vmatprep.subr.bf16.mxu0 0
      %1550 = vmatpush1.bf16.msra.mxu0 %v1540
      %1551 = vmatprep.subr.bf16.mxu0 0
      %1552 = vmatpush1.bf16.msra.mxu0 %v1539
      %1553 = vmatprep.subr.bf16.mxu0 0
      %1554 = vmatpush1.bf16.msra.mxu0 %v1538
      %1555 = vmatprep.subr.bf16.mxu0 0
      %1556 = vmatpush1.bf16.msra.mxu0 %v1537
      %1557 = vmatprep.subr.bf16.mxu0 0
      %1558 = vmatpush1.bf16.msra.mxu0 %v1536
      %1559 = vmatprep.subr.bf16.mxu0 0
      %1560 = vmatpush1.bf16.msra.mxu0 %v1535
      %1561 = vmatprep.subr.bf16.mxu0 0
      %1562 = vmatpush1.bf16.msra.mxu0 %v1534
      %1563 = vmatprep.subr.bf16.mxu0 0
      %1564 = vmatpush1.bf16.msra.mxu0 %v1533
      %1565 = vmatprep.subr.bf16.mxu0 0
      %1566 = vmatpush2.bf16.msra.mxu0 0
      %1567 = vmatprep.subr.bf16.mxu0 0
      %1568 = vmatpush2.bf16.msra.mxu0 0
      %1569 = vmatprep.subr.bf16.mxu0 0
      %1570 = vmatpush2.bf16.msra.mxu0 0
      %1571 = vmatprep.subr.bf16.mxu0 0
      %1572 = vmatpush2.bf16.msra.mxu0 0
      %1573 = vmatprep.subr.bf16.mxu0 0
      %1574 = vmatpush2.bf16.msra.mxu0 0
      %1575 = vmatprep.subr.bf16.mxu0 0
      %1576 = vmatpush2.bf16.msra.mxu0 0
      %1577 = vmatprep.subr.bf16.mxu0 0
      %1578 = vmatpush2.bf16.msra.mxu0 0
      %1579 = vmatprep.subr.bf16.mxu0 0
      %1580 = vmatpush2.bf16.msra.mxu0 0
      %1581 = vmatprep.mubr.bf16.mxu0 0
      %1582 = vmatmul.mubr.bf16.gmra.mxu0 %v557
      %v1583 = vpop.f32.mrf.mxu0
      %v1584 = vadd.f32 0.0, %v1583
      %v1585 = vpop.f32.mrf.mxu0
      %v1586 = vpop.f32.mrf.mxu0
      %v1587 = vadd.f32 0.0, %v1586
      %v1588 = vpop.f32.mrf.mxu0
      %1589 = vmatprep.mubr.bf16.mxu0 0
      %1590 = vmatmul.mubr.bf16.gmra.mxu0 %v558
      %v1591 = vpop.f32.mrf.mxu0
      %v1592 = vadd.f32 0.0, %v1591
      %v1593 = vpop.f32.mrf.mxu0
      %v1594 = vpop.f32.mrf.mxu0
      %v1595 = vadd.f32 0.0, %v1594
      %v1596 = vpop.f32.mrf.mxu0
      %1597 = vmatprep.mubr.bf16.mxu0 0
      %1598 = vmatmul.mubr.bf16.gmra.mxu0 %v559
      %v1599 = vpop.f32.mrf.mxu0
      %v1600 = vadd.f32 0.0, %v1599
      %v1601 = vpop.f32.mrf.mxu0
      %v1602 = vpop.f32.mrf.mxu0
      %v1603 = vadd.f32 0.0, %v1602
      %v1604 = vpop.f32.mrf.mxu0
      %1605 = vmatprep.mubr.bf16.mxu0 0
      %1606 = vmatmul.mubr.bf16.gmra.mxu0 %v1483
      %v1607 = vpop.f32.mrf.mxu0
      %v1608 = vadd.f32 0.0, %v1607
      %v1609 = vpop.f32.mrf.mxu0
      %v1610 = vpop.f32.mrf.mxu0
      %v1611 = vadd.f32 0.0, %v1610
      %v1612 = vpop.f32.mrf.mxu0
      %1613 = vdwg.mxu0
      %v1614 = vadd.f32 %v1475, %v1584
      %v1615 = vadd.f32 %v1476, %v1587
      %v1616 = vadd.f32 %v1477, %v1592
      %v1617 = vadd.f32 %v1478, %v1595
      %v1618 = vadd.f32 %v1479, %v1600
      %v1619 = vadd.f32 %v1480, %v1603
      %v1620 = vadd.f32 %v1481, %v1608
      %v1621 = vadd.f32 %v1482, %v1611
      %v1624 = vrot.slane %v554, 1
      %v1625 = vrot.slane %v555, 1
      %v1626 = vsel %vm592, %v1624, %v1625
      %v1628 = vpack.c.bf16 %v1626, %v1193
      %s1629 = scalar_lea.vmem %s1, 448
      %v1630 = vld [vmem:[%s1629] sm:$0xf]
      %v1631 = vld [vmem:[%s1629 + $0x4] sm:$0xf]
      %v1632 = vld [vmem:[%s1629 + $0x8] sm:$0xf]
      %v1633 = vld [vmem:[%s1629 + $0xc] sm:$0xf]
      %v1634 = vld [vmem:[%s1629 + $0x10] sm:$0xf]
      %v1635 = vld [vmem:[%s1629 + $0x14] sm:$0xf]
      %v1636 = vld [vmem:[%s1629 + $0x18] sm:$0xf]
      %v1637 = vld [vmem:[%s1629 + $0x1c] sm:$0xf]
      %v1638 = vld [vmem:[%s1629 + $0x20] sm:$0xf]
      %v1639 = vld [vmem:[%s1629 + $0x24] sm:$0xf]
      %v1640 = vld [vmem:[%s1629 + $0x28] sm:$0xf]
      %v1641 = vld [vmem:[%s1629 + $0x2c] sm:$0xf]
      %v1642 = vld [vmem:[%s1629 + $0x30] sm:$0xf]
      %v1643 = vld [vmem:[%s1629 + $0x34] sm:$0xf]
      %v1644 = vld [vmem:[%s1629 + $0x38] sm:$0xf]
      %v1645 = vld [vmem:[%s1629 + $0x3c] sm:$0xf]
      %v1662 = vunpack.c.l.b16 %v1630
      %v1663 = vunpack.c.l.b16 %v1631
      %v1664 = vunpack.c.l.b16 %v1632
      %v1665 = vunpack.c.l.b16 %v1633
      %v1666 = vunpack.c.l.b16 %v1634
      %v1667 = vunpack.c.l.b16 %v1635
      %v1668 = vunpack.c.l.b16 %v1636
      %v1669 = vunpack.c.l.b16 %v1637
      %v1670 = vunpack.c.l.b16 %v1638
      %v1671 = vunpack.c.l.b16 %v1639
      %v1672 = vunpack.c.l.b16 %v1640
      %v1673 = vunpack.c.l.b16 %v1641
      %v1674 = vunpack.c.l.b16 %v1642
      %v1675 = vunpack.c.l.b16 %v1643
      %v1676 = vunpack.c.l.b16 %v1644
      %v1677 = vunpack.c.l.b16 %v1645
      %v1678 = vpack.c.b16 %v1663, %v1662
      %v1679 = vpack.c.b16 %v1665, %v1664
      %v1680 = vpack.c.b16 %v1667, %v1666
      %v1681 = vpack.c.b16 %v1669, %v1668
      %v1682 = vpack.c.b16 %v1671, %v1670
      %v1683 = vpack.c.b16 %v1673, %v1672
      %v1684 = vpack.c.b16 %v1675, %v1674
      %v1685 = vpack.c.b16 %v1677, %v1676
      %1694 = vmatprep.subr.bf16.mxu0 0
      %1695 = vmatpush1.bf16.msra.mxu0 %v1685
      %1696 = vmatprep.subr.bf16.mxu0 0
      %1697 = vmatpush1.bf16.msra.mxu0 %v1684
      %1698 = vmatprep.subr.bf16.mxu0 0
      %1699 = vmatpush1.bf16.msra.mxu0 %v1683
      %1700 = vmatprep.subr.bf16.mxu0 0
      %1701 = vmatpush1.bf16.msra.mxu0 %v1682
      %1702 = vmatprep.subr.bf16.mxu0 0
      %1703 = vmatpush1.bf16.msra.mxu0 %v1681
      %1704 = vmatprep.subr.bf16.mxu0 0
      %1705 = vmatpush1.bf16.msra.mxu0 %v1680
      %1706 = vmatprep.subr.bf16.mxu0 0
      %1707 = vmatpush1.bf16.msra.mxu0 %v1679
      %1708 = vmatprep.subr.bf16.mxu0 0
      %1709 = vmatpush1.bf16.msra.mxu0 %v1678
      %1710 = vmatprep.subr.bf16.mxu0 0
      %1711 = vmatpush2.bf16.msra.mxu0 0
      %1712 = vmatprep.subr.bf16.mxu0 0
      %1713 = vmatpush2.bf16.msra.mxu0 0
      %1714 = vmatprep.subr.bf16.mxu0 0
      %1715 = vmatpush2.bf16.msra.mxu0 0
      %1716 = vmatprep.subr.bf16.mxu0 0
      %1717 = vmatpush2.bf16.msra.mxu0 0
      %1718 = vmatprep.subr.bf16.mxu0 0
      %1719 = vmatpush2.bf16.msra.mxu0 0
      %1720 = vmatprep.subr.bf16.mxu0 0
      %1721 = vmatpush2.bf16.msra.mxu0 0
      %1722 = vmatprep.subr.bf16.mxu0 0
      %1723 = vmatpush2.bf16.msra.mxu0 0
      %1724 = vmatprep.subr.bf16.mxu0 0
      %1725 = vmatpush2.bf16.msra.mxu0 0
      %1726 = vmatprep.mubr.bf16.mxu0 0
      %1727 = vmatmul.mubr.bf16.gmra.mxu0 %v626
      %v1728 = vpop.f32.mrf.mxu0
      %v1729 = vadd.f32 0.0, %v1728
      %v1730 = vpop.f32.mrf.mxu0
      %v1731 = vpop.f32.mrf.mxu0
      %v1732 = vadd.f32 0.0, %v1731
      %v1733 = vpop.f32.mrf.mxu0
      %1734 = vmatprep.mubr.bf16.mxu0 0
      %1735 = vmatmul.mubr.bf16.gmra.mxu0 %v627
      %v1736 = vpop.f32.mrf.mxu0
      %v1737 = vadd.f32 0.0, %v1736
      %v1738 = vpop.f32.mrf.mxu0
      %v1739 = vpop.f32.mrf.mxu0
      %v1740 = vadd.f32 0.0, %v1739
      %v1741 = vpop.f32.mrf.mxu0
      %1742 = vmatprep.mubr.bf16.mxu0 0
      %1743 = vmatmul.mubr.bf16.gmra.mxu0 %v628
      %v1744 = vpop.f32.mrf.mxu0
      %v1745 = vadd.f32 0.0, %v1744
      %v1746 = vpop.f32.mrf.mxu0
      %v1747 = vpop.f32.mrf.mxu0
      %v1748 = vadd.f32 0.0, %v1747
      %v1749 = vpop.f32.mrf.mxu0
      %1750 = vmatprep.mubr.bf16.mxu0 0
      %1751 = vmatmul.mubr.bf16.gmra.mxu0 %v1628
      %v1752 = vpop.f32.mrf.mxu0
      %v1753 = vadd.f32 0.0, %v1752
      %v1754 = vpop.f32.mrf.mxu0
      %v1755 = vpop.f32.mrf.mxu0
      %v1756 = vadd.f32 0.0, %v1755
      %v1757 = vpop.f32.mrf.mxu0
      %1758 = vdwg.mxu0
      %v1759 = vadd.f32 %v1614, %v1729
      %v1760 = vadd.f32 %v1615, %v1732
      %v1761 = vadd.f32 %v1616, %v1737
      %v1762 = vadd.f32 %v1617, %v1740
      %v1763 = vadd.f32 %v1618, %v1745
      %v1764 = vadd.f32 %v1619, %v1748
      %v1765 = vadd.f32 %v1620, %v1753
      %v1766 = vadd.f32 %v1621, %v1756
      %v1767 = vrot.slane %v554, 2
      %v1768 = vrot.slane %v555, 2
      %v1769 = vsel %vm872, %v1767, %v1768
      %v1771 = vpack.c.bf16 %v1769, %v1339
      %s1772 = scalar_lea.vmem %s1, 512
      %v1773 = vld [vmem:[%s1772] sm:$0xf]
      %v1774 = vld [vmem:[%s1772 + $0x4] sm:$0xf]
      %v1775 = vld [vmem:[%s1772 + $0x8] sm:$0xf]
      %v1776 = vld [vmem:[%s1772 + $0xc] sm:$0xf]
      %v1777 = vld [vmem:[%s1772 + $0x10] sm:$0xf]
      %v1778 = vld [vmem:[%s1772 + $0x14] sm:$0xf]
      %v1779 = vld [vmem:[%s1772 + $0x18] sm:$0xf]
      %v1780 = vld [vmem:[%s1772 + $0x1c] sm:$0xf]
      %v1781 = vld [vmem:[%s1772 + $0x20] sm:$0xf]
      %v1782 = vld [vmem:[%s1772 + $0x24] sm:$0xf]
      %v1783 = vld [vmem:[%s1772 + $0x28] sm:$0xf]
      %v1784 = vld [vmem:[%s1772 + $0x2c] sm:$0xf]
      %v1785 = vld [vmem:[%s1772 + $0x30] sm:$0xf]
      %v1786 = vld [vmem:[%s1772 + $0x34] sm:$0xf]
      %v1787 = vld [vmem:[%s1772 + $0x38] sm:$0xf]
      %v1788 = vld [vmem:[%s1772 + $0x3c] sm:$0xf]
      %v1805 = vunpack.c.l.b16 %v1773
      %v1806 = vunpack.c.l.b16 %v1774
      %v1807 = vunpack.c.l.b16 %v1775
      %v1808 = vunpack.c.l.b16 %v1776
      %v1809 = vunpack.c.l.b16 %v1777
      %v1810 = vunpack.c.l.b16 %v1778
      %v1811 = vunpack.c.l.b16 %v1779
      %v1812 = vunpack.c.l.b16 %v1780
      %v1813 = vunpack.c.l.b16 %v1781
      %v1814 = vunpack.c.l.b16 %v1782
      %v1815 = vunpack.c.l.b16 %v1783
      %v1816 = vunpack.c.l.b16 %v1784
      %v1817 = vunpack.c.l.b16 %v1785
      %v1818 = vunpack.c.l.b16 %v1786
      %v1819 = vunpack.c.l.b16 %v1787
      %v1820 = vunpack.c.l.b16 %v1788
      %v1821 = vpack.c.b16 %v1806, %v1805
      %v1822 = vpack.c.b16 %v1808, %v1807
      %v1823 = vpack.c.b16 %v1810, %v1809
      %v1824 = vpack.c.b16 %v1812, %v1811
      %v1825 = vpack.c.b16 %v1814, %v1813
      %v1826 = vpack.c.b16 %v1816, %v1815
      %v1827 = vpack.c.b16 %v1818, %v1817
      %v1828 = vpack.c.b16 %v1820, %v1819
      %1837 = vmatprep.subr.bf16.mxu0 0
      %1838 = vmatpush1.bf16.msra.mxu0 %v1828
      %1839 = vmatprep.subr.bf16.mxu0 0
      %1840 = vmatpush1.bf16.msra.mxu0 %v1827
      %1841 = vmatprep.subr.bf16.mxu0 0
      %1842 = vmatpush1.bf16.msra.mxu0 %v1826
      %1843 = vmatprep.subr.bf16.mxu0 0
      %1844 = vmatpush1.bf16.msra.mxu0 %v1825
      %1845 = vmatprep.subr.bf16.mxu0 0
      %1846 = vmatpush1.bf16.msra.mxu0 %v1824
      %1847 = vmatprep.subr.bf16.mxu0 0
      %1848 = vmatpush1.bf16.msra.mxu0 %v1823
      %1849 = vmatprep.subr.bf16.mxu0 0
      %1850 = vmatpush1.bf16.msra.mxu0 %v1822
      %1851 = vmatprep.subr.bf16.mxu0 0
      %1852 = vmatpush1.bf16.msra.mxu0 %v1821
      %1853 = vmatprep.subr.bf16.mxu0 0
      %1854 = vmatpush2.bf16.msra.mxu0 0
      %1855 = vmatprep.subr.bf16.mxu0 0
      %1856 = vmatpush2.bf16.msra.mxu0 0
      %1857 = vmatprep.subr.bf16.mxu0 0
      %1858 = vmatpush2.bf16.msra.mxu0 0
      %1859 = vmatprep.subr.bf16.mxu0 0
      %1860 = vmatpush2.bf16.msra.mxu0 0
      %1861 = vmatprep.subr.bf16.mxu0 0
      %1862 = vmatpush2.bf16.msra.mxu0 0
      %1863 = vmatprep.subr.bf16.mxu0 0
      %1864 = vmatpush2.bf16.msra.mxu0 0
      %1865 = vmatprep.subr.bf16.mxu0 0
      %1866 = vmatpush2.bf16.msra.mxu0 0
      %1867 = vmatprep.subr.bf16.mxu0 0
      %1868 = vmatpush2.bf16.msra.mxu0 0
      %1869 = vmatprep.mubr.bf16.mxu0 0
      %1870 = vmatmul.mubr.bf16.gmra.mxu0 %v906
      %v1871 = vpop.f32.mrf.mxu0
      %v1872 = vadd.f32 0.0, %v1871
      %v1873 = vpop.f32.mrf.mxu0
      %v1874 = vpop.f32.mrf.mxu0
      %v1875 = vadd.f32 0.0, %v1874
      %v1876 = vpop.f32.mrf.mxu0
      %1877 = vmatprep.mubr.bf16.mxu0 0
      %1878 = vmatmul.mubr.bf16.gmra.mxu0 %v907
      %v1879 = vpop.f32.mrf.mxu0
      %v1880 = vadd.f32 0.0, %v1879
      %v1881 = vpop.f32.mrf.mxu0
      %v1882 = vpop.f32.mrf.mxu0
      %v1883 = vadd.f32 0.0, %v1882
      %v1884 = vpop.f32.mrf.mxu0
      %1885 = vmatprep.mubr.bf16.mxu0 0
      %1886 = vmatmul.mubr.bf16.gmra.mxu0 %v908
      %v1887 = vpop.f32.mrf.mxu0
      %v1888 = vadd.f32 0.0, %v1887
      %v1889 = vpop.f32.mrf.mxu0
      %v1890 = vpop.f32.mrf.mxu0
      %v1891 = vadd.f32 0.0, %v1890
      %v1892 = vpop.f32.mrf.mxu0
      %1893 = vmatprep.mubr.bf16.mxu0 0
      %1894 = vmatmul.mubr.bf16.gmra.mxu0 %v1771
      %v1895 = vpop.f32.mrf.mxu0
      %v1896 = vadd.f32 0.0, %v1895
      %v1897 = vpop.f32.mrf.mxu0
      %v1898 = vpop.f32.mrf.mxu0
      %v1899 = vadd.f32 0.0, %v1898
      %v1900 = vpop.f32.mrf.mxu0
      %1901 = vdwg.mxu0
      %v1902 = vadd.f32 %v1759, %v1872
      %v1903 = vadd.f32 %v1760, %v1875
      %v1904 = vadd.f32 %v1761, %v1880
      %v1905 = vadd.f32 %v1762, %v1883
      %v1906 = vadd.f32 %v1763, %v1888
      %v1907 = vadd.f32 %v1764, %v1891
      %v1908 = vadd.f32 %v1765, %v1896
      %v1909 = vadd.f32 %v1766, %v1899
      %v1910 = vpack.c.bf16 %v1903, %v1902
      %v1911 = vpack.c.bf16 %v1905, %v1904
      %v1912 = vpack.c.bf16 %v1907, %v1906
      %v1913 = vpack.c.bf16 %v1909, %v1908
      %v1918 = vunpack.c.l.b16 %v1910
      %v1919 = vunpack.c.h.b16 %v1910
      %v1920 = vunpack.c.l.b16 %v1911
      %v1921 = vunpack.c.h.b16 %v1911
      %v1922 = vunpack.c.l.b16 %v1912
      %v1923 = vunpack.c.h.b16 %v1912
      %v1924 = vunpack.c.l.b16 %v1913
      %v1925 = vunpack.c.h.b16 %v1913
      %v1926 = vpack.c.b16 %v1918, %v1918
      %v1927 = vpack.c.b16 %v1919, %v1919
      %v1928 = vpack.c.b16 %v1920, %v1920
      %v1929 = vpack.c.b16 %v1921, %v1921
      %v1930 = vpack.c.b16 %v1922, %v1922
      %v1931 = vpack.c.b16 %v1923, %v1923
      %v1932 = vpack.c.b16 %v1924, %v1924
      %v1933 = vpack.c.b16 %v1925, %v1925
      %1942 = vst [vmem:[%s291] sm:$0xf] %v1926
      %1943 = vst [vmem:[%s291 + $0x4] sm:$0xf] %v1927
      %1944 = vst [vmem:[%s291 + $0x8] sm:$0xf] %v1928
      %1945 = vst [vmem:[%s291 + $0xc] sm:$0xf] %v1929
      %1946 = vst [vmem:[%s291 + $0x10] sm:$0xf] %v1930
      %1947 = vst [vmem:[%s291 + $0x14] sm:$0xf] %v1931
      %1948 = vst [vmem:[%s291 + $0x18] sm:$0xf] %v1932
      %1949 = vst [vmem:[%s291 + $0x1c] sm:$0xf] %v1933
      %v1950 = vadd.f32 %v1902, %v1903
      %v1951 = vadd.f32 %v1950, %v1904
      %v1952 = vadd.f32 %v1951, %v1905
      %v1953 = vadd.f32 %v1952, %v1906
      %v1954 = vadd.f32 %v1953, %v1907
      %v1955 = vadd.f32 %v1954, %v1908
      %v1956 = vadd.f32 %v1955, %v1909
      %v1957 = vrot.slane %v1956, 4
      %v1958 = vadd.f32 %v1956, %v1957
      %v1959 = vrot.slane %v1958, 2
      %v1960 = vadd.f32 %v1958, %v1959
      %v1961 = vrot.slane %v1960, 1
      %v1962 = vadd.f32 %v1960, %v1961
      %1963 = vst [vmem:[%s296] sm:$0xff] %v1962
      %v1964 = vmul.f32 %v1902, %v1902
      %v1965 = vmul.f32 %v1903, %v1903
      %v1966 = vmul.f32 %v1904, %v1904
      %v1967 = vmul.f32 %v1905, %v1905
      %v1968 = vmul.f32 %v1906, %v1906
      %v1969 = vmul.f32 %v1907, %v1907
      %v1970 = vmul.f32 %v1908, %v1908
      %v1971 = vmul.f32 %v1909, %v1909
      %v1972 = vadd.f32 %v1964, %v1965
      %v1973 = vadd.f32 %v1972, %v1966
      %v1974 = vadd.f32 %v1973, %v1967
      %v1975 = vadd.f32 %v1974, %v1968
      %v1976 = vadd.f32 %v1975, %v1969
      %v1977 = vadd.f32 %v1976, %v1970
      %v1978 = vadd.f32 %v1977, %v1971
      %v1979 = vrot.slane %v1978, 4
      %v1980 = vadd.f32 %v1978, %v1979
      %v1981 = vrot.slane %v1980, 2
      %v1982 = vadd.f32 %v1980, %v1981
      %v1983 = vrot.slane %v1982, 1
      %v1984 = vadd.f32 %v1982, %v1983
      %1985 = vst [vmem:[%s300] sm:$0xff] %v1984
      %s1986 = smul.u32 8, %s19
      %p1987 = scmp.lt.s32.totalorder %s1986, 15
      %s1988 = scalar_select %p1987, %s1986, 15
      %s1989 = smul.addr %s1988, 4
      %s1990 = scalar_lea.vmem %s5, %s1989
      %p1991 = scmp.lt.s32.totalorder %s19, 1
      %s1992 = scalar_select %p1991, %s19, 1
      %s1993 = smul.addr %s1992, 8
      %s1994 = scalar_lea.vmem %s6, %s1993
      %p1995 = scmp.lt.s32.totalorder %s19, 1
      %s1996 = scalar_select %p1995, %s19, 1
      %s1997 = smul.addr %s1996, 8
      %s1998 = scalar_lea.vmem %s7, %s1997
      // Predicated region
      $region41: #{residual_block_forward.5} parent=39 // pred_check
        %p1999 = pneg %p147
      $region42: #{residual_block_forward.5} parent=39 // pred_check_branch
        %2001 = sbr.rel (%p1999) target = $region44
      $region43: #{residual_block_forward.5} parent=39 // pred_region
        %s2002 = smul.u32 8, %s19
      $region44: #{residual_block_forward.5} parent=39 // pred_fallthru
        _
      // Predicated region
      $region45: #{residual_block_forward.5} parent=39 // pred_check
        %p2003 = pneg %p173
      $region46: #{residual_block_forward.5} parent=39 // pred_check_branch
        %2005 = sbr.rel (%p2003) target = $region48
      $region47: #{residual_block_forward.5} parent=39 // pred_region
        _
      $region48: #{residual_block_forward.5} parent=39 // pred_fallthru
        _
      // Predicated region
      $region49: #{residual_block_forward.5} parent=39 // pred_check
        %p2006 = pneg %p199
      $region50: #{residual_block_forward.5} parent=39 // pred_check_branch
        %2008 = sbr.rel (%p2006) target = $region52
      $region51: #{residual_block_forward.5} parent=39 // pred_region
        _
      $region52: #{residual_block_forward.5} parent=39 // pred_fallthru
        _
    $region40: #{residual_block_forward.5} parent=5 // pred_fallthru
      _
    %p2009 = scmp.le.s32.totalorder 2, %s14
    // Predicated region
    $region53: #{residual_block_forward.5} parent=5 // pred_check
      %p2010 = pneg %p2009
    $region54: #{residual_block_forward.5} parent=5 // pred_check_branch
      %2012 = sbr.rel (%p2010) target = $region56
    $region55: #{residual_block_forward.5} parent=5 // pred_region
      %s2013 = ssub.s32 %s14, 2
      // Predicated region
      $region57: #{residual_block_forward.5} parent=55 // pred_check
        %p2014 = pneg %p153
      $region58: #{residual_block_forward.5} parent=55 // pred_check_branch
        %2016 = sbr.rel (%p2014) target = $region60
      $region59: #{residual_block_forward.5} parent=55 // pred_region
        %s2017 = smul.u32 8, %s20
        %p2018 = scmp.lt.s32.totalorder %s2017, 15
        %s2019 = scalar_select %p2018, %s2017, 15
        %s2020 = smul.addr %s2019, 4
        %s2021 = scalar_lea.vmem %s5, %s2020
      $region60: #{residual_block_forward.5} parent=55 // pred_fallthru
        _
      // Predicated region
      $region61: #{residual_block_forward.5} parent=55 // pred_check
        %p2022 = pneg %p179
      $region62: #{residual_block_forward.5} parent=55 // pred_check_branch
        %2024 = sbr.rel (%p2022) target = $region64
      $region63: #{residual_block_forward.5} parent=55 // pred_region
        %p2025 = scmp.lt.s32.totalorder %s20, 1
        %s2026 = scalar_select %p2025, %s20, 1
        %s2027 = smul.addr %s2026, 8
        %s2028 = scalar_lea.vmem %s6, %s2027
      $region64: #{residual_block_forward.5} parent=55 // pred_fallthru
        _
      // Predicated region
      $region65: #{residual_block_forward.5} parent=55 // pred_check
        %p2029 = pneg %p205
      $region66: #{residual_block_forward.5} parent=55 // pred_check_branch
        %2031 = sbr.rel (%p2029) target = $region68
      $region67: #{residual_block_forward.5} parent=55 // pred_region
        %p2032 = scmp.lt.s32.totalorder %s20, 1
        %s2033 = scalar_select %p2032, %s20, 1
        %s2034 = smul.addr %s2033, 8
        %s2035 = scalar_lea.vmem %s7, %s2034
      $region68: #{residual_block_forward.5} parent=55 // pred_fallthru
        _
    $region56: #{residual_block_forward.5} parent=5 // pred_fallthru
      _
  $region6: #{residual_block_forward.5} parent=0 // loop_footer
    %s18 = sadd.s32 1, %s14
  $region7: #{residual_block_forward.5} parent=0 // loop_footer_branch
    %13 = sbr.rel target = $region3
  $region8: #{residual_block_forward.5} parent=0 // loop_exit
    _

</llo_original>
